<compile_context>
chip_gen: v7x
topology: tpu7x:2x2x1
jax: 0.10.0
libtpu: 0.0.40
codegen_flags: <defaults>
</compile_context>

<pallas_src>
import jax
import jax.numpy as jnp
from jax.experimental import pallas as pl
from jax.experimental.pallas import tpu as pltpu

_F32 = jnp.float32
_BF16 = jnp.bfloat16


def _softplus(x):
    # numerically-stable softplus, identical to torch.nn.Softplus default
    return jnp.maximum(x, 0.0) + jnp.log1p(jnp.exp(-jnp.abs(x)))


def _round_up(n, m):
    return ((n + m - 1) // m) * m


def _maybe_pad2(a, rows, cols):
    # skip jnp.pad (a full HBM copy) when the array is already the right shape
    if a.shape == (rows, cols):
        return a
    return jnp.pad(a, ((0, rows - a.shape[0]), (0, cols - a.shape[1])))


def _pick_tb(batch, tb_max):
    """Batch tile: sublane multiple of 8, >=2 grid steps when possible (so both
    v7x TensorCores get work), sized to minimize last-tile padding waste."""
    b8 = _round_up(max(batch, 1), 8)
    if b8 <= 8:
        return 8
    n_tiles = max(2, pl.cdiv(b8, tb_max))
    return min(tb_max, _round_up(pl.cdiv(b8, n_tiles), 8))


# ----------------------------------------------------------------------------
# Kernel
# ----------------------------------------------------------------------------
def vae_fwd_kernel(
    x_ref, eps_ref,
    we0_ref, be0_ref, we1_ref, be1_ref,
    wmulv_ref, bmulv_ref,
    wd0_ref, bd0_ref, wd1_ref, bd1_ref,
    wrec_ref, brec_ref,
    recon_ref, mulv_ref,
):
    f32 = _F32
    bf16 = _BF16
    Lp = eps_ref.shape[-1]

    # ---------------- encoder: Linear -> (Dropout=identity) -> ReLU ----------
    # x arrives already in bf16 (cast once in the wrapper, not per tile)
    h = jnp.dot(x_ref[...], we0_ref[...], preferred_element_type=f32) + be0_ref[...]
    h = jnp.maximum(h, 0.0)
    h = jnp.dot(h.astype(bf16), we1_ref[...], preferred_element_type=f32) + be1_ref[...]
    h = jnp.maximum(h, 0.0)

    # ---------------- fused latent heads: one matmul -> [mu || logvar] -------
    mulv = jnp.dot(h.astype(bf16), wmulv_ref[...], preferred_element_type=f32) + bmulv_ref[...]
    mulv_ref[...] = mulv.astype(mulv_ref.dtype)      # single fused writeback

    mu = mulv[:, :Lp]
    logvar = mulv[:, Lp:]

    # ---------------- reparameterize: z = mu + eps * exp(0.5*logvar) ---------
    z = mu + eps_ref[...] * jnp.exp(0.5 * logvar)

    # ---------------- decoder: Linear -> Softplus -----------------------------
    d = _softplus(jnp.dot(z.astype(bf16), wd0_ref[...], preferred_element_type=f32) + bd0_ref[...])
    d = _softplus(jnp.dot(d.astype(bf16), wd1_ref[...], preferred_element_type=f32) + bd1_ref[...])

    # ---------------- reconstruction head -------------------------------------
    recon = jnp.dot(d.astype(bf16), wrec_ref[...], preferred_element_type=f32) + brec_ref[...]
    # NOTE: could be emitted as bf16 if the downstream MSE loss tolerates it
    recon_ref[...] = recon.astype(recon_ref.dtype)


# ----------------------------------------------------------------------------
# One-time parameter preparation (hoisted out of the per-call forward)
# ----------------------------------------------------------------------------
def prepare_params(params):
    """Pad weights/biases to lane multiples of 128, cast matmul weights to
    bf16, and fuse the mu/logvar heads into one (H1p, 2*Lp) matrix.  Call once
    and reuse across forwards."""
    D, H0 = params["we0"].shape
    H1 = params["we1"].shape[1]
    L = params["wmu"].shape[1]
    Dp, H0p, H1p, Lp = (_round_up(n, 128) for n in (D, H0, H1, L))

    def w(a, r, c):
        return _maybe_pad2(a, r, c).astype(_BF16)

    def b(a, c):
        return _maybe_pad2(a, 1, c).astype(_F32)

    weights = (
        w(params["we0"], Dp, H0p), b(params["be0"], H0p),
        w(params["we1"], H0p, H1p), b(params["be1"], H1p),
        jnp.concatenate([_maybe_pad2(params["wmu"], H1p, Lp),
                         _maybe_pad2(params["wlv"], H1p, Lp)], axis=1).astype(_BF16),
        jnp.concatenate([_maybe_pad2(params["bmu"], 1, Lp),
                         _maybe_pad2(params["blv"], 1, Lp)], axis=1).astype(_F32),
        w(params["wd0"], Lp, H1p), b(params["bd0"], H1p),
        w(params["wd1"], H1p, H0p), b(params["bd1"], H0p),
        w(params["wrec"], H0p, Dp), b(params["brec"], Dp),
    )
    dims = dict(D=D, H0=H0, H1=H1, L=L, Dp=Dp, H0p=H0p, H1p=H1p, Lp=Lp)
    return weights, dims


# ----------------------------------------------------------------------------
# Forward wrapper
# ----------------------------------------------------------------------------
def modded_vae_forward(x, eps, prepared, *, tb_max=256):
    """Fused VAE forward pass as a batch-tiled Pallas kernel.

    x:        (B, input_dim) float
    eps:      (B, latent_dim) float  standard-normal reparameterization noise
    prepared: output of prepare_params(params)  (one-time pad/cast/fuse)
    Returns (recon_x, mu, logvar, theta, pi) with theta = pi = None ('mse').
    """
    weights, dims = prepared
    B = x.shape[0]
    D, L = dims["D"], dims["L"]
    Dp, Lp = dims["Dp"], dims["Lp"]
    H0p, H1p = dims["H0p"], dims["H1p"]

    TB = _pick_tb(B, tb_max)
    Bp = _round_up(B, TB)

    # activation inputs: cast x to bf16 BEFORE padding (halves DMA bytes and
    # the pad copy); pad only when the shapes actually require it
    xp = _maybe_pad2(x.astype(_BF16), Bp, Dp)
    epsp = _maybe_pad2(eps.astype(_F32), Bp, Lp)

    operands = (xp, epsp) + weights
    grid = (pl.cdiv(Bp, TB),)

    def batch_spec(cols):
        return pl.BlockSpec((TB, cols), lambda i: (i, 0))

    def resident_spec(arr, buffer_count):
        # full-array block, constant block index -> DMA'd once, resident in VMEM
        if buffer_count is None:
            return pl.BlockSpec(arr.shape, lambda i: (0, 0))
        return pl.BlockSpec(arr.shape, lambda i: (0, 0),
                            pipeline_mode=pl.Buffered(buffer_count))

    weight_bytes = sum(int(a.size) * a.dtype.itemsize for a in weights)

    # advisory cost estimate for XLA scheduling around the custom call
    matmul_flops = 2 * Bp * (
        Dp * H0p + H0p * H1p + H1p * (2 * Lp) + Lp * H1p + H1p * H0p + H0p * Dp
    )
    transcendentals = Bp * (Lp + 2 * H1p + 2 * H0p)
    io_bytes = (Bp * Dp * 2 + Bp * Lp * 4          # x (bf16), eps (f32) in
                + Bp * Dp * 4 + Bp * 2 * Lp * 4)   # recon, [mu||logvar] out
    cost = pl.CostEstimate(
        flops=matmul_flops,
        transcendentals=transcendentals,
        bytes_accessed=weight_bytes + io_bytes,
    )

    out_shape = (
        jax.ShapeDtypeStruct((Bp, Dp), _F32),        # recon
        jax.ShapeDtypeStruct((Bp, 2 * Lp), _F32),    # [mu || logvar] fused
    )
    out_specs = (batch_spec(Dp), batch_spec(2 * Lp))

    def run(weight_buffers):
        in_specs = ([batch_spec(Dp), batch_spec(Lp)]
                    + [resident_spec(a, weight_buffers) for a in weights])

        # explicit scoped-VMEM budget: resident weights x buffer count
        # + double-buffered activation tiles + f32 intermediates + headroom,
        # clamped to stay within v7x's 64 MiB per-TensorCore VMEM.
        wbuf = weight_buffers if weight_buffers is not None else 2
        tile_io = 2 * (TB * Dp * 2 + TB * Lp * 4 + TB * Dp * 4 + TB * 2 * Lp * 4)
        inter = 2 * TB * (2 * H0p + 2 * H1p + 3 * Lp) * 4
        vmem_need = weight_bytes * wbuf + tile_io + inter + (8 << 20)
        vmem_limit = int(min(max(vmem_need, 24 << 20), 56 << 20))

        return pl.pallas_call(
            vae_fwd_kernel,
            out_shape=out_shape,
            grid=grid,
            in_specs=in_specs,
            out_specs=out_specs,
            compiler_params=pltpu.CompilerParams(
                dimension_semantics=("parallel",),
                vmem_limit_bytes=vmem_limit,
            ),
            cost_estimate=cost,
        )(*operands)

    try:
        # single-buffer the resident weights (they never change across tiles)
        recon, mulv = run(1)
    except Exception:
        # pipeline_mode=pl.Buffered(...) unsupported on this jax build:
        # fall back to default double-buffered resident weights.
        recon, mulv = run(None)

    # slice off lane/batch padding; split fused [mu || logvar]
    return (recon[:B, :D], mulv[:B, :L], mulv[:B, Lp:Lp + L], None, None)


# ----------------------------------------------------------------------------
# Init + pure-JAX reference
# ----------------------------------------------------------------------------
def init_params(key, input_dim, hidden_dims, latent_dim):
    """Deterministic init mimicking nn.Linear's U(-1/sqrt(fan_in), 1/sqrt(fan_in)).
    Weights stored transposed as (in_features, out_features); biases (1, out)."""
    def linear(key, fan_in, fan_out):
        kw, kb = jax.random.split(key)
        bound = 1.0 / jnp.sqrt(fan_in)
        w = jax.random.uniform(kw, (fan_in, fan_out), jnp.float32, -bound, bound)
        b = jax.random.uniform(kb, (1, fan_out), jnp.float32, -bound, bound)
        return w, b

    h0, h1 = hidden_dims
    keys = jax.random.split(key, 8)
    p = {}
    p["we0"], p["be0"] = linear(keys[0], input_dim, h0)
    p["we1"], p["be1"] = linear(keys[1], h0, h1)
    p["wmu"], p["bmu"] = linear(keys[2], h1, latent_dim)
    p["wlv"], p["blv"] = linear(keys[3], h1, latent_dim)
    # decoder: reversed(hidden_dims) = [h1, h0]
    p["wd0"], p["bd0"] = linear(keys[4], latent_dim, h1)
    p["wd1"], p["bd1"] = linear(keys[5], h1, h0)
    p["wrec"], p["brec"] = linear(keys[6], h0, input_dim)
    return p


def reference_forward(x, eps, p):
    """Pure-JAX f32 reference (same module math) for a sanity check."""
    h = jnp.maximum(x @ p["we0"] + p["be0"], 0.0)
    h = jnp.maximum(h @ p["we1"] + p["be1"], 0.0)
    mu = h @ p["wmu"] + p["bmu"]
    logvar = h @ p["wlv"] + p["blv"]
    z = mu + eps * jnp.exp(0.5 * logvar)
    d = jax.nn.softplus(z @ p["wd0"] + p["bd0"])
    d = jax.nn.softplus(d @ p["wd1"] + p["bd1"])
    recon = d @ p["wrec"] + p["brec"]
    return recon, mu, logvar


if __name__ == "__main__":
    # small shapes consistent with the module's MLP structure; batch=24 gives a
    # multi-step grid (2 tiles of 16) exercising the batch-padding path.
    batch = 24
    input_dim = 32
    hidden_dims = [64, 48]
    latent_dim = 16

    key = jax.random.PRNGKey(0)
    k_x, k_eps, k_p = jax.random.split(key, 3)

    x = jax.random.normal(k_x, (batch, input_dim), jnp.float32)
    eps = jax.random.normal(k_eps, (batch, latent_dim), jnp.float32)
    params = init_params(k_p, input_dim, hidden_dims, latent_dim)

    prepared = prepare_params(params)   # one-time pad / bf16 cast / head fusion

    recon, mu, logvar, theta, pi = modded_vae_forward(x, eps, prepared)
    jax.block_until_ready((recon, mu, logvar))

    # correctness check against pure-f32 JAX reference (kernel uses bf16 MXU
    # operands with f32 accumulation, so tolerance is loosened accordingly)
    ref_recon, ref_mu, ref_logvar = reference_forward(x, eps, params)
    assert jnp.allclose(recon, ref_recon, atol=6e-2, rtol=6e-2)
    assert jnp.allclose(mu, ref_mu, atol=6e-2, rtol=6e-2)
    assert jnp.allclose(logvar, ref_logvar, atol=6e-2, rtol=6e-2)
    assert theta is None and pi is None  # loss_type == 'mse'

    print("KERNEL_OK")
</pallas_src>

<mosaic_0001>
module attributes {stable_mosaic.version = 11 : i64} {
  func.func @vae_fwd_kernel(%arg0: i32, %arg1: memref<16x128xbf16, #tpu.memory_space<vmem>>, %arg2: memref<16x128xf32, #tpu.memory_space<vmem>>, %arg3: memref<128x128xbf16, #tpu.memory_space<vmem>>, %arg4: memref<1x128xf32, #tpu.memory_space<vmem>>, %arg5: memref<128x128xbf16, #tpu.memory_space<vmem>>, %arg6: memref<1x128xf32, #tpu.memory_space<vmem>>, %arg7: memref<128x256xbf16, #tpu.memory_space<vmem>>, %arg8: memref<1x256xf32, #tpu.memory_space<vmem>>, %arg9: memref<128x128xbf16, #tpu.memory_space<vmem>>, %arg10: memref<1x128xf32, #tpu.memory_space<vmem>>, %arg11: memref<128x128xbf16, #tpu.memory_space<vmem>>, %arg12: memref<1x128xf32, #tpu.memory_space<vmem>>, %arg13: memref<128x128xbf16, #tpu.memory_space<vmem>>, %arg14: memref<1x128xf32, #tpu.memory_space<vmem>>, %arg15: memref<16x128xf32, #tpu.memory_space<vmem>>, %arg16: memref<16x256xf32, #tpu.memory_space<vmem>>) attributes {dimension_semantics = [#tpu.dimension_semantics<parallel>], iteration_bounds = array<i64: 2>, scalar_prefetch = 0 : i64, scratch_operands = 0 : i64, tpu.core_type = #tpu.core_type<tc>, window_params = [{transform_indices = @transform_0, window_bounds = array<i64: 16, 128>}, {transform_indices = @transform_1, window_bounds = array<i64: 16, 128>}, {pipeline_mode = #tpu.pipeline_mode<synchronous>, transform_indices = @transform_2, window_bounds = array<i64: 128, 128>}, {pipeline_mode = #tpu.pipeline_mode<synchronous>, transform_indices = @transform_3, window_bounds = array<i64: 1, 128>}, {pipeline_mode = #tpu.pipeline_mode<synchronous>, transform_indices = @transform_4, window_bounds = array<i64: 128, 128>}, {pipeline_mode = #tpu.pipeline_mode<synchronous>, transform_indices = @transform_5, window_bounds = array<i64: 1, 128>}, {pipeline_mode = #tpu.pipeline_mode<synchronous>, transform_indices = @transform_6, window_bounds = array<i64: 128, 256>}, {pipeline_mode = #tpu.pipeline_mode<synchronous>, transform_indices = @transform_7, window_bounds = array<i64: 1, 256>}, {pipeline_mode = #tpu.pipeline_mode<synchronous>, transform_indices = @transform_8, window_bounds = array<i64: 128, 128>}, {pipeline_mode = #tpu.pipeline_mode<synchronous>, transform_indices = @transform_9, window_bounds = array<i64: 1, 128>}, {pipeline_mode = #tpu.pipeline_mode<synchronous>, transform_indices = @transform_10, window_bounds = array<i64: 128, 128>}, {pipeline_mode = #tpu.pipeline_mode<synchronous>, transform_indices = @transform_11, window_bounds = array<i64: 1, 128>}, {pipeline_mode = #tpu.pipeline_mode<synchronous>, transform_indices = @transform_12, window_bounds = array<i64: 128, 128>}, {pipeline_mode = #tpu.pipeline_mode<synchronous>, transform_indices = @transform_13, window_bounds = array<i64: 1, 128>}, {transform_indices = @transform_14, window_bounds = array<i64: 16, 128>}, {transform_indices = @transform_15, window_bounds = array<i64: 16, 256>}]} {
    %c0 = arith.constant 0 : index
    %c0_0 = arith.constant 0 : index
    %0 = vector.load %arg1[%c0, %c0_0] : memref<16x128xbf16, #tpu.memory_space<vmem>>, vector<16x128xbf16>
    %c0_1 = arith.constant 0 : index
    %c0_2 = arith.constant 0 : index
    %1 = vector.load %arg3[%c0_1, %c0_2] : memref<128x128xbf16, #tpu.memory_space<vmem>>, vector<128x128xbf16>
    %cst = arith.constant dense<0.000000e+00> : vector<16x128xf32>
    %2 = tpu.matmul %0, %1, %cst {dimension_numbers = #tpu.dot_dimension_numbers<[1], [0], [0], [1], [0, 0, 1, 1], [], []>} : vector<16x128xbf16>, vector<128x128xbf16>, vector<16x128xf32> -> vector<16x128xf32>
    %c0_3 = arith.constant 0 : index
    %c0_4 = arith.constant 0 : index
    %3 = vector.load %arg4[%c0_3, %c0_4] : memref<1x128xf32, #tpu.memory_space<vmem>>, vector<1x128xf32>
    %4 = vector.broadcast %3 : vector<1x128xf32> to vector<16x128xf32>
    %5 = arith.addf %2, %4 : vector<16x128xf32>
    %cst_5 = arith.constant 0.000000e+00 : f32
    %6 = vector.broadcast %cst_5 : f32 to vector<16x128xf32>
    %7 = arith.maximumf %5, %6 : vector<16x128xf32>
    %8 = arith.truncf %7 : vector<16x128xf32> to vector<16x128xbf16>
    %c0_6 = arith.constant 0 : index
    %c0_7 = arith.constant 0 : index
    %9 = vector.load %arg5[%c0_6, %c0_7] : memref<128x128xbf16, #tpu.memory_space<vmem>>, vector<128x128xbf16>
    %cst_8 = arith.constant dense<0.000000e+00> : vector<16x128xf32>
    %10 = tpu.matmul %8, %9, %cst_8 {dimension_numbers = #tpu.dot_dimension_numbers<[1], [0], [0], [1], [0, 0, 1, 1], [], []>} : vector<16x128xbf16>, vector<128x128xbf16>, vector<16x128xf32> -> vector<16x128xf32>
    %c0_9 = arith.constant 0 : index
    %c0_10 = arith.constant 0 : index
    %11 = vector.load %arg6[%c0_9, %c0_10] : memref<1x128xf32, #tpu.memory_space<vmem>>, vector<1x128xf32>
    %12 = vector.broadcast %11 : vector<1x128xf32> to vector<16x128xf32>
    %13 = arith.addf %10, %12 : vector<16x128xf32>
    %cst_11 = arith.constant 0.000000e+00 : f32
    %14 = vector.broadcast %cst_11 : f32 to vector<16x128xf32>
    %15 = arith.maximumf %13, %14 : vector<16x128xf32>
    %16 = arith.truncf %15 : vector<16x128xf32> to vector<16x128xbf16>
    %c0_12 = arith.constant 0 : index
    %c0_13 = arith.constant 0 : index
    %17 = vector.load %arg7[%c0_12, %c0_13] : memref<128x256xbf16, #tpu.memory_space<vmem>>, vector<128x256xbf16>
    %cst_14 = arith.constant dense<0.000000e+00> : vector<16x256xf32>
    %18 = tpu.matmul %16, %17, %cst_14 {dimension_numbers = #tpu.dot_dimension_numbers<[1], [0], [0], [1], [0, 0, 1, 1], [], []>} : vector<16x128xbf16>, vector<128x256xbf16>, vector<16x256xf32> -> vector<16x256xf32>
    %c0_15 = arith.constant 0 : index
    %c0_16 = arith.constant 0 : index
    %19 = vector.load %arg8[%c0_15, %c0_16] : memref<1x256xf32, #tpu.memory_space<vmem>>, vector<1x256xf32>
    %20 = vector.broadcast %19 : vector<1x256xf32> to vector<16x256xf32>
    %21 = arith.addf %18, %20 : vector<16x256xf32>
    %c0_17 = arith.constant 0 : index
    %c0_18 = arith.constant 0 : index
    %22 = vector.load %arg16[%c0_17, %c0_18] : memref<16x256xf32, #tpu.memory_space<vmem>>, vector<16x256xf32>
    tpu.vector_store %arg16[%c0_17, %c0_18], %21 {strides = array<i32>} : memref<16x256xf32, #tpu.memory_space<vmem>>, vector<16x256xf32>,
    %23 = vector.extract_strided_slice %21 {offsets = [0, 0], sizes = [16, 128], strides = [1, 1]} : vector<16x256xf32> to vector<16x128xf32>
    %24 = vector.extract_strided_slice %21 {offsets = [0, 128], sizes = [16, 128], strides = [1, 1]} : vector<16x256xf32> to vector<16x128xf32>
    %c0_19 = arith.constant 0 : index
    %c0_20 = arith.constant 0 : index
    %25 = vector.load %arg2[%c0_19, %c0_20] : memref<16x128xf32, #tpu.memory_space<vmem>>, vector<16x128xf32>
    %cst_21 = arith.constant 5.000000e-01 : f32
    %26 = vector.broadcast %cst_21 : f32 to vector<16x128xf32>
    %27 = arith.mulf %26, %24 : vector<16x128xf32>
    %28 = math.exp %27 : vector<16x128xf32>
    %29 = arith.mulf %25, %28 : vector<16x128xf32>
    %30 = arith.addf %23, %29 : vector<16x128xf32>
    %31 = arith.truncf %30 : vector<16x128xf32> to vector<16x128xbf16>
    %c0_22 = arith.constant 0 : index
    %c0_23 = arith.constant 0 : index
    %32 = vector.load %arg9[%c0_22, %c0_23] : memref<128x128xbf16, #tpu.memory_space<vmem>>, vector<128x128xbf16>
    %cst_24 = arith.constant dense<0.000000e+00> : vector<16x128xf32>
    %33 = tpu.matmul %31, %32, %cst_24 {dimension_numbers = #tpu.dot_dimension_numbers<[1], [0], [0], [1], [0, 0, 1, 1], [], []>} : vector<16x128xbf16>, vector<128x128xbf16>, vector<16x128xf32> -> vector<16x128xf32>
    %c0_25 = arith.constant 0 : index
    %c0_26 = arith.constant 0 : index
    %34 = vector.load %arg10[%c0_25, %c0_26] : memref<1x128xf32, #tpu.memory_space<vmem>>, vector<1x128xf32>
    %35 = vector.broadcast %34 : vector<1x128xf32> to vector<16x128xf32>
    %36 = arith.addf %33, %35 : vector<16x128xf32>
    %cst_27 = arith.constant 0.000000e+00 : f32
    %37 = vector.broadcast %cst_27 : f32 to vector<16x128xf32>
    %38 = arith.maximumf %36, %37 : vector<16x128xf32>
    %39 = math.absf %36 : vector<16x128xf32>
    %cst_28 = arith.constant 0.000000e+00 : f32
    %40 = vector.broadcast %cst_28 : f32 to vector<16x128xf32>
    %41 = arith.subf %40, %39 : vector<16x128xf32>
    %42 = math.exp %41 : vector<16x128xf32>
    %43 = math.log1p %42 : vector<16x128xf32>
    %44 = arith.addf %38, %43 : vector<16x128xf32>
    %45 = arith.truncf %44 : vector<16x128xf32> to vector<16x128xbf16>
    %c0_29 = arith.constant 0 : index
    %c0_30 = arith.constant 0 : index
    %46 = vector.load %arg11[%c0_29, %c0_30] : memref<128x128xbf16, #tpu.memory_space<vmem>>, vector<128x128xbf16>
    %cst_31 = arith.constant dense<0.000000e+00> : vector<16x128xf32>
    %47 = tpu.matmul %45, %46, %cst_31 {dimension_numbers = #tpu.dot_dimension_numbers<[1], [0], [0], [1], [0, 0, 1, 1], [], []>} : vector<16x128xbf16>, vector<128x128xbf16>, vector<16x128xf32> -> vector<16x128xf32>
    %c0_32 = arith.constant 0 : index
    %c0_33 = arith.constant 0 : index
    %48 = vector.load %arg12[%c0_32, %c0_33] : memref<1x128xf32, #tpu.memory_space<vmem>>, vector<1x128xf32>
    %49 = vector.broadcast %48 : vector<1x128xf32> to vector<16x128xf32>
    %50 = arith.addf %47, %49 : vector<16x128xf32>
    %cst_34 = arith.constant 0.000000e+00 : f32
    %51 = vector.broadcast %cst_34 : f32 to vector<16x128xf32>
    %52 = arith.maximumf %50, %51 : vector<16x128xf32>
    %53 = math.absf %50 : vector<16x128xf32>
    %cst_35 = arith.constant 0.000000e+00 : f32
    %54 = vector.broadcast %cst_35 : f32 to vector<16x128xf32>
    %55 = arith.subf %54, %53 : vector<16x128xf32>
    %56 = math.exp %55 : vector<16x128xf32>
    %57 = math.log1p %56 : vector<16x128xf32>
    %58 = arith.addf %52, %57 : vector<16x128xf32>
    %59 = arith.truncf %58 : vector<16x128xf32> to vector<16x128xbf16>
    %c0_36 = arith.constant 0 : index
    %c0_37 = arith.constant 0 : index
    %60 = vector.load %arg13[%c0_36, %c0_37] : memref<128x128xbf16, #tpu.memory_space<vmem>>, vector<128x128xbf16>
    %cst_38 = arith.constant dense<0.000000e+00> : vector<16x128xf32>
    %61 = tpu.matmul %59, %60, %cst_38 {dimension_numbers = #tpu.dot_dimension_numbers<[1], [0], [0], [1], [0, 0, 1, 1], [], []>} : vector<16x128xbf16>, vector<128x128xbf16>, vector<16x128xf32> -> vector<16x128xf32>
    %c0_39 = arith.constant 0 : index
    %c0_40 = arith.constant 0 : index
    %62 = vector.load %arg14[%c0_39, %c0_40] : memref<1x128xf32, #tpu.memory_space<vmem>>, vector<1x128xf32>
    %63 = vector.broadcast %62 : vector<1x128xf32> to vector<16x128xf32>
    %64 = arith.addf %61, %63 : vector<16x128xf32>
    %c0_41 = arith.constant 0 : index
    %c0_42 = arith.constant 0 : index
    %65 = vector.load %arg15[%c0_41, %c0_42] : memref<16x128xf32, #tpu.memory_space<vmem>>, vector<16x128xf32>
    tpu.vector_store %arg15[%c0_41, %c0_42], %64 {strides = array<i32>} : memref<16x128xf32, #tpu.memory_space<vmem>>, vector<16x128xf32>,
    return
  }
  func.func @transform_0(%arg0: i32) -> (i32, i32) {
    %c0_i32 = arith.constant 0 : i32
    %c0_i32_0 = arith.constant 0 : i32
    return %arg0, %c0_i32 : i32, i32
  }
  func.func @transform_1(%arg0: i32) -> (i32, i32) {
    %c0_i32 = arith.constant 0 : i32
    %c0_i32_0 = arith.constant 0 : i32
    return %arg0, %c0_i32 : i32, i32
  }
  func.func @transform_2(%arg0: i32) -> (i32, i32) {
    %c0_i32 = arith.constant 0 : i32
    %c0_i32_0 = arith.constant 0 : i32
    %c0_i32_1 = arith.constant 0 : i32
    return %c0_i32, %c0_i32_0 : i32, i32
  }
  func.func @transform_3(%arg0: i32) -> (i32, i32) {
    %c0_i32 = arith.constant 0 : i32
    %c0_i32_0 = arith.constant 0 : i32
    %c0_i32_1 = arith.constant 0 : i32
    return %c0_i32, %c0_i32_0 : i32, i32
  }
  func.func @transform_4(%arg0: i32) -> (i32, i32) {
    %c0_i32 = arith.constant 0 : i32
    %c0_i32_0 = arith.constant 0 : i32
    %c0_i32_1 = arith.constant 0 : i32
    return %c0_i32, %c0_i32_0 : i32, i32
  }
  func.func @transform_5(%arg0: i32) -> (i32, i32) {
    %c0_i32 = arith.constant 0 : i32
    %c0_i32_0 = arith.constant 0 : i32
    %c0_i32_1 = arith.constant 0 : i32
    return %c0_i32, %c0_i32_0 : i32, i32
  }
  func.func @transform_6(%arg0: i32) -> (i32, i32) {
    %c0_i32 = arith.constant 0 : i32
    %c0_i32_0 = arith.constant 0 : i32
    %c0_i32_1 = arith.constant 0 : i32
    return %c0_i32, %c0_i32_0 : i32, i32
  }
  func.func @transform_7(%arg0: i32) -> (i32, i32) {
    %c0_i32 = arith.constant 0 : i32
    %c0_i32_0 = arith.constant 0 : i32
    %c0_i32_1 = arith.constant 0 : i32
    return %c0_i32, %c0_i32_0 : i32, i32
  }
  func.func @transform_8(%arg0: i32) -> (i32, i32) {
    %c0_i32 = arith.constant 0 : i32
    %c0_i32_0 = arith.constant 0 : i32
    %c0_i32_1 = arith.constant 0 : i32
    return %c0_i32, %c0_i32_0 : i32, i32
  }
  func.func @transform_9(%arg0: i32) -> (i32, i32) {
    %c0_i32 = arith.constant 0 : i32
    %c0_i32_0 = arith.constant 0 : i32
    %c0_i32_1 = arith.constant 0 : i32
    return %c0_i32, %c0_i32_0 : i32, i32
  }
  func.func @transform_10(%arg0: i32) -> (i32, i32) {
    %c0_i32 = arith.constant 0 : i32
    %c0_i32_0 = arith.constant 0 : i32
    %c0_i32_1 = arith.constant 0 : i32
    return %c0_i32, %c0_i32_0 : i32, i32
  }
  func.func @transform_11(%arg0: i32) -> (i32, i32) {
    %c0_i32 = arith.constant 0 : i32
    %c0_i32_0 = arith.constant 0 : i32
    %c0_i32_1 = arith.constant 0 : i32
    return %c0_i32, %c0_i32_0 : i32, i32
  }
  func.func @transform_12(%arg0: i32) -> (i32, i32) {
    %c0_i32 = arith.constant 0 : i32
    %c0_i32_0 = arith.constant 0 : i32
    %c0_i32_1 = arith.constant 0 : i32
    return %c0_i32, %c0_i32_0 : i32, i32
  }
  func.func @transform_13(%arg0: i32) -> (i32, i32) {
    %c0_i32 = arith.constant 0 : i32
    %c0_i32_0 = arith.constant 0 : i32
    %c0_i32_1 = arith.constant 0 : i32
    return %c0_i32, %c0_i32_0 : i32, i32
  }
  func.func @transform_14(%arg0: i32) -> (i32, i32) {
    %c0_i32 = arith.constant 0 : i32
    %c0_i32_0 = arith.constant 0 : i32
    return %arg0, %c0_i32 : i32, i32
  }
  func.func @transform_15(%arg0: i32) -> (i32, i32) {
    %c0_i32 = arith.constant 0 : i32
    %c0_i32_0 = arith.constant 0 : i32
    return %arg0, %c0_i32 : i32, i32
  }
}

module attributes {stable_mosaic.version = 11 : i64} {
  func.func @vae_fwd_kernel(%arg0: i32, %arg1: memref<16x128xbf16, #tpu.memory_space<vmem>>, %arg2: memref<16x128xf32, #tpu.memory_space<vmem>>, %arg3: memref<128x128xbf16, #tpu.memory_space<vmem>>, %arg4: memref<1x128xf32, #tpu.memory_space<vmem>>, %arg5: memref<128x128xbf16, #tpu.memory_space<vmem>>, %arg6: memref<1x128xf32, #tpu.memory_space<vmem>>, %arg7: memref<128x256xbf16, #tpu.memory_space<vmem>>, %arg8: memref<1x256xf32, #tpu.memory_space<vmem>>, %arg9: memref<128x128xbf16, #tpu.memory_space<vmem>>, %arg10: memref<1x128xf32, #tpu.memory_space<vmem>>, %arg11: memref<128x128xbf16, #tpu.memory_space<vmem>>, %arg12: memref<1x128xf32, #tpu.memory_space<vmem>>, %arg13: memref<128x128xbf16, #tpu.memory_space<vmem>>, %arg14: memref<1x128xf32, #tpu.memory_space<vmem>>, %arg15: memref<16x128xf32, #tpu.memory_space<vmem>>, %arg16: memref<16x256xf32, #tpu.memory_space<vmem>>) attributes {dimension_semantics = [#tpu.dimension_semantics<parallel>], iteration_bounds = array<i64: 2>, scalar_prefetch = 0 : i64, scratch_operands = 0 : i64, tpu.core_type = #tpu.core_type<tc>, window_params = [{transform_indices = @transform_0, window_bounds = array<i64: 16, 128>}, {transform_indices = @transform_1, window_bounds = array<i64: 16, 128>}, {pipeline_mode = #tpu.pipeline_mode<synchronous>, transform_indices = @transform_2, window_bounds = array<i64: 128, 128>}, {pipeline_mode = #tpu.pipeline_mode<synchronous>, transform_indices = @transform_3, window_bounds = array<i64: 1, 128>}, {pipeline_mode = #tpu.pipeline_mode<synchronous>, transform_indices = @transform_4, window_bounds = array<i64: 128, 128>}, {pipeline_mode = #tpu.pipeline_mode<synchronous>, transform_indices = @transform_5, window_bounds = array<i64: 1, 128>}, {pipeline_mode = #tpu.pipeline_mode<synchronous>, transform_indices = @transform_6, window_bounds = array<i64: 128, 256>}, {pipeline_mode = #tpu.pipeline_mode<synchronous>, transform_indices = @transform_7, window_bounds = array<i64: 1, 256>}, {pipeline_mode = #tpu.pipeline_mode<synchronous>, transform_indices = @transform_8, window_bounds = array<i64: 128, 128>}, {pipeline_mode = #tpu.pipeline_mode<synchronous>, transform_indices = @transform_9, window_bounds = array<i64: 1, 128>}, {pipeline_mode = #tpu.pipeline_mode<synchronous>, transform_indices = @transform_10, window_bounds = array<i64: 128, 128>}, {pipeline_mode = #tpu.pipeline_mode<synchronous>, transform_indices = @transform_11, window_bounds = array<i64: 1, 128>}, {pipeline_mode = #tpu.pipeline_mode<synchronous>, transform_indices = @transform_12, window_bounds = array<i64: 128, 128>}, {pipeline_mode = #tpu.pipeline_mode<synchronous>, transform_indices = @transform_13, window_bounds = array<i64: 1, 128>}, {transform_indices = @transform_14, window_bounds = array<i64: 16, 128>}, {transform_indices = @transform_15, window_bounds = array<i64: 16, 256>}]} {
    %c0 = arith.constant 0 : index
    %c0_0 = arith.constant 0 : index
    %0 = vector.load %arg1[%c0, %c0_0] : memref<16x128xbf16, #tpu.memory_space<vmem>>, vector<16x128xbf16>
    %c0_1 = arith.constant 0 : index
    %c0_2 = arith.constant 0 : index
    %1 = vector.load %arg3[%c0_1, %c0_2] : memref<128x128xbf16, #tpu.memory_space<vmem>>, vector<128x128xbf16>
    %cst = arith.constant dense<0.000000e+00> : vector<16x128xf32>
    %2 = tpu.matmul %0, %1, %cst {dimension_numbers = #tpu.dot_dimension_numbers<[1], [0], [0], [1], [0, 0, 1, 1], [], []>} : vector<16x128xbf16>, vector<128x128xbf16>, vector<16x128xf32> -> vector<16x128xf32>
    %c0_3 = arith.constant 0 : index
    %c0_4 = arith.constant 0 : index
    %3 = vector.load %arg4[%c0_3, %c0_4] : memref<1x128xf32, #tpu.memory_space<vmem>>, vector<1x128xf32>
    %4 = vector.broadcast %3 : vector<1x128xf32> to vector<16x128xf32>
    %5 = arith.addf %2, %4 : vector<16x128xf32>
    %cst_5 = arith.constant 0.000000e+00 : f32
    %6 = vector.broadcast %cst_5 : f32 to vector<16x128xf32>
    %7 = arith.maximumf %5, %6 : vector<16x128xf32>
    %8 = arith.truncf %7 : vector<16x128xf32> to vector<16x128xbf16>
    %c0_6 = arith.constant 0 : index
    %c0_7 = arith.constant 0 : index
    %9 = vector.load %arg5[%c0_6, %c0_7] : memref<128x128xbf16, #tpu.memory_space<vmem>>, vector<128x128xbf16>
    %cst_8 = arith.constant dense<0.000000e+00> : vector<16x128xf32>
    %10 = tpu.matmul %8, %9, %cst_8 {dimension_numbers = #tpu.dot_dimension_numbers<[1], [0], [0], [1], [0, 0, 1, 1], [], []>} : vector<16x128xbf16>, vector<128x128xbf16>, vector<16x128xf32> -> vector<16x128xf32>
    %c0_9 = arith.constant 0 : index
    %c0_10 = arith.constant 0 : index
    %11 = vector.load %arg6[%c0_9, %c0_10] : memref<1x128xf32, #tpu.memory_space<vmem>>, vector<1x128xf32>
    %12 = vector.broadcast %11 : vector<1x128xf32> to vector<16x128xf32>
    %13 = arith.addf %10, %12 : vector<16x128xf32>
    %cst_11 = arith.constant 0.000000e+00 : f32
    %14 = vector.broadcast %cst_11 : f32 to vector<16x128xf32>
    %15 = arith.maximumf %13, %14 : vector<16x128xf32>
    %16 = arith.truncf %15 : vector<16x128xf32> to vector<16x128xbf16>
    %c0_12 = arith.constant 0 : index
    %c0_13 = arith.constant 0 : index
    %17 = vector.load %arg7[%c0_12, %c0_13] : memref<128x256xbf16, #tpu.memory_space<vmem>>, vector<128x256xbf16>
    %cst_14 = arith.constant dense<0.000000e+00> : vector<16x256xf32>
    %18 = tpu.matmul %16, %17, %cst_14 {dimension_numbers = #tpu.dot_dimension_numbers<[1], [0], [0], [1], [0, 0, 1, 1], [], []>} : vector<16x128xbf16>, vector<128x256xbf16>, vector<16x256xf32> -> vector<16x256xf32>
    %c0_15 = arith.constant 0 : index
    %c0_16 = arith.constant 0 : index
    %19 = vector.load %arg8[%c0_15, %c0_16] : memref<1x256xf32, #tpu.memory_space<vmem>>, vector<1x256xf32>
    %20 = vector.broadcast %19 : vector<1x256xf32> to vector<16x256xf32>
    %21 = arith.addf %18, %20 : vector<16x256xf32>
    %c0_17 = arith.constant 0 : index
    %c0_18 = arith.constant 0 : index
    %22 = vector.load %arg16[%c0_17, %c0_18] : memref<16x256xf32, #tpu.memory_space<vmem>>, vector<16x256xf32>
    tpu.vector_store %arg16[%c0_17, %c0_18], %21 {strides = array<i32>} : memref<16x256xf32, #tpu.memory_space<vmem>>, vector<16x256xf32>,
    %23 = vector.extract_strided_slice %21 {offsets = [0, 0], sizes = [16, 128], strides = [1, 1]} : vector<16x256xf32> to vector<16x128xf32>
    %24 = vector.extract_strided_slice %21 {offsets = [0, 128], sizes = [16, 128], strides = [1, 1]} : vector<16x256xf32> to vector<16x128xf32>
    %c0_19 = arith.constant 0 : index
    %c0_20 = arith.constant 0 : index
    %25 = vector.load %arg2[%c0_19, %c0_20] : memref<16x128xf32, #tpu.memory_space<vmem>>, vector<16x128xf32>
    %cst_21 = arith.constant 5.000000e-01 : f32
    %26 = vector.broadcast %cst_21 : f32 to vector<16x128xf32>
    %27 = arith.mulf %26, %24 : vector<16x128xf32>
    %28 = math.exp %27 : vector<16x128xf32>
    %29 = arith.mulf %25, %28 : vector<16x128xf32>
    %30 = arith.addf %23, %29 : vector<16x128xf32>
    %31 = arith.truncf %30 : vector<16x128xf32> to vector<16x128xbf16>
    %c0_22 = arith.constant 0 : index
    %c0_23 = arith.constant 0 : index
    %32 = vector.load %arg9[%c0_22, %c0_23] : memref<128x128xbf16, #tpu.memory_space<vmem>>, vector<128x128xbf16>
    %cst_24 = arith.constant dense<0.000000e+00> : vector<16x128xf32>
    %33 = tpu.matmul %31, %32, %cst_24 {dimension_numbers = #tpu.dot_dimension_numbers<[1], [0], [0], [1], [0, 0, 1, 1], [], []>} : vector<16x128xbf16>, vector<128x128xbf16>, vector<16x128xf32> -> vector<16x128xf32>
    %c0_25 = arith.constant 0 : index
    %c0_26 = arith.constant 0 : index
    %34 = vector.load %arg10[%c0_25, %c0_26] : memref<1x128xf32, #tpu.memory_space<vmem>>, vector<1x128xf32>
    %35 = vector.broadcast %34 : vector<1x128xf32> to vector<16x128xf32>
    %36 = arith.addf %33, %35 : vector<16x128xf32>
    %cst_27 = arith.constant 0.000000e+00 : f32
    %37 = vector.broadcast %cst_27 : f32 to vector<16x128xf32>
    %38 = arith.maximumf %36, %37 : vector<16x128xf32>
    %39 = math.absf %36 : vector<16x128xf32>
    %cst_28 = arith.constant 0.000000e+00 : f32
    %40 = vector.broadcast %cst_28 : f32 to vector<16x128xf32>
    %41 = arith.subf %40, %39 : vector<16x128xf32>
    %42 = math.exp %41 : vector<16x128xf32>
    %43 = math.log1p %42 : vector<16x128xf32>
    %44 = arith.addf %38, %43 : vector<16x128xf32>
    %45 = arith.truncf %44 : vector<16x128xf32> to vector<16x128xbf16>
    %c0_29 = arith.constant 0 : index
    %c0_30 = arith.constant 0 : index
    %46 = vector.load %arg11[%c0_29, %c0_30] : memref<128x128xbf16, #tpu.memory_space<vmem>>, vector<128x128xbf16>
    %cst_31 = arith.constant dense<0.000000e+00> : vector<16x128xf32>
    %47 = tpu.matmul %45, %46, %cst_31 {dimension_numbers = #tpu.dot_dimension_numbers<[1], [0], [0], [1], [0, 0, 1, 1], [], []>} : vector<16x128xbf16>, vector<128x128xbf16>, vector<16x128xf32> -> vector<16x128xf32>
    %c0_32 = arith.constant 0 : index
    %c0_33 = arith.constant 0 : index
    %48 = vector.load %arg12[%c0_32, %c0_33] : memref<1x128xf32, #tpu.memory_space<vmem>>, vector<1x128xf32>
    %49 = vector.broadcast %48 : vector<1x128xf32> to vector<16x128xf32>
    %50 = arith.addf %47, %49 : vector<16x128xf32>
    %cst_34 = arith.constant 0.000000e+00 : f32
    %51 = vector.broadcast %cst_34 : f32 to vector<16x128xf32>
    %52 = arith.maximumf %50, %51 : vector<16x128xf32>
    %53 = math.absf %50 : vector<16x128xf32>
    %cst_35 = arith.constant 0.000000e+00 : f32
    %54 = vector.broadcast %cst_35 : f32 to vector<16x128xf32>
    %55 = arith.subf %54, %53 : vector<16x128xf32>
    %56 = math.exp %55 : vector<16x128xf32>
    %57 = math.log1p %56 : vector<16x128xf32>
    %58 = arith.addf %52, %57 : vector<16x128xf32>
    %59 = arith.truncf %58 : vector<16x128xf32> to vector<16x128xbf16>
    %c0_36 = arith.constant 0 : index
    %c0_37 = arith.constant 0 : index
    %60 = vector.load %arg13[%c0_36, %c0_37] : memref<128x128xbf16, #tpu.memory_space<vmem>>, vector<128x128xbf16>
    %cst_38 = arith.constant dense<0.000000e+00> : vector<16x128xf32>
    %61 = tpu.matmul %59, %60, %cst_38 {dimension_numbers = #tpu.dot_dimension_numbers<[1], [0], [0], [1], [0, 0, 1, 1], [], []>} : vector<16x128xbf16>, vector<128x128xbf16>, vector<16x128xf32> -> vector<16x128xf32>
    %c0_39 = arith.constant 0 : index
    %c0_40 = arith.constant 0 : index
    %62 = vector.load %arg14[%c0_39, %c0_40] : memref<1x128xf32, #tpu.memory_space<vmem>>, vector<1x128xf32>
    %63 = vector.broadcast %62 : vector<1x128xf32> to vector<16x128xf32>
    %64 = arith.addf %61, %63 : vector<16x128xf32>
    %c0_41 = arith.constant 0 : index
    %c0_42 = arith.constant 0 : index
    %65 = vector.load %arg15[%c0_41, %c0_42] : memref<16x128xf32, #tpu.memory_space<vmem>>, vector<16x128xf32>
    tpu.vector_store %arg15[%c0_41, %c0_42], %64 {strides = array<i32>} : memref<16x128xf32, #tpu.memory_space<vmem>>, vector<16x128xf32>,
    return
  }
  func.func @transform_0(%arg0: i32) -> (i32, i32) {
    %c0_i32 = arith.constant 0 : i32
    %c0_i32_0 = arith.constant 0 : i32
    return %arg0, %c0_i32 : i32, i32
  }
  func.func @transform_1(%arg0: i32) -> (i32, i32) {
    %c0_i32 = arith.constant 0 : i32
    %c0_i32_0 = arith.constant 0 : i32
    return %arg0, %c0_i32 : i32, i32
  }
  func.func @transform_2(%arg0: i32) -> (i32, i32) {
    %c0_i32 = arith.constant 0 : i32
    %c0_i32_0 = arith.constant 0 : i32
    %c0_i32_1 = arith.constant 0 : i32
    return %c0_i32, %c0_i32_0 : i32, i32
  }
  func.func @transform_3(%arg0: i32) -> (i32, i32) {
    %c0_i32 = arith.constant 0 : i32
    %c0_i32_0 = arith.constant 0 : i32
    %c0_i32_1 = arith.constant 0 : i32
    return %c0_i32, %c0_i32_0 : i32, i32
  }
  func.func @transform_4(%arg0: i32) -> (i32, i32) {
    %c0_i32 = arith.constant 0 : i32
    %c0_i32_0 = arith.constant 0 : i32
    %c0_i32_1 = arith.constant 0 : i32
    return %c0_i32, %c0_i32_0 : i32, i32
  }
  func.func @transform_5(%arg0: i32) -> (i32, i32) {
    %c0_i32 = arith.constant 0 : i32
    %c0_i32_0 = arith.constant 0 : i32
    %c0_i32_1 = arith.constant 0 : i32
    return %c0_i32, %c0_i32_0 : i32, i32
  }
  func.func @transform_6(%arg0: i32) -> (i32, i32) {
    %c0_i32 = arith.constant 0 : i32
    %c0_i32_0 = arith.constant 0 : i32
    %c0_i32_1 = arith.constant 0 : i32
    return %c0_i32, %c0_i32_0 : i32, i32
  }
  func.func @transform_7(%arg0: i32) -> (i32, i32) {
    %c0_i32 = arith.constant 0 : i32
    %c0_i32_0 = arith.constant 0 : i32
    %c0_i32_1 = arith.constant 0 : i32
    return %c0_i32, %c0_i32_0 : i32, i32
  }
  func.func @transform_8(%arg0: i32) -> (i32, i32) {
    %c0_i32 = arith.constant 0 : i32
    %c0_i32_0 = arith.constant 0 : i32
    %c0_i32_1 = arith.constant 0 : i32
    return %c0_i32, %c0_i32_0 : i32, i32
  }
  func.func @transform_9(%arg0: i32) -> (i32, i32) {
    %c0_i32 = arith.constant 0 : i32
    %c0_i32_0 = arith.constant 0 : i32
    %c0_i32_1 = arith.constant 0 : i32
    return %c0_i32, %c0_i32_0 : i32, i32
  }
  func.func @transform_10(%arg0: i32) -> (i32, i32) {
    %c0_i32 = arith.constant 0 : i32
    %c0_i32_0 = arith.constant 0 : i32
    %c0_i32_1 = arith.constant 0 : i32
    return %c0_i32, %c0_i32_0 : i32, i32
  }
  func.func @transform_11(%arg0: i32) -> (i32, i32) {
    %c0_i32 = arith.constant 0 : i32
    %c0_i32_0 = arith.constant 0 : i32
    %c0_i32_1 = arith.constant 0 : i32
    return %c0_i32, %c0_i32_0 : i32, i32
  }
  func.func @transform_12(%arg0: i32) -> (i32, i32) {
    %c0_i32 = arith.constant 0 : i32
    %c0_i32_0 = arith.constant 0 : i32
    %c0_i32_1 = arith.constant 0 : i32
    return %c0_i32, %c0_i32_0 : i32, i32
  }
  func.func @transform_13(%arg0: i32) -> (i32, i32) {
    %c0_i32 = arith.constant 0 : i32
    %c0_i32_0 = arith.constant 0 : i32
    %c0_i32_1 = arith.constant 0 : i32
    return %c0_i32, %c0_i32_0 : i32, i32
  }
  func.func @transform_14(%arg0: i32) -> (i32, i32) {
    %c0_i32 = arith.constant 0 : i32
    %c0_i32_0 = arith.constant 0 : i32
    return %arg0, %c0_i32 : i32, i32
  }
  func.func @transform_15(%arg0: i32) -> (i32, i32) {
    %c0_i32 = arith.constant 0 : i32
    %c0_i32_0 = arith.constant 0 : i32
    return %arg0, %c0_i32 : i32, i32
  }
}

</mosaic_0001>

<llo_original>
// kernel: tpu_custom_call.1
$region0: #{tpu_custom_call.1}
  #allocation0 [shape = 'u32[]', space=smem, size = 0x4, offset = 0x4, fixed_abs, tag = 'smem constant byte address 0x4 - core index']
  #allocation1 [shape = 'u32[144,128]{1,0:T(1,128)}', space=vmem, size = 0x12000, scoped, tag = 'internal scratch']
  %s0 = inlined_call_operand.hbm [shape: bf16[32,128], index: 0, kind: input, shape index: {}]
  %s1 = inlined_call_operand.hbm [shape: f32[32,128], index: 1, kind: input, shape index: {}]
  %s2 = inlined_call_operand.hbm [shape: bf16[128,128], index: 2, kind: input, shape index: {}]
  %s3 = inlined_call_operand.vmem [shape: f32[1,128], index: 3, kind: input, shape index: {}]
  %s4 = inlined_call_operand.hbm [shape: bf16[128,128], index: 4, kind: input, shape index: {}]
  %s5 = inlined_call_operand.vmem [shape: f32[1,128], index: 5, kind: input, shape index: {}]
  %s6 = inlined_call_operand.hbm [shape: bf16[128,256], index: 6, kind: input, shape index: {}]
  %s7 = inlined_call_operand.vmem [shape: f32[1,256], index: 7, kind: input, shape index: {}]
  %s8 = inlined_call_operand.hbm [shape: bf16[128,128], index: 8, kind: input, shape index: {}]
  %s9 = inlined_call_operand.vmem [shape: f32[1,128], index: 9, kind: input, shape index: {}]
  %s10 = inlined_call_operand.hbm [shape: bf16[128,128], index: 10, kind: input, shape index: {}]
  %s11 = inlined_call_operand.vmem [shape: f32[1,128], index: 11, kind: input, shape index: {}]
  %s12 = inlined_call_operand.hbm [shape: bf16[128,128], index: 12, kind: input, shape index: {}]
  %s13 = inlined_call_operand.vmem [shape: f32[1,128], index: 13, kind: input, shape index: {}]
  %s14 = inlined_call_operand.hbm [shape: f32[32,128], index: 14, kind: output, shape index: {0}]
  %s15 = inlined_call_operand.hbm [shape: f32[32,256], index: 15, kind: output, shape index: {1}]
  %16 = xla_tuple %s14, %s15
  %s17 = sld [smem:[#allocation0]]
  $region129: #{tpu_custom_call.1} parent=0
    _
  %s19 = ssub.s32 1, %s17
  %s20 = scalar_select 0, %s19, %s17
  $region1: #{tpu_custom_call.1} parent=0
    #allocation2 [shape = 'u8[8192]{0}', space=vmem, size = 0x2000, scoped, tag = 'input window, operand 0']
    #allocation3 [shape = 's32[2]{0}', space=sflag, size = 0x8, scoped, tag = 'scoped memory for tpu_custom_call.1']
    #allocation4 [shape = 's32[2]{0}', space=sflag, size = 0x8, scoped, tag = 'scoped memory for tpu_custom_call.1']
    #allocation5 [shape = 'u8[16384]{0}', space=vmem, size = 0x4000, scoped, tag = 'input window, operand 1']
    #allocation6 [shape = 's32[2]{0}', space=sflag, size = 0x8, scoped, tag = 'scoped memory for tpu_custom_call.1']
    #allocation7 [shape = 'u8[32768]{0}', space=vmem, size = 0x8000, scoped, tag = 'input window, operand 2, single buffered']
    #allocation8 [shape = 'u8[32768]{0}', space=vmem, size = 0x8000, scoped, tag = 'input window, operand 4, single buffered']
    #allocation9 [shape = 's32[1]{0}', space=sflag, size = 0x4, scoped, tag = 'scoped memory for tpu_custom_call.1']
    #allocation10 [shape = 'u8[65536]{0}', space=vmem, size = 0x10000, scoped, tag = 'input window, operand 6, single buffered']
    #allocation11 [shape = 'u8[32768]{0}', space=vmem, size = 0x8000, scoped, tag = 'input window, operand 8, single buffered']
    #allocation12 [shape = 's32[1]{0}', space=sflag, size = 0x4, scoped, tag = 'scoped memory for tpu_custom_call.1']
    #allocation13 [shape = 'u8[32768]{0}', space=vmem, size = 0x8000, scoped, tag = 'input window, operand 10, single buffered']
    #allocation14 [shape = 'u8[32768]{0}', space=vmem, size = 0x8000, scoped, tag = 'input window, operand 12, single buffered']
    #allocation15 [shape = 's32[1]{0}', space=sflag, size = 0x4, scoped, tag = 'scoped memory for tpu_custom_call.1']
    #allocation16 [shape = 'u8[16384]{0}', space=vmem, size = 0x4000, scoped, tag = 'output window, operand 0']
    #allocation17 [shape = 'u8[32768]{0}', space=vmem, size = 0x8000, scoped, tag = 'output window, operand 1']
    #allocation18 [shape = 's32[2]{0}', space=sflag, size = 0x8, scoped, tag = 'scoped memory for tpu_custom_call.1']
    %21 = vsyncpa [#allocation3], 0
    %s22 = scalar_lea.sflag [#allocation3], 1
    %23 = vsyncpa %s22, 0
    %24 = vsyncpa [#allocation6], 0
    %s25 = scalar_lea.sflag [#allocation6], 1
    %26 = vsyncpa %s25, 0
    %27 = vsyncpa [#allocation9], 0
    %28 = vsyncpa [#allocation12], 0
    %29 = vsyncpa [#allocation15], 0
    %30 = vsyncpa [#allocation4], 0
    %s31 = scalar_lea.sflag [#allocation4], 1
    %32 = vsyncpa %s31, 0
    %33 = vsyncpa [#allocation18], 0
    %s34 = scalar_lea.sflag [#allocation18], 1
    %35 = vsyncpa %s34, 0
    loop: start=0, step=1, limit=4
    $region2: #{tpu_custom_call.1} parent=1 // loop_pre_header
      _
    $region3: #{tpu_custom_call.1} parent=1 // loop_header
      %s37 = sphi 0, %s41
      %p38 = scmp.ge.s32.totalorder %s37, 4
      %s47 = sphi 0, %s49
      %s50 = sphi 0, %s47
      %s51 = sphi 0, %s50
      %s67 = sphi 0, %s51
      %s73 = sphi 0, %s75
      %s76 = sphi 0, %s73
      %s77 = sphi 0, %s76
      %s93 = sphi 0, %s77
      %s97 = sphi 0, %s97
      %s99 = sphi 0, %s97
      %s100 = sphi 0, %s99
      %s114 = sphi 0, %s100
      %s118 = sphi 0, %s118
      %s120 = sphi 0, %s118
      %s121 = sphi 0, %s120
      %s135 = sphi 0, %s121
      %s139 = sphi 0, %s139
      %s141 = sphi 0, %s139
      %s142 = sphi 0, %s141
      %s156 = sphi 0, %s142
      %s160 = sphi 0, %s160
      %s162 = sphi 0, %s160
      %s163 = sphi 0, %s162
      %s177 = sphi 0, %s163
      %s181 = sphi 0, %s181
      %s183 = sphi 0, %s181
      %s184 = sphi 0, %s183
      %s198 = sphi 0, %s184
      %s202 = sphi 0, %s202
      %s204 = sphi 0, %s202
      %s205 = sphi 0, %s204
      %s219 = sphi 0, %s205
      %s223 = sphi 0, %s223
      %s225 = sphi 0, %s223
      %s226 = sphi 0, %s225
      %s240 = sphi 0, %s226
      %s244 = sphi 0, %s244
      %s246 = sphi 0, %s244
      %s247 = sphi 0, %s246
      %s261 = sphi 0, %s247
      %s265 = sphi 0, %s265
      %s267 = sphi 0, %s265
      %s268 = sphi 0, %s267
      %s282 = sphi 0, %s268
      %s286 = sphi 0, %s286
      %s288 = sphi 0, %s286
      %s289 = sphi 0, %s288
      %s303 = sphi 0, %s289
      %s307 = sphi 0, %s307
      %s309 = sphi 0, %s307
      %s310 = sphi 0, %s309
      %s324 = sphi 0, %s310
      %s328 = sphi 0, %s328
      %s330 = sphi 0, %s328
      %s331 = sphi 0, %s330
      %s345 = sphi 0, %s331
      %s351 = sphi 0, %s353
      %s354 = sphi 0, %s351
      %s355 = sphi 0, %s354
      %s371 = sphi 0, %s355
      %s377 = sphi 0, %s379
      %s380 = sphi 0, %s377
      %s381 = sphi 0, %s380
      %s397 = sphi 0, %s381
    $region4: #{tpu_custom_call.1} parent=1 // loop_header_branch
      %40 = sbr.rel (%p38) target = $region8
    $region5: #{tpu_custom_call.1} parent=1 // loop_body
      %s42 = ssub.s32 %s37, 1
      %s43 = ssub.s32 %s37, 2
      %s44 = sadd.s32 %s37, 1
      %s45 = ssub.s32 %s37, %s44
      %p46 = scmp.eq.s32.totalorder %s45, 0
      %s48 = sadd.s32 %s47, 1
      %s49 = scalar_select %p46, %s47, %s48
      %p52 = pneg %p46
      %p53 = scmp.eq.s32.totalorder %s37, 1
      %p54 = por %p52, %p53
      %p55 = scmp.ne.s32.totalorder %s47, %s50
      %p56 = scmp.eq.s32.totalorder %s37, 0
      %p57 = por %p55, %p56
      %p58 = scmp.ne.s32.totalorder %s47, %s50
      %p59 = scmp.eq.s32.totalorder %s42, 1
      %p60 = por %p58, %p59
      %p61 = scmp.ne.s32.totalorder %s50, %s51
      %p62 = scmp.eq.s32.totalorder %s42, 0
      %p63 = por %p61, %p62
      %p64 = scmp.ne.s32.totalorder %s50, %s51
      %p65 = scmp.eq.s32.totalorder %s43, 1
      %p66 = por %p64, %p65
      %p68 = scmp.ne.s32.totalorder %s51, %s67
      %p69 = scmp.eq.s32.totalorder %s43, 0
      %p70 = por %p68, %p69
      %s71 = ssub.s32 %s37, %s44
      %p72 = scmp.eq.s32.totalorder %s71, 0
      %s74 = sadd.s32 %s73, 1
      %s75 = scalar_select %p72, %s73, %s74
      %p78 = pneg %p72
      %p79 = scmp.eq.s32.totalorder %s37, 1
      %p80 = por %p78, %p79
      %p81 = scmp.ne.s32.totalorder %s73, %s76
      %p82 = scmp.eq.s32.totalorder %s37, 0
      %p83 = por %p81, %p82
      %p84 = scmp.ne.s32.totalorder %s73, %s76
      %p85 = scmp.eq.s32.totalorder %s42, 1
      %p86 = por %p84, %p85
      %p87 = scmp.ne.s32.totalorder %s76, %s77
      %p88 = scmp.eq.s32.totalorder %s42, 0
      %p89 = por %p87, %p88
      %p90 = scmp.ne.s32.totalorder %s76, %s77
      %p91 = scmp.eq.s32.totalorder %s43, 1
      %p92 = por %p90, %p91
      %p94 = scmp.ne.s32.totalorder %s77, %s93
      %p95 = scmp.eq.s32.totalorder %s43, 0
      %p96 = por %p94, %p95
      %s98 = sadd.s32 %s97, 1
      %p101 = scmp.eq.s32.totalorder %s37, 1
      %p102 = scmp.ne.s32.totalorder %s97, %s99
      %p103 = scmp.eq.s32.totalorder %s37, 0
      %p104 = por %p102, %p103
      %p105 = scmp.ne.s32.totalorder %s97, %s99
      %p106 = scmp.eq.s32.totalorder %s42, 1
      %p107 = por %p105, %p106
      %p108 = scmp.ne.s32.totalorder %s99, %s100
      %p109 = scmp.eq.s32.totalorder %s42, 0
      %p110 = por %p108, %p109
      %p111 = scmp.ne.s32.totalorder %s99, %s100
      %p112 = scmp.eq.s32.totalorder %s43, 1
      %p113 = por %p111, %p112
      %p115 = scmp.ne.s32.totalorder %s100, %s114
      %p116 = scmp.eq.s32.totalorder %s43, 0
      %p117 = por %p115, %p116
      %s119 = sadd.s32 %s118, 1
      %p122 = scmp.eq.s32.totalorder %s37, 1
      %p123 = scmp.ne.s32.totalorder %s118, %s120
      %p124 = scmp.eq.s32.totalorder %s37, 0
      %p125 = por %p123, %p124
      %p126 = scmp.ne.s32.totalorder %s118, %s120
      %p127 = scmp.eq.s32.totalorder %s42, 1
      %p128 = por %p126, %p127
      %p129 = scmp.ne.s32.totalorder %s120, %s121
      %p130 = scmp.eq.s32.totalorder %s42, 0
      %p131 = por %p129, %p130
      %p132 = scmp.ne.s32.totalorder %s120, %s121
      %p133 = scmp.eq.s32.totalorder %s43, 1
      %p134 = por %p132, %p133
      %p136 = scmp.ne.s32.totalorder %s121, %s135
      %p137 = scmp.eq.s32.totalorder %s43, 0
      %p138 = por %p136, %p137
      %s140 = sadd.s32 %s139, 1
      %p143 = scmp.eq.s32.totalorder %s37, 1
      %p144 = scmp.ne.s32.totalorder %s139, %s141
      %p145 = scmp.eq.s32.totalorder %s37, 0
      %p146 = por %p144, %p145
      %p147 = scmp.ne.s32.totalorder %s139, %s141
      %p148 = scmp.eq.s32.totalorder %s42, 1
      %p149 = por %p147, %p148
      %p150 = scmp.ne.s32.totalorder %s141, %s142
      %p151 = scmp.eq.s32.totalorder %s42, 0
      %p152 = por %p150, %p151
      %p153 = scmp.ne.s32.totalorder %s141, %s142
      %p154 = scmp.eq.s32.totalorder %s43, 1
      %p155 = por %p153, %p154
      %p157 = scmp.ne.s32.totalorder %s142, %s156
      %p158 = scmp.eq.s32.totalorder %s43, 0
      %p159 = por %p157, %p158
      %s161 = sadd.s32 %s160, 1
      %p164 = scmp.eq.s32.totalorder %s37, 1
      %p165 = scmp.ne.s32.totalorder %s160, %s162
      %p166 = scmp.eq.s32.totalorder %s37, 0
      %p167 = por %p165, %p166
      %p168 = scmp.ne.s32.totalorder %s160, %s162
      %p169 = scmp.eq.s32.totalorder %s42, 1
      %p170 = por %p168, %p169
      %p171 = scmp.ne.s32.totalorder %s162, %s163
      %p172 = scmp.eq.s32.totalorder %s42, 0
      %p173 = por %p171, %p172
      %p174 = scmp.ne.s32.totalorder %s162, %s163
      %p175 = scmp.eq.s32.totalorder %s43, 1
      %p176 = por %p174, %p175
      %p178 = scmp.ne.s32.totalorder %s163, %s177
      %p179 = scmp.eq.s32.totalorder %s43, 0
      %p180 = por %p178, %p179
      %s182 = sadd.s32 %s181, 1
      %p185 = scmp.eq.s32.totalorder %s37, 1
      %p186 = scmp.ne.s32.totalorder %s181, %s183
      %p187 = scmp.eq.s32.totalorder %s37, 0
      %p188 = por %p186, %p187
      %p189 = scmp.ne.s32.totalorder %s181, %s183
      %p190 = scmp.eq.s32.totalorder %s42, 1
      %p191 = por %p189, %p190
      %p192 = scmp.ne.s32.totalorder %s183, %s184
      %p193 = scmp.eq.s32.totalorder %s42, 0
      %p194 = por %p192, %p193
      %p195 = scmp.ne.s32.totalorder %s183, %s184
      %p196 = scmp.eq.s32.totalorder %s43, 1
      %p197 = por %p195, %p196
      %p199 = scmp.ne.s32.totalorder %s184, %s198
      %p200 = scmp.eq.s32.totalorder %s43, 0
      %p201 = por %p199, %p200
      %s203 = sadd.s32 %s202, 1
      %p206 = scmp.eq.s32.totalorder %s37, 1
      %p207 = scmp.ne.s32.totalorder %s202, %s204
      %p208 = scmp.eq.s32.totalorder %s37, 0
      %p209 = por %p207, %p208
      %p210 = scmp.ne.s32.totalorder %s202, %s204
      %p211 = scmp.eq.s32.totalorder %s42, 1
      %p212 = por %p210, %p211
      %p213 = scmp.ne.s32.totalorder %s204, %s205
      %p214 = scmp.eq.s32.totalorder %s42, 0
      %p215 = por %p213, %p214
      %p216 = scmp.ne.s32.totalorder %s204, %s205
      %p217 = scmp.eq.s32.totalorder %s43, 1
      %p218 = por %p216, %p217
      %p220 = scmp.ne.s32.totalorder %s205, %s219
      %p221 = scmp.eq.s32.totalorder %s43, 0
      %p222 = por %p220, %p221
      %s224 = sadd.s32 %s223, 1
      %p227 = scmp.eq.s32.totalorder %s37, 1
      %p228 = scmp.ne.s32.totalorder %s223, %s225
      %p229 = scmp.eq.s32.totalorder %s37, 0
      %p230 = por %p228, %p229
      %p231 = scmp.ne.s32.totalorder %s223, %s225
      %p232 = scmp.eq.s32.totalorder %s42, 1
      %p233 = por %p231, %p232
      %p234 = scmp.ne.s32.totalorder %s225, %s226
      %p235 = scmp.eq.s32.totalorder %s42, 0
      %p236 = por %p234, %p235
      %p237 = scmp.ne.s32.totalorder %s225, %s226
      %p238 = scmp.eq.s32.totalorder %s43, 1
      %p239 = por %p237, %p238
      %p241 = scmp.ne.s32.totalorder %s226, %s240
      %p242 = scmp.eq.s32.totalorder %s43, 0
      %p243 = por %p241, %p242
      %s245 = sadd.s32 %s244, 1
      %p248 = scmp.eq.s32.totalorder %s37, 1
      %p249 = scmp.ne.s32.totalorder %s244, %s246
      %p250 = scmp.eq.s32.totalorder %s37, 0
      %p251 = por %p249, %p250
      %p252 = scmp.ne.s32.totalorder %s244, %s246
      %p253 = scmp.eq.s32.totalorder %s42, 1
      %p254 = por %p252, %p253
      %p255 = scmp.ne.s32.totalorder %s246, %s247
      %p256 = scmp.eq.s32.totalorder %s42, 0
      %p257 = por %p255, %p256
      %p258 = scmp.ne.s32.totalorder %s246, %s247
      %p259 = scmp.eq.s32.totalorder %s43, 1
      %p260 = por %p258, %p259
      %p262 = scmp.ne.s32.totalorder %s247, %s261
      %p263 = scmp.eq.s32.totalorder %s43, 0
      %p264 = por %p262, %p263
      %s266 = sadd.s32 %s265, 1
      %p269 = scmp.eq.s32.totalorder %s37, 1
      %p270 = scmp.ne.s32.totalorder %s265, %s267
      %p271 = scmp.eq.s32.totalorder %s37, 0
      %p272 = por %p270, %p271
      %p273 = scmp.ne.s32.totalorder %s265, %s267
      %p274 = scmp.eq.s32.totalorder %s42, 1
      %p275 = por %p273, %p274
      %p276 = scmp.ne.s32.totalorder %s267, %s268
      %p277 = scmp.eq.s32.totalorder %s42, 0
      %p278 = por %p276, %p277
      %p279 = scmp.ne.s32.totalorder %s267, %s268
      %p280 = scmp.eq.s32.totalorder %s43, 1
      %p281 = por %p279, %p280
      %p283 = scmp.ne.s32.totalorder %s268, %s282
      %p284 = scmp.eq.s32.totalorder %s43, 0
      %p285 = por %p283, %p284
      %s287 = sadd.s32 %s286, 1
      %p290 = scmp.eq.s32.totalorder %s37, 1
      %p291 = scmp.ne.s32.totalorder %s286, %s288
      %p292 = scmp.eq.s32.totalorder %s37, 0
      %p293 = por %p291, %p292
      %p294 = scmp.ne.s32.totalorder %s286, %s288
      %p295 = scmp.eq.s32.totalorder %s42, 1
      %p296 = por %p294, %p295
      %p297 = scmp.ne.s32.totalorder %s288, %s289
      %p298 = scmp.eq.s32.totalorder %s42, 0
      %p299 = por %p297, %p298
      %p300 = scmp.ne.s32.totalorder %s288, %s289
      %p301 = scmp.eq.s32.totalorder %s43, 1
      %p302 = por %p300, %p301
      %p304 = scmp.ne.s32.totalorder %s289, %s303
      %p305 = scmp.eq.s32.totalorder %s43, 0
      %p306 = por %p304, %p305
      %s308 = sadd.s32 %s307, 1
      %p311 = scmp.eq.s32.totalorder %s37, 1
      %p312 = scmp.ne.s32.totalorder %s307, %s309
      %p313 = scmp.eq.s32.totalorder %s37, 0
      %p314 = por %p312, %p313
      %p315 = scmp.ne.s32.totalorder %s307, %s309
      %p316 = scmp.eq.s32.totalorder %s42, 1
      %p317 = por %p315, %p316
      %p318 = scmp.ne.s32.totalorder %s309, %s310
      %p319 = scmp.eq.s32.totalorder %s42, 0
      %p320 = por %p318, %p319
      %p321 = scmp.ne.s32.totalorder %s309, %s310
      %p322 = scmp.eq.s32.totalorder %s43, 1
      %p323 = por %p321, %p322
      %p325 = scmp.ne.s32.totalorder %s310, %s324
      %p326 = scmp.eq.s32.totalorder %s43, 0
      %p327 = por %p325, %p326
      %s329 = sadd.s32 %s328, 1
      %p332 = scmp.eq.s32.totalorder %s37, 1
      %p333 = scmp.ne.s32.totalorder %s328, %s330
      %p334 = scmp.eq.s32.totalorder %s37, 0
      %p335 = por %p333, %p334
      %p336 = scmp.ne.s32.totalorder %s328, %s330
      %p337 = scmp.eq.s32.totalorder %s42, 1
      %p338 = por %p336, %p337
      %p339 = scmp.ne.s32.totalorder %s330, %s331
      %p340 = scmp.eq.s32.totalorder %s42, 0
      %p341 = por %p339, %p340
      %p342 = scmp.ne.s32.totalorder %s330, %s331
      %p343 = scmp.eq.s32.totalorder %s43, 1
      %p344 = por %p342, %p343
      %p346 = scmp.ne.s32.totalorder %s331, %s345
      %p347 = scmp.eq.s32.totalorder %s43, 0
      %p348 = por %p346, %p347
      %s349 = ssub.s32 %s37, %s44
      %p350 = scmp.eq.s32.totalorder %s349, 0
      %s352 = sadd.s32 %s351, 1
      %s353 = scalar_select %p350, %s351, %s352
      %p356 = pneg %p350
      %p357 = scmp.eq.s32.totalorder %s37, 1
      %p358 = por %p356, %p357
      %p359 = scmp.ne.s32.totalorder %s351, %s354
      %p360 = scmp.eq.s32.totalorder %s37, 0
      %p361 = por %p359, %p360
      %p362 = scmp.ne.s32.totalorder %s351, %s354
      %p363 = scmp.eq.s32.totalorder %s42, 1
      %p364 = por %p362, %p363
      %p365 = scmp.ne.s32.totalorder %s354, %s355
      %p366 = scmp.eq.s32.totalorder %s42, 0
      %p367 = por %p365, %p366
      %p368 = scmp.ne.s32.totalorder %s354, %s355
      %p369 = scmp.eq.s32.totalorder %s43, 1
      %p370 = por %p368, %p369
      %p372 = scmp.ne.s32.totalorder %s355, %s371
      %p373 = scmp.eq.s32.totalorder %s43, 0
      %p374 = por %p372, %p373
      %s375 = ssub.s32 %s37, %s44
      %p376 = scmp.eq.s32.totalorder %s375, 0
      %s378 = sadd.s32 %s377, 1
      %s379 = scalar_select %p376, %s377, %s378
      %p382 = pneg %p376
      %p383 = scmp.eq.s32.totalorder %s37, 1
      %p384 = por %p382, %p383
      %p385 = scmp.ne.s32.totalorder %s377, %s380
      %p386 = scmp.eq.s32.totalorder %s37, 0
      %p387 = por %p385, %p386
      %p388 = scmp.ne.s32.totalorder %s377, %s380
      %p389 = scmp.eq.s32.totalorder %s42, 1
      %p390 = por %p388, %p389
      %p391 = scmp.ne.s32.totalorder %s380, %s381
      %p392 = scmp.eq.s32.totalorder %s42, 0
      %p393 = por %p391, %p392
      %p394 = scmp.ne.s32.totalorder %s380, %s381
      %p395 = scmp.eq.s32.totalorder %s43, 1
      %p396 = por %p394, %p395
      %p398 = scmp.ne.s32.totalorder %s381, %s397
      %p399 = scmp.eq.s32.totalorder %s43, 0
      %p400 = por %p398, %p399
      %p401 = scmp.le.s32.totalorder 1, %s37
      %p402 = scmp.lt.s32.totalorder %s37, 3
      %p403 = pnand %p401, %p402
      %p404 = pneg %p403
      // Predicated region
      $region9: #{tpu_custom_call.1} parent=5 // pred_check
        _
      $region10: #{tpu_custom_call.1} parent=5 // pred_check_branch
        %406 = sbr.rel (%p403) target = $region12
      $region11: #{tpu_custom_call.1} parent=5 // pred_region
        %s407 = ssub.s32 %s37, 1
        // Predicated region
        $region13: #{tpu_custom_call.1} parent=11 // pred_check
          %p408 = pneg %p110
        $region14: #{tpu_custom_call.1} parent=11 // pred_check_branch
          %410 = sbr.rel (%p408) target = $region16
        $region15: #{tpu_custom_call.1} parent=11 // pred_region
          %s412 = ssub.s32 1024, 1024
          %413 = vsyncadd [#allocation6], %s412
          %s414 = sshll.u32 [#allocation7], 4
          %s415 = int_to_ptr.vmem [resolvable:$true] %s414
          %420 = dma.hbm_to_vmem [thread:$0]  %s2, 1024, %s415, [#allocation6], 64, 64, 4
        $region16: #{tpu_custom_call.1} parent=11 // pred_fallthru
          _
        // Predicated region
        $region17: #{tpu_custom_call.1} parent=11 // pred_check
          %p421 = pneg %p131
        $region18: #{tpu_custom_call.1} parent=11 // pred_check_branch
          %423 = sbr.rel (%p421) target = $region20
        $region19: #{tpu_custom_call.1} parent=11 // pred_region
          _
        $region20: #{tpu_custom_call.1} parent=11 // pred_fallthru
          _
        // Predicated region
        $region21: #{tpu_custom_call.1} parent=11 // pred_check
          %p424 = pneg %p152
        $region22: #{tpu_custom_call.1} parent=11 // pred_check_branch
          %426 = sbr.rel (%p424) target = $region24
        $region23: #{tpu_custom_call.1} parent=11 // pred_region
          %s428 = ssub.s32 1024, 1024
          %429 = vsyncadd [#allocation9], %s428
          %s430 = sshll.u32 [#allocation8], 4
          %s431 = int_to_ptr.vmem [resolvable:$true] %s430
          %436 = dma.hbm_to_vmem [thread:$0]  %s4, 1024, %s431, [#allocation9], 64, 64, 4
        $region24: #{tpu_custom_call.1} parent=11 // pred_fallthru
          _
        // Predicated region
        $region25: #{tpu_custom_call.1} parent=11 // pred_check
          %p437 = pneg %p173
        $region26: #{tpu_custom_call.1} parent=11 // pred_check_branch
          %439 = sbr.rel (%p437) target = $region28
        $region27: #{tpu_custom_call.1} parent=11 // pred_region
          _
        $region28: #{tpu_custom_call.1} parent=11 // pred_fallthru
          _
        // Predicated region
        $region29: #{tpu_custom_call.1} parent=11 // pred_check
          %p440 = pneg %p194
        $region30: #{tpu_custom_call.1} parent=11 // pred_check_branch
          %442 = sbr.rel (%p440) target = $region32
        $region31: #{tpu_custom_call.1} parent=11 // pred_region
          %s444 = ssub.s32 2048, 2048
          %445 = vsyncadd [#allocation9], %s444
          %s446 = sshll.u32 [#allocation10], 4
          %s447 = int_to_ptr.vmem [resolvable:$true] %s446
          %452 = dma.hbm_to_vmem [thread:$0]  %s6, 2048, %s447, [#allocation9], 128, 128, 8
        $region32: #{tpu_custom_call.1} parent=11 // pred_fallthru
          _
        // Predicated region
        $region33: #{tpu_custom_call.1} parent=11 // pred_check
          %p453 = pneg %p215
        $region34: #{tpu_custom_call.1} parent=11 // pred_check_branch
          %455 = sbr.rel (%p453) target = $region36
        $region35: #{tpu_custom_call.1} parent=11 // pred_region
          _
        $region36: #{tpu_custom_call.1} parent=11 // pred_fallthru
          _
        // Predicated region
        $region37: #{tpu_custom_call.1} parent=11 // pred_check
          %p456 = pneg %p236
        $region38: #{tpu_custom_call.1} parent=11 // pred_check_branch
          %458 = sbr.rel (%p456) target = $region40
        $region39: #{tpu_custom_call.1} parent=11 // pred_region
          %s460 = ssub.s32 1024, 1024
          %461 = vsyncadd [#allocation12], %s460
          %s462 = sshll.u32 [#allocation11], 4
          %s463 = int_to_ptr.vmem [resolvable:$true] %s462
          %468 = dma.hbm_to_vmem [thread:$0]  %s8, 1024, %s463, [#allocation12], 64, 64, 4
        $region40: #{tpu_custom_call.1} parent=11 // pred_fallthru
          _
        // Predicated region
        $region41: #{tpu_custom_call.1} parent=11 // pred_check
          %p469 = pneg %p257
        $region42: #{tpu_custom_call.1} parent=11 // pred_check_branch
          %471 = sbr.rel (%p469) target = $region44
        $region43: #{tpu_custom_call.1} parent=11 // pred_region
          _
        $region44: #{tpu_custom_call.1} parent=11 // pred_fallthru
          _
        // Predicated region
        $region45: #{tpu_custom_call.1} parent=11 // pred_check
          %p472 = pneg %p278
        $region46: #{tpu_custom_call.1} parent=11 // pred_check_branch
          %474 = sbr.rel (%p472) target = $region48
        $region47: #{tpu_custom_call.1} parent=11 // pred_region
          %s476 = ssub.s32 1024, 1024
          %477 = vsyncadd [#allocation12], %s476
          %s478 = sshll.u32 [#allocation13], 4
          %s479 = int_to_ptr.vmem [resolvable:$true] %s478
          %484 = dma.hbm_to_vmem [thread:$0]  %s10, 1024, %s479, [#allocation12], 64, 64, 4
        $region48: #{tpu_custom_call.1} parent=11 // pred_fallthru
          _
        // Predicated region
        $region49: #{tpu_custom_call.1} parent=11 // pred_check
          %p485 = pneg %p299
        $region50: #{tpu_custom_call.1} parent=11 // pred_check_branch
          %487 = sbr.rel (%p485) target = $region52
        $region51: #{tpu_custom_call.1} parent=11 // pred_region
          _
        $region52: #{tpu_custom_call.1} parent=11 // pred_fallthru
          _
        // Predicated region
        $region53: #{tpu_custom_call.1} parent=11 // pred_check
          %p488 = pneg %p320
        $region54: #{tpu_custom_call.1} parent=11 // pred_check_branch
          %490 = sbr.rel (%p488) target = $region56
        $region55: #{tpu_custom_call.1} parent=11 // pred_region
          %s492 = ssub.s32 1024, 1024
          %493 = vsyncadd [#allocation15], %s492
          %s494 = sshll.u32 [#allocation14], 4
          %s495 = int_to_ptr.vmem [resolvable:$true] %s494
          %500 = dma.hbm_to_vmem [thread:$0]  %s12, 1024, %s495, [#allocation15], 64, 64, 4
        $region56: #{tpu_custom_call.1} parent=11 // pred_fallthru
          _
        // Predicated region
        $region57: #{tpu_custom_call.1} parent=11 // pred_check
          %p501 = pneg %p341
        $region58: #{tpu_custom_call.1} parent=11 // pred_check_branch
          %503 = sbr.rel (%p501) target = $region60
        $region59: #{tpu_custom_call.1} parent=11 // pred_region
          _
        $region60: #{tpu_custom_call.1} parent=11 // pred_fallthru
          _
      $region12: #{tpu_custom_call.1} parent=5 // pred_fallthru
        _
      %p504 = scmp.lt.s32.totalorder %s37, 2
      // Predicated region
      $region61: #{tpu_custom_call.1} parent=5 // pred_check
        %p505 = pneg %p504
      $region62: #{tpu_custom_call.1} parent=5 // pred_check_branch
        %507 = sbr.rel (%p505) target = $region64
      $region63: #{tpu_custom_call.1} parent=5 // pred_region
        // Predicated region
        $region65: #{tpu_custom_call.1} parent=63 // pred_check
          %p508 = pneg %p57
        $region66: #{tpu_custom_call.1} parent=63 // pred_check_branch
          %510 = sbr.rel (%p508) target = $region68
        $region67: #{tpu_custom_call.1} parent=63 // pred_region
          %s511 = sand.u32 %s47, 1
          %s512 = scalar_lea.sflag [#allocation3], %s511
          %s513 = sand.u32 %s47, 1
          %s514 = smul.addr %s513, 8
          %s515 = scalar_lea.vmem [#allocation2], %s514
          %s516 = smul.u32 2, %s37
          %s518 = ssub.s32 128, 128
          %519 = vsyncadd %s512, %s518
          %s520 = smul.addr %s516, 64
          %s521 = scalar_lea.hbm %s0, %s520
          %s522 = sshll.u32 %s515, 4
          %s523 = int_to_ptr.vmem [resolvable:$true] %s522
          %528 = dma.hbm_to_vmem [thread:$0]  %s521, 128, %s523, %s512, 64, 64, 4
        $region68: #{tpu_custom_call.1} parent=63 // pred_fallthru
          _
        // Predicated region
        $region69: #{tpu_custom_call.1} parent=63 // pred_check
          %p529 = pneg %p83
        $region70: #{tpu_custom_call.1} parent=63 // pred_check_branch
          %531 = sbr.rel (%p529) target = $region72
        $region71: #{tpu_custom_call.1} parent=63 // pred_region
          %s532 = sand.u32 %s37, 1
          %s533 = scalar_lea.sflag [#allocation6], %s532
          %s534 = sand.u32 %s73, 1
          %s535 = smul.addr %s534, 16
          %s536 = scalar_lea.vmem [#allocation5], %s535
          %s537 = smul.u32 2, %s37
          %s539 = ssub.s32 256, 256
          %540 = vsyncadd %s533, %s539
          %s541 = smul.addr %s537, 128
          %s542 = scalar_lea.hbm %s1, %s541
          %s543 = sshll.u32 %s536, 4
          %s544 = int_to_ptr.vmem [resolvable:$true] %s543
          %549 = dma.hbm_to_vmem [thread:$0]  %s542, 256, %s544, %s533, 128, 128, 8
        $region72: #{tpu_custom_call.1} parent=63 // pred_fallthru
          _
      $region64: #{tpu_custom_call.1} parent=5 // pred_fallthru
        _
      %p550 = scmp.le.s32.totalorder 1, %s37
      %p551 = scmp.lt.s32.totalorder %s37, 3
      %p552 = pnand %p550, %p551
      %p553 = pneg %p552
      // Predicated region
      $region73: #{tpu_custom_call.1} parent=5 // pred_check
        _
      $region74: #{tpu_custom_call.1} parent=5 // pred_check_branch
        %555 = sbr.rel (%p552) target = $region76
      $region75: #{tpu_custom_call.1} parent=5 // pred_region
        %s556 = ssub.s32 %s37, 1
        %s557 = sand.u32 %s50, 1
        %s558 = scalar_lea.sflag [#allocation3], %s557
        %s559 = sand.u32 %s50, 1
        %s560 = smul.addr %s559, 8
        %s561 = scalar_lea.vmem [#allocation2], %s560
        // Predicated region
        $region77: #{tpu_custom_call.1} parent=75 // pred_check
          %p562 = pneg %p63
        $region78: #{tpu_custom_call.1} parent=75 // pred_check_branch
          %564 = sbr.rel (%p562) target = $region80
        $region79: #{tpu_custom_call.1} parent=75 // pred_region
          %565 = dma.done %s558, 128
        $region80: #{tpu_custom_call.1} parent=75 // pred_fallthru
          _
        %s566 = sand.u32 %s42, 1
        %s567 = scalar_lea.sflag [#allocation6], %s566
        %s568 = sand.u32 %s76, 1
        %s569 = smul.addr %s568, 16
        %s570 = scalar_lea.vmem [#allocation5], %s569
        // Predicated region
        $region81: #{tpu_custom_call.1} parent=75 // pred_check
          %p571 = pneg %p89
        $region82: #{tpu_custom_call.1} parent=75 // pred_check_branch
          %573 = sbr.rel (%p571) target = $region84
        $region83: #{tpu_custom_call.1} parent=75 // pred_region
          %574 = dma.done %s567, 256
        $region84: #{tpu_custom_call.1} parent=75 // pred_fallthru
          _
        // Predicated region
        $region85: #{tpu_custom_call.1} parent=75 // pred_check
          %p575 = pneg %p110
        $region86: #{tpu_custom_call.1} parent=75 // pred_check_branch
          %577 = sbr.rel (%p575) target = $region88
        $region87: #{tpu_custom_call.1} parent=75 // pred_region
          %578 = dma.done [#allocation6], 1024
        $region88: #{tpu_custom_call.1} parent=75 // pred_fallthru
          _
        // Predicated region
        $region89: #{tpu_custom_call.1} parent=75 // pred_check
          %p579 = pneg %p152
        $region90: #{tpu_custom_call.1} parent=75 // pred_check_branch
          %581 = sbr.rel (%p579) target = $region92
        $region91: #{tpu_custom_call.1} parent=75 // pred_region
          %582 = dma.done [#allocation9], 1024
        $region92: #{tpu_custom_call.1} parent=75 // pred_fallthru
          _
        // Predicated region
        $region93: #{tpu_custom_call.1} parent=75 // pred_check
          %p583 = pneg %p194
        $region94: #{tpu_custom_call.1} parent=75 // pred_check_branch
          %585 = sbr.rel (%p583) target = $region96
        $region95: #{tpu_custom_call.1} parent=75 // pred_region
          %586 = dma.done [#allocation9], 2048
        $region96: #{tpu_custom_call.1} parent=75 // pred_fallthru
          _
        // Predicated region
        $region97: #{tpu_custom_call.1} parent=75 // pred_check
          %p587 = pneg %p236
        $region98: #{tpu_custom_call.1} parent=75 // pred_check_branch
          %589 = sbr.rel (%p587) target = $region100
        $region99: #{tpu_custom_call.1} parent=75 // pred_region
          %590 = dma.done [#allocation12], 1024
        $region100: #{tpu_custom_call.1} parent=75 // pred_fallthru
          _
        // Predicated region
        $region101: #{tpu_custom_call.1} parent=75 // pred_check
          %p591 = pneg %p278
        $region102: #{tpu_custom_call.1} parent=75 // pred_check_branch
          %593 = sbr.rel (%p591) target = $region104
        $region103: #{tpu_custom_call.1} parent=75 // pred_region
          %594 = dma.done [#allocation12], 1024
        $region104: #{tpu_custom_call.1} parent=75 // pred_fallthru
          _
        // Predicated region
        $region105: #{tpu_custom_call.1} parent=75 // pred_check
          %p595 = pneg %p320
        $region106: #{tpu_custom_call.1} parent=75 // pred_check_branch
          %597 = sbr.rel (%p595) target = $region108
        $region107: #{tpu_custom_call.1} parent=75 // pred_region
          %598 = dma.done [#allocation15], 1024
        $region108: #{tpu_custom_call.1} parent=75 // pred_fallthru
          _
        %s599 = sand.u32 %s50, 1
        %s600 = scalar_lea.sflag [#allocation3], %s599
        %s601 = sand.u32 %s50, 1
        %s602 = smul.addr %s601, 8
        %s603 = scalar_lea.vmem [#allocation2], %s602
        %p604 = pneg %p63
        %p605 = pneg %p60
        %s606 = sand.u32 %s42, 1
        %s607 = scalar_lea.sflag [#allocation6], %s606
        %s608 = sand.u32 %s76, 1
        %s609 = smul.addr %s608, 16
        %s610 = scalar_lea.vmem [#allocation5], %s609
        %p611 = pneg %p89
        %p612 = pneg %p86
        %p613 = pneg %p110
        %p614 = pneg %p107
        %p615 = pneg %p131
        %p616 = pneg %p128
        %p617 = pneg %p152
        %p618 = pneg %p149
        %p619 = pneg %p173
        %p620 = pneg %p170
        %p621 = pneg %p194
        %p622 = pneg %p191
        %p623 = pneg %p215
        %p624 = pneg %p212
        %p625 = pneg %p236
        %p626 = pneg %p233
        %p627 = pneg %p257
        %p628 = pneg %p254
        %p629 = pneg %p278
        %p630 = pneg %p275
        %p631 = pneg %p299
        %p632 = pneg %p296
        %p633 = pneg %p320
        %p634 = pneg %p317
        %p635 = pneg %p341
        %p636 = pneg %p338
        %p637 = pneg %p367
        %p638 = pneg %p364
        %s639 = sand.u32 %s354, 1
        %s640 = scalar_lea.sflag [#allocation4], %s639
        %s641 = sand.u32 %s354, 1
        %s642 = smul.addr %s641, 16
        %s643 = scalar_lea.vmem [#allocation16], %s642
        %p644 = pneg %p393
        %p645 = pneg %p390
        %s646 = sand.u32 %s380, 1
        %s647 = scalar_lea.sflag [#allocation18], %s646
        %s648 = sand.u32 %s380, 1
        %s649 = smul.addr %s648, 32
        %s650 = scalar_lea.vmem [#allocation17], %s649
        %s651 = smul.u32 2, %s42
        %s652 = smul.u32 2, %s42
        %s653 = smul.u32 2, %s42
        %s654 = smul.u32 2, %s42
        %v656 = vld [vmem:[%s561] sm:$0xf]
        %v657 = vld [vmem:[%s561 + $0x4] sm:$0xf]
        %v658 = vld [vmem:[#allocation7] sm:$0xf]
        %v659 = vld [vmem:[#allocation7 + $0x4] sm:$0xf]
        %v660 = vld [vmem:[#allocation7 + $0x8] sm:$0xf]
        %v661 = vld [vmem:[#allocation7 + $0xc] sm:$0xf]
        %v662 = vld [vmem:[#allocation7 + $0x10] sm:$0xf]
        %v663 = vld [vmem:[#allocation7 + $0x14] sm:$0xf]
        %v664 = vld [vmem:[#allocation7 + $0x18] sm:$0xf]
        %v665 = vld [vmem:[#allocation7 + $0x1c] sm:$0xf]
        %v666 = vld [vmem:[#allocation7 + $0x20] sm:$0xf]
        %v667 = vld [vmem:[#allocation7 + $0x24] sm:$0xf]
        %v668 = vld [vmem:[#allocation7 + $0x28] sm:$0xf]
        %v669 = vld [vmem:[#allocation7 + $0x2c] sm:$0xf]
        %v670 = vld [vmem:[#allocation7 + $0x30] sm:$0xf]
        %v671 = vld [vmem:[#allocation7 + $0x34] sm:$0xf]
        %v672 = vld [vmem:[#allocation7 + $0x38] sm:$0xf]
        %v673 = vld [vmem:[#allocation7 + $0x3c] sm:$0xf]
        %v674 = vld [vmem:[%s3] sm:$0x1]
        %v676 = vlaneseq
        %v677 = vshrl.u32 %v676, 7
        %v678 = vsub.s32 0, %v677
        %v679 = vrot.slane %v674, %v678
        %v683 = vunpack.c.l.b16 %v656
        %v684 = vunpack.c.l.b16 %v657
        %v685 = vpack.c.b16 %v684, %v683
        %v703 = vunpack.c.l.b16 %v658
        %v704 = vunpack.c.l.b16 %v659
        %v705 = vunpack.c.l.b16 %v660
        %v706 = vunpack.c.l.b16 %v661
        %v707 = vunpack.c.l.b16 %v662
        %v708 = vunpack.c.l.b16 %v663
        %v709 = vunpack.c.l.b16 %v664
        %v710 = vunpack.c.l.b16 %v665
        %v711 = vunpack.c.l.b16 %v666
        %v712 = vunpack.c.l.b16 %v667
        %v713 = vunpack.c.l.b16 %v668
        %v714 = vunpack.c.l.b16 %v669
        %v715 = vunpack.c.l.b16 %v670
        %v716 = vunpack.c.l.b16 %v671
        %v717 = vunpack.c.l.b16 %v672
        %v718 = vunpack.c.l.b16 %v673
        %v719 = vpack.c.b16 %v704, %v703
        %v720 = vpack.c.b16 %v706, %v705
        %v721 = vpack.c.b16 %v708, %v707
        %v722 = vpack.c.b16 %v710, %v709
        %v723 = vpack.c.b16 %v712, %v711
        %v724 = vpack.c.b16 %v714, %v713
        %v725 = vpack.c.b16 %v716, %v715
        %v726 = vpack.c.b16 %v718, %v717
        %735 = vmatprep.subr.bf16.mxu0 0
        %736 = vmatpush1.bf16.msra.mxu0 %v719
        %737 = vmatprep.subr.bf16.mxu0 0
        %738 = vmatpush1.bf16.msra.mxu0 %v720
        %739 = vmatprep.subr.bf16.mxu0 0
        %740 = vmatpush1.bf16.msra.mxu0 %v721
        %741 = vmatprep.subr.bf16.mxu0 0
        %742 = vmatpush1.bf16.msra.mxu0 %v722
        %743 = vmatprep.subr.bf16.mxu0 0
        %744 = vmatpush1.bf16.msra.mxu0 %v723
        %745 = vmatprep.subr.bf16.mxu0 0
        %746 = vmatpush1.bf16.msra.mxu0 %v724
        %747 = vmatprep.subr.bf16.mxu0 0
        %748 = vmatpush1.bf16.msra.mxu0 %v725
        %749 = vmatprep.subr.bf16.mxu0 0
        %750 = vmatpush1.bf16.msra.mxu0 %v726
        %751 = vmatprep.subr.bf16.mxu0 0
        %752 = vmatpush1.bf16.msra.mxu0 0
        %753 = vmatprep.subr.bf16.mxu0 0
        %754 = vmatpush1.bf16.msra.mxu0 0
        %755 = vmatprep.subr.bf16.mxu0 0
        %756 = vmatpush1.bf16.msra.mxu0 0
        %757 = vmatprep.subr.bf16.mxu0 0
        %758 = vmatpush1.bf16.msra.mxu0 0
        %759 = vmatprep.subr.bf16.mxu0 0
        %760 = vmatpush1.bf16.msra.mxu0 0
        %761 = vmatprep.subr.bf16.mxu0 0
        %762 = vmatpush1.bf16.msra.mxu0 0
        %763 = vmatprep.subr.bf16.mxu0 0
        %764 = vmatpush1.bf16.msra.mxu0 0
        %765 = vmatprep.subr.bf16.mxu0 0
        %766 = vmatpush1.bf16.msra.mxu0 0
        %767 = vmatprep.mubr.bf16.mxu0 0
        %768 = vmatmul.mubr.bf16.gmra.mrb[0].mxu0 %v685
        %v769 = vpop.f32.mrb[0].mxu0
        %v770 = vadd.f32 %v679, %v769
        %v771 = vpop.f32.mrb[0].mxu0
        %v772 = vpop.f32.mrb[0].mxu0
        %v773 = vadd.f32 %v679, %v772
        %v774 = vpop.f32.mrb[0].mxu0
        %775 = vdwg.mxu0
        %v776 = vmax.f32 %v770, 0.0
        %v777 = vmax.f32 %v773, 0.0
        %v778 = vpack.c.bf16 %v777, %v776
        %v779 = vld [vmem:[#allocation8] sm:$0xf]
        %v780 = vld [vmem:[#allocation8 + $0x4] sm:$0xf]
        %v781 = vld [vmem:[#allocation8 + $0x8] sm:$0xf]
        %v782 = vld [vmem:[#allocation8 + $0xc] sm:$0xf]
        %v783 = vld [vmem:[#allocation8 + $0x10] sm:$0xf]
        %v784 = vld [vmem:[#allocation8 + $0x14] sm:$0xf]
        %v785 = vld [vmem:[#allocation8 + $0x18] sm:$0xf]
        %v786 = vld [vmem:[#allocation8 + $0x1c] sm:$0xf]
        %v787 = vld [vmem:[#allocation8 + $0x20] sm:$0xf]
        %v788 = vld [vmem:[#allocation8 + $0x24] sm:$0xf]
        %v789 = vld [vmem:[#allocation8 + $0x28] sm:$0xf]
        %v790 = vld [vmem:[#allocation8 + $0x2c] sm:$0xf]
        %v791 = vld [vmem:[#allocation8 + $0x30] sm:$0xf]
        %v792 = vld [vmem:[#allocation8 + $0x34] sm:$0xf]
        %v793 = vld [vmem:[#allocation8 + $0x38] sm:$0xf]
        %v794 = vld [vmem:[#allocation8 + $0x3c] sm:$0xf]
        %v795 = vld [vmem:[%s5] sm:$0x1]
        %v797 = vlaneseq
        %v798 = vshrl.u32 %v797, 7
        %v799 = vsub.s32 0, %v798
        %v800 = vrot.slane %v795, %v799
        %v818 = vunpack.c.l.b16 %v779
        %v819 = vunpack.c.l.b16 %v780
        %v820 = vunpack.c.l.b16 %v781
        %v821 = vunpack.c.l.b16 %v782
        %v822 = vunpack.c.l.b16 %v783
        %v823 = vunpack.c.l.b16 %v784
        %v824 = vunpack.c.l.b16 %v785
        %v825 = vunpack.c.l.b16 %v786
        %v826 = vunpack.c.l.b16 %v787
        %v827 = vunpack.c.l.b16 %v788
        %v828 = vunpack.c.l.b16 %v789
        %v829 = vunpack.c.l.b16 %v790
        %v830 = vunpack.c.l.b16 %v791
        %v831 = vunpack.c.l.b16 %v792
        %v832 = vunpack.c.l.b16 %v793
        %v833 = vunpack.c.l.b16 %v794
        %v834 = vpack.c.b16 %v819, %v818
        %v835 = vpack.c.b16 %v821, %v820
        %v836 = vpack.c.b16 %v823, %v822
        %v837 = vpack.c.b16 %v825, %v824
        %v838 = vpack.c.b16 %v827, %v826
        %v839 = vpack.c.b16 %v829, %v828
        %v840 = vpack.c.b16 %v831, %v830
        %v841 = vpack.c.b16 %v833, %v832
        %850 = vmatprep.subr.bf16.mxu0 0
        %851 = vmatpush1.bf16.msra.mxu0 %v834
        %852 = vmatprep.subr.bf16.mxu0 0
        %853 = vmatpush1.bf16.msra.mxu0 %v835
        %854 = vmatprep.subr.bf16.mxu0 0
        %855 = vmatpush1.bf16.msra.mxu0 %v836
        %856 = vmatprep.subr.bf16.mxu0 0
        %857 = vmatpush1.bf16.msra.mxu0 %v837
        %858 = vmatprep.subr.bf16.mxu0 0
        %859 = vmatpush1.bf16.msra.mxu0 %v838
        %860 = vmatprep.subr.bf16.mxu0 0
        %861 = vmatpush1.bf16.msra.mxu0 %v839
        %862 = vmatprep.subr.bf16.mxu0 0
        %863 = vmatpush1.bf16.msra.mxu0 %v840
        %864 = vmatprep.subr.bf16.mxu0 0
        %865 = vmatpush1.bf16.msra.mxu0 %v841
        %866 = vmatprep.subr.bf16.mxu0 0
        %867 = vmatpush1.bf16.msra.mxu0 0
        %868 = vmatprep.subr.bf16.mxu0 0
        %869 = vmatpush1.bf16.msra.mxu0 0
        %870 = vmatprep.subr.bf16.mxu0 0
        %871 = vmatpush1.bf16.msra.mxu0 0
        %872 = vmatprep.subr.bf16.mxu0 0
        %873 = vmatpush1.bf16.msra.mxu0 0
        %874 = vmatprep.subr.bf16.mxu0 0
        %875 = vmatpush1.bf16.msra.mxu0 0
        %876 = vmatprep.subr.bf16.mxu0 0
        %877 = vmatpush1.bf16.msra.mxu0 0
        %878 = vmatprep.subr.bf16.mxu0 0
        %879 = vmatpush1.bf16.msra.mxu0 0
        %880 = vmatprep.subr.bf16.mxu0 0
        %881 = vmatpush1.bf16.msra.mxu0 0
        %882 = vmatprep.mubr.bf16.mxu0 0
        %883 = vmatmul.mubr.bf16.gmra.mrb[0].mxu0 %v778
        %v884 = vpop.f32.mrb[0].mxu0
        %v885 = vadd.f32 %v800, %v884
        %v886 = vpop.f32.mrb[0].mxu0
        %v887 = vpop.f32.mrb[0].mxu0
        %v888 = vadd.f32 %v800, %v887
        %v889 = vpop.f32.mrb[0].mxu0
        %890 = vdwg.mxu0
        %v891 = vmax.f32 %v885, 0.0
        %v892 = vmax.f32 %v888, 0.0
        %v893 = vpack.c.bf16 %v892, %v891
        %v894 = vld [vmem:[#allocation10] sm:$0xff]
        %v895 = vld [vmem:[#allocation10 + $0x8] sm:$0xff]
        %v896 = vld [vmem:[#allocation10 + $0x10] sm:$0xff]
        %v897 = vld [vmem:[#allocation10 + $0x18] sm:$0xff]
        %v898 = vld [vmem:[#allocation10 + $0x20] sm:$0xff]
        %v899 = vld [vmem:[#allocation10 + $0x28] sm:$0xff]
        %v900 = vld [vmem:[#allocation10 + $0x30] sm:$0xff]
        %v901 = vld [vmem:[#allocation10 + $0x38] sm:$0xff]
        %v902 = vld [vmem:[#allocation10 + $0x40] sm:$0xff]
        %v903 = vld [vmem:[#allocation10 + $0x48] sm:$0xff]
        %v904 = vld [vmem:[#allocation10 + $0x50] sm:$0xff]
        %v905 = vld [vmem:[#allocation10 + $0x58] sm:$0xff]
        %v906 = vld [vmem:[#allocation10 + $0x60] sm:$0xff]
        %v907 = vld [vmem:[#allocation10 + $0x68] sm:$0xff]
        %v908 = vld [vmem:[#allocation10 + $0x70] sm:$0xff]
        %v909 = vld [vmem:[#allocation10 + $0x78] sm:$0xff]
        %v910 = vld [vmem:[%s7] sm:$0x3]
        %v912 = vlaneseq
        %v913 = vshrl.u32 %v912, 7
        %v914 = vsub.s32 0, %v913
        %v915 = vrot.slane %v910, %v914
        %v916 = vlaneseq
        %v917 = vshrl.u32 %v916, 7
        %v918 = vsub.s32 1, %v917
        %v919 = vrot.slane %v910, %v918
        %v938 = vunpack.c.l.b16 %v894
        %v939 = vunpack.c.h.b16 %v894
        %v940 = vunpack.c.l.b16 %v895
        %v941 = vunpack.c.h.b16 %v895
        %v942 = vunpack.c.l.b16 %v896
        %v943 = vunpack.c.h.b16 %v896
        %v944 = vunpack.c.l.b16 %v897
        %v945 = vunpack.c.h.b16 %v897
        %v946 = vunpack.c.l.b16 %v898
        %v947 = vunpack.c.h.b16 %v898
        %v948 = vunpack.c.l.b16 %v899
        %v949 = vunpack.c.h.b16 %v899
        %v950 = vunpack.c.l.b16 %v900
        %v951 = vunpack.c.h.b16 %v900
        %v952 = vunpack.c.l.b16 %v901
        %v953 = vunpack.c.h.b16 %v901
        %v954 = vunpack.c.l.b16 %v902
        %v955 = vunpack.c.h.b16 %v902
        %v956 = vunpack.c.l.b16 %v903
        %v957 = vunpack.c.h.b16 %v903
        %v958 = vunpack.c.l.b16 %v904
        %v959 = vunpack.c.h.b16 %v904
        %v960 = vunpack.c.l.b16 %v905
        %v961 = vunpack.c.h.b16 %v905
        %v962 = vunpack.c.l.b16 %v906
        %v963 = vunpack.c.h.b16 %v906
        %v964 = vunpack.c.l.b16 %v907
        %v965 = vunpack.c.h.b16 %v907
        %v966 = vunpack.c.l.b16 %v908
        %v967 = vunpack.c.h.b16 %v908
        %v968 = vunpack.c.l.b16 %v909
        %v969 = vunpack.c.h.b16 %v909
        %v970 = vpack.c.b16 %v940, %v938
        %v971 = vpack.c.b16 %v941, %v939
        %v972 = vpack.c.b16 %v944, %v942
        %v973 = vpack.c.b16 %v945, %v943
        %v974 = vpack.c.b16 %v948, %v946
        %v975 = vpack.c.b16 %v949, %v947
        %v976 = vpack.c.b16 %v952, %v950
        %v977 = vpack.c.b16 %v953, %v951
        %v978 = vpack.c.b16 %v956, %v954
        %v979 = vpack.c.b16 %v957, %v955
        %v980 = vpack.c.b16 %v960, %v958
        %v981 = vpack.c.b16 %v961, %v959
        %v982 = vpack.c.b16 %v964, %v962
        %v983 = vpack.c.b16 %v965, %v963
        %v984 = vpack.c.b16 %v968, %v966
        %v985 = vpack.c.b16 %v969, %v967
        %1002 = vmatprep.subr.bf16.mxu0 %v971
        %1003 = vmatpush1.bf16.msra.mxu0 %v970
        %1004 = vmatprep.subr.bf16.mxu0 %v973
        %1005 = vmatpush1.bf16.msra.mxu0 %v972
        %1006 = vmatprep.subr.bf16.mxu0 %v975
        %1007 = vmatpush1.bf16.msra.mxu0 %v974
        %1008 = vmatprep.subr.bf16.mxu0 %v977
        %1009 = vmatpush1.bf16.msra.mxu0 %v976
        %1010 = vmatprep.subr.bf16.mxu0 %v979
        %1011 = vmatpush1.bf16.msra.mxu0 %v978
        %1012 = vmatprep.subr.bf16.mxu0 %v981
        %1013 = vmatpush1.bf16.msra.mxu0 %v980
        %1014 = vmatprep.subr.bf16.mxu0 %v983
        %1015 = vmatpush1.bf16.msra.mxu0 %v982
        %1016 = vmatprep.subr.bf16.mxu0 %v985
        %1017 = vmatpush1.bf16.msra.mxu0 %v984
        %1018 = vmatprep.subr.bf16.mxu0 0
        %1019 = vmatpush1.bf16.msra.mxu0 0
        %1020 = vmatprep.subr.bf16.mxu0 0
        %1021 = vmatpush1.bf16.msra.mxu0 0
        %1022 = vmatprep.subr.bf16.mxu0 0
        %1023 = vmatpush1.bf16.msra.mxu0 0
        %1024 = vmatprep.subr.bf16.mxu0 0
        %1025 = vmatpush1.bf16.msra.mxu0 0
        %1026 = vmatprep.subr.bf16.mxu0 0
        %1027 = vmatpush1.bf16.msra.mxu0 0
        %1028 = vmatprep.subr.bf16.mxu0 0
        %1029 = vmatpush1.bf16.msra.mxu0 0
        %1030 = vmatprep.subr.bf16.mxu0 0
        %1031 = vmatpush1.bf16.msra.mxu0 0
        %1032 = vmatprep.subr.bf16.mxu0 0
        %1033 = vmatpush1.bf16.msra.mxu0 0
        %1034 = vmatprep.mubr.bf16.mxu0 0
        %1035 = vmatmul.mubr.bf16.gmra.mrb[0].mxu0 %v893
        %v1036 = vpop.f32.mrb[0].mxu0
        %v1037 = vadd.f32 %v915, %v1036
        %v1038 = vpop.f32.mrb[0].mxu0
        %v1039 = vadd.f32 %v919, %v1038
        %v1040 = vpop.f32.mrb[0].mxu0
        %v1041 = vadd.f32 %v915, %v1040
        %v1042 = vpop.f32.mrb[0].mxu0
        %v1043 = vadd.f32 %v919, %v1042
        %1044 = vdwg.mxu0
        %1045 = vst [vmem:[%s650] sm:$0xff] %v1037
        %1046 = vst [vmem:[%s650 + $0x8] sm:$0xff] %v1039
        %1047 = vst [vmem:[%s650 + $0x10] sm:$0xff] %v1041
        %1048 = vst [vmem:[%s650 + $0x18] sm:$0xff] %v1043
        %v1049 = vld [vmem:[%s570] sm:$0xff]
        %v1050 = vld [vmem:[%s570 + $0x8] sm:$0xff]
        %v1051 = vmul.f32 %v1039, 0.5
        %v1052 = vmul.f32 %v1043, 0.5
        %v1053 = vmul.f32 %v1051, 1.442695
        %v1054 = vpow.pop %v1053
        %v1055 = vmul.f32 %v1052, 1.442695
        %v1056 = vpow.pop %v1055
        %v1057 = vmul.f32 %v1049, %v1054
        %v1058 = vmul.f32 %v1050, %v1056
        %v1059 = vadd.f32 %v1037, %v1057
        %v1060 = vadd.f32 %v1041, %v1058
        %v1061 = vpack.c.bf16 %v1060, %v1059
        %v1062 = vld [vmem:[#allocation11] sm:$0xf]
        %v1063 = vld [vmem:[#allocation11 + $0x4] sm:$0xf]
        %v1064 = vld [vmem:[#allocation11 + $0x8] sm:$0xf]
        %v1065 = vld [vmem:[#allocation11 + $0xc] sm:$0xf]
        %v1066 = vld [vmem:[#allocation11 + $0x10] sm:$0xf]
        %v1067 = vld [vmem:[#allocation11 + $0x14] sm:$0xf]
        %v1068 = vld [vmem:[#allocation11 + $0x18] sm:$0xf]
        %v1069 = vld [vmem:[#allocation11 + $0x1c] sm:$0xf]
        %v1070 = vld [vmem:[#allocation11 + $0x20] sm:$0xf]
        %v1071 = vld [vmem:[#allocation11 + $0x24] sm:$0xf]
        %v1072 = vld [vmem:[#allocation11 + $0x28] sm:$0xf]
        %v1073 = vld [vmem:[#allocation11 + $0x2c] sm:$0xf]
        %v1074 = vld [vmem:[#allocation11 + $0x30] sm:$0xf]
        %v1075 = vld [vmem:[#allocation11 + $0x34] sm:$0xf]
        %v1076 = vld [vmem:[#allocation11 + $0x38] sm:$0xf]
        %v1077 = vld [vmem:[#allocation11 + $0x3c] sm:$0xf]
        %v1078 = vld [vmem:[%s9] sm:$0x1]
        %v1080 = vlaneseq
        %v1081 = vshrl.u32 %v1080, 7
        %v1082 = vsub.s32 0, %v1081
        %v1083 = vrot.slane %v1078, %v1082
        %v1101 = vunpack.c.l.b16 %v1062
        %v1102 = vunpack.c.l.b16 %v1063
        %v1103 = vunpack.c.l.b16 %v1064
        %v1104 = vunpack.c.l.b16 %v1065
        %v1105 = vunpack.c.l.b16 %v1066
        %v1106 = vunpack.c.l.b16 %v1067
        %v1107 = vunpack.c.l.b16 %v1068
        %v1108 = vunpack.c.l.b16 %v1069
        %v1109 = vunpack.c.l.b16 %v1070
        %v1110 = vunpack.c.l.b16 %v1071
        %v1111 = vunpack.c.l.b16 %v1072
        %v1112 = vunpack.c.l.b16 %v1073
        %v1113 = vunpack.c.l.b16 %v1074
        %v1114 = vunpack.c.l.b16 %v1075
        %v1115 = vunpack.c.l.b16 %v1076
        %v1116 = vunpack.c.l.b16 %v1077
        %v1117 = vpack.c.b16 %v1102, %v1101
        %v1118 = vpack.c.b16 %v1104, %v1103
        %v1119 = vpack.c.b16 %v1106, %v1105
        %v1120 = vpack.c.b16 %v1108, %v1107
        %v1121 = vpack.c.b16 %v1110, %v1109
        %v1122 = vpack.c.b16 %v1112, %v1111
        %v1123 = vpack.c.b16 %v1114, %v1113
        %v1124 = vpack.c.b16 %v1116, %v1115
        %1133 = vmatprep.subr.bf16.mxu0 0
        %1134 = vmatpush1.bf16.msra.mxu0 %v1117
        %1135 = vmatprep.subr.bf16.mxu0 0
        %1136 = vmatpush1.bf16.msra.mxu0 %v1118
        %1137 = vmatprep.subr.bf16.mxu0 0
        %1138 = vmatpush1.bf16.msra.mxu0 %v1119
        %1139 = vmatprep.subr.bf16.mxu0 0
        %1140 = vmatpush1.bf16.msra.mxu0 %v1120
        %1141 = vmatprep.subr.bf16.mxu0 0
        %1142 = vmatpush1.bf16.msra.mxu0 %v1121
        %1143 = vmatprep.subr.bf16.mxu0 0
        %1144 = vmatpush1.bf16.msra.mxu0 %v1122
        %1145 = vmatprep.subr.bf16.mxu0 0
        %1146 = vmatpush1.bf16.msra.mxu0 %v1123
        %1147 = vmatprep.subr.bf16.mxu0 0
        %1148 = vmatpush1.bf16.msra.mxu0 %v1124
        %1149 = vmatprep.subr.bf16.mxu0 0
        %1150 = vmatpush1.bf16.msra.mxu0 0
        %1151 = vmatprep.subr.bf16.mxu0 0
        %1152 = vmatpush1.bf16.msra.mxu0 0
        %1153 = vmatprep.subr.bf16.mxu0 0
        %1154 = vmatpush1.bf16.msra.mxu0 0
        %1155 = vmatprep.subr.bf16.mxu0 0
        %1156 = vmatpush1.bf16.msra.mxu0 0
        %1157 = vmatprep.subr.bf16.mxu0 0
        %1158 = vmatpush1.bf16.msra.mxu0 0
        %1159 = vmatprep.subr.bf16.mxu0 0
        %1160 = vmatpush1.bf16.msra.mxu0 0
        %1161 = vmatprep.subr.bf16.mxu0 0
        %1162 = vmatpush1.bf16.msra.mxu0 0
        %1163 = vmatprep.subr.bf16.mxu0 0
        %1164 = vmatpush1.bf16.msra.mxu0 0
        %1165 = vmatprep.mubr.bf16.mxu0 0
        %1166 = vmatmul.mubr.bf16.gmra.mrb[0].mxu0 %v1061
        %v1167 = vpop.f32.mrb[0].mxu0
        %v1168 = vadd.f32 %v1083, %v1167
        %v1169 = vpop.f32.mrb[0].mxu0
        %v1170 = vpop.f32.mrb[0].mxu0
        %v1171 = vadd.f32 %v1083, %v1170
        %v1172 = vpop.f32.mrb[0].mxu0
        %1173 = vdwg.mxu0
        %v1174 = vmax.f32 %v1168, 0.0
        %v1175 = vmax.f32 %v1171, 0.0
        %v1176 = vand.u32 2147483647, %v1168
        %v1177 = vand.u32 2147483647, %v1171
        %v1178 = vsub.f32 0.0, %v1176
        %v1179 = vsub.f32 0.0, %v1177
        %v1180 = vmul.f32 %v1178, 1.442695
        %v1181 = vpow.pop %v1180
        %v1182 = vmul.f32 %v1179, 1.442695
        %v1183 = vpow.pop %v1182
        %v1184 = vadd.f32 %v1181, 1.0
        %v1185 = vlog2.pop %v1184
        %v1186 = vmul.f32 %v1185, 0.6931472
        %v1187 = vmul.f32 -0.5, %v1181
        %v1188 = vadd.f32 %v1187, 1.0
        %v1189 = vmul.f32 %v1188, %v1181
        %v1190 = vand.u32 2147483647, %v1181
        %vm1191 = vcmp.lt.f32.partialorder %v1190, 0.0004427343
        %v1192 = vsel %vm1191, %v1189, %v1186
        %v1193 = vadd.f32 %v1183, 1.0
        %v1194 = vlog2.pop %v1193
        %v1195 = vmul.f32 %v1194, 0.6931472
        %v1196 = vmul.f32 -0.5, %v1183
        %v1197 = vadd.f32 %v1196, 1.0
        %v1198 = vmul.f32 %v1197, %v1183
        %v1199 = vand.u32 2147483647, %v1183
        %vm1200 = vcmp.lt.f32.partialorder %v1199, 0.0004427343
        %v1201 = vsel %vm1200, %v1198, %v1195
        %v1202 = vadd.f32 %v1174, %v1192
        %v1203 = vadd.f32 %v1175, %v1201
        %v1204 = vpack.c.bf16 %v1203, %v1202
        %v1205 = vld [vmem:[#allocation13] sm:$0xf]
        %v1206 = vld [vmem:[#allocation13 + $0x4] sm:$0xf]
        %v1207 = vld [vmem:[#allocation13 + $0x8] sm:$0xf]
        %v1208 = vld [vmem:[#allocation13 + $0xc] sm:$0xf]
        %v1209 = vld [vmem:[#allocation13 + $0x10] sm:$0xf]
        %v1210 = vld [vmem:[#allocation13 + $0x14] sm:$0xf]
        %v1211 = vld [vmem:[#allocation13 + $0x18] sm:$0xf]
        %v1212 = vld [vmem:[#allocation13 + $0x1c] sm:$0xf]
        %v1213 = vld [vmem:[#allocation13 + $0x20] sm:$0xf]
        %v1214 = vld [vmem:[#allocation13 + $0x24] sm:$0xf]
        %v1215 = vld [vmem:[#allocation13 + $0x28] sm:$0xf]
        %v1216 = vld [vmem:[#allocation13 + $0x2c] sm:$0xf]
        %v1217 = vld [vmem:[#allocation13 + $0x30] sm:$0xf]
        %v1218 = vld [vmem:[#allocation13 + $0x34] sm:$0xf]
        %v1219 = vld [vmem:[#allocation13 + $0x38] sm:$0xf]
        %v1220 = vld [vmem:[#allocation13 + $0x3c] sm:$0xf]
        %v1221 = vld [vmem:[%s11] sm:$0x1]
        %v1223 = vlaneseq
        %v1224 = vshrl.u32 %v1223, 7
        %v1225 = vsub.s32 0, %v1224
        %v1226 = vrot.slane %v1221, %v1225
        %v1244 = vunpack.c.l.b16 %v1205
        %v1245 = vunpack.c.l.b16 %v1206
        %v1246 = vunpack.c.l.b16 %v1207
        %v1247 = vunpack.c.l.b16 %v1208
        %v1248 = vunpack.c.l.b16 %v1209
        %v1249 = vunpack.c.l.b16 %v1210
        %v1250 = vunpack.c.l.b16 %v1211
        %v1251 = vunpack.c.l.b16 %v1212
        %v1252 = vunpack.c.l.b16 %v1213
        %v1253 = vunpack.c.l.b16 %v1214
        %v1254 = vunpack.c.l.b16 %v1215
        %v1255 = vunpack.c.l.b16 %v1216
        %v1256 = vunpack.c.l.b16 %v1217
        %v1257 = vunpack.c.l.b16 %v1218
        %v1258 = vunpack.c.l.b16 %v1219
        %v1259 = vunpack.c.l.b16 %v1220
        %v1260 = vpack.c.b16 %v1245, %v1244
        %v1261 = vpack.c.b16 %v1247, %v1246
        %v1262 = vpack.c.b16 %v1249, %v1248
        %v1263 = vpack.c.b16 %v1251, %v1250
        %v1264 = vpack.c.b16 %v1253, %v1252
        %v1265 = vpack.c.b16 %v1255, %v1254
        %v1266 = vpack.c.b16 %v1257, %v1256
        %v1267 = vpack.c.b16 %v1259, %v1258
        %1276 = vmatprep.subr.bf16.mxu0 0
        %1277 = vmatpush1.bf16.msra.mxu0 %v1260
        %1278 = vmatprep.subr.bf16.mxu0 0
        %1279 = vmatpush1.bf16.msra.mxu0 %v1261
        %1280 = vmatprep.subr.bf16.mxu0 0
        %1281 = vmatpush1.bf16.msra.mxu0 %v1262
        %1282 = vmatprep.subr.bf16.mxu0 0
        %1283 = vmatpush1.bf16.msra.mxu0 %v1263
        %1284 = vmatprep.subr.bf16.mxu0 0
        %1285 = vmatpush1.bf16.msra.mxu0 %v1264
        %1286 = vmatprep.subr.bf16.mxu0 0
        %1287 = vmatpush1.bf16.msra.mxu0 %v1265
        %1288 = vmatprep.subr.bf16.mxu0 0
        %1289 = vmatpush1.bf16.msra.mxu0 %v1266
        %1290 = vmatprep.subr.bf16.mxu0 0
        %1291 = vmatpush1.bf16.msra.mxu0 %v1267
        %1292 = vmatprep.subr.bf16.mxu0 0
        %1293 = vmatpush1.bf16.msra.mxu0 0
        %1294 = vmatprep.subr.bf16.mxu0 0
        %1295 = vmatpush1.bf16.msra.mxu0 0
        %1296 = vmatprep.subr.bf16.mxu0 0
        %1297 = vmatpush1.bf16.msra.mxu0 0
        %1298 = vmatprep.subr.bf16.mxu0 0
        %1299 = vmatpush1.bf16.msra.mxu0 0
        %1300 = vmatprep.subr.bf16.mxu0 0
        %1301 = vmatpush1.bf16.msra.mxu0 0
        %1302 = vmatprep.subr.bf16.mxu0 0
        %1303 = vmatpush1.bf16.msra.mxu0 0
        %1304 = vmatprep.subr.bf16.mxu0 0
        %1305 = vmatpush1.bf16.msra.mxu0 0
        %1306 = vmatprep.subr.bf16.mxu0 0
        %1307 = vmatpush1.bf16.msra.mxu0 0
        %1308 = vmatprep.mubr.bf16.mxu0 0
        %1309 = vmatmul.mubr.bf16.gmra.mrb[0].mxu0 %v1204
        %v1310 = vpop.f32.mrb[0].mxu0
        %v1311 = vadd.f32 %v1226, %v1310
        %v1312 = vpop.f32.mrb[0].mxu0
        %v1313 = vpop.f32.mrb[0].mxu0
        %v1314 = vadd.f32 %v1226, %v1313
        %v1315 = vpop.f32.mrb[0].mxu0
        %1316 = vdwg.mxu0
        %v1317 = vmax.f32 %v1311, 0.0
        %v1318 = vmax.f32 %v1314, 0.0
        %v1319 = vand.u32 2147483647, %v1311
        %v1320 = vand.u32 2147483647, %v1314
        %v1321 = vsub.f32 0.0, %v1319
        %v1322 = vsub.f32 0.0, %v1320
        %v1323 = vmul.f32 %v1321, 1.442695
        %v1324 = vpow.pop %v1323
        %v1325 = vmul.f32 %v1322, 1.442695
        %v1326 = vpow.pop %v1325
        %v1327 = vadd.f32 %v1324, 1.0
        %v1328 = vlog2.pop %v1327
        %v1329 = vmul.f32 %v1328, 0.6931472
        %v1330 = vmul.f32 -0.5, %v1324
        %v1331 = vadd.f32 %v1330, 1.0
        %v1332 = vmul.f32 %v1331, %v1324
        %v1333 = vand.u32 2147483647, %v1324
        %vm1334 = vcmp.lt.f32.partialorder %v1333, 0.0004427343
        %v1335 = vsel %vm1334, %v1332, %v1329
        %v1336 = vadd.f32 %v1326, 1.0
        %v1337 = vlog2.pop %v1336
        %v1338 = vmul.f32 %v1337, 0.6931472
        %v1339 = vmul.f32 -0.5, %v1326
        %v1340 = vadd.f32 %v1339, 1.0
        %v1341 = vmul.f32 %v1340, %v1326
        %v1342 = vand.u32 2147483647, %v1326
        %vm1343 = vcmp.lt.f32.partialorder %v1342, 0.0004427343
        %v1344 = vsel %vm1343, %v1341, %v1338
        %v1345 = vadd.f32 %v1317, %v1335
        %v1346 = vadd.f32 %v1318, %v1344
        %v1347 = vpack.c.bf16 %v1346, %v1345
        %v1348 = vld [vmem:[#allocation14] sm:$0xf]
        %v1349 = vld [vmem:[#allocation14 + $0x4] sm:$0xf]
        %v1350 = vld [vmem:[#allocation14 + $0x8] sm:$0xf]
        %v1351 = vld [vmem:[#allocation14 + $0xc] sm:$0xf]
        %v1352 = vld [vmem:[#allocation14 + $0x10] sm:$0xf]
        %v1353 = vld [vmem:[#allocation14 + $0x14] sm:$0xf]
        %v1354 = vld [vmem:[#allocation14 + $0x18] sm:$0xf]
        %v1355 = vld [vmem:[#allocation14 + $0x1c] sm:$0xf]
        %v1356 = vld [vmem:[#allocation14 + $0x20] sm:$0xf]
        %v1357 = vld [vmem:[#allocation14 + $0x24] sm:$0xf]
        %v1358 = vld [vmem:[#allocation14 + $0x28] sm:$0xf]
        %v1359 = vld [vmem:[#allocation14 + $0x2c] sm:$0xf]
        %v1360 = vld [vmem:[#allocation14 + $0x30] sm:$0xf]
        %v1361 = vld [vmem:[#allocation14 + $0x34] sm:$0xf]
        %v1362 = vld [vmem:[#allocation14 + $0x38] sm:$0xf]
        %v1363 = vld [vmem:[#allocation14 + $0x3c] sm:$0xf]
        %v1364 = vld [vmem:[%s13] sm:$0x1]
        %v1366 = vlaneseq
        %v1367 = vshrl.u32 %v1366, 7
        %v1368 = vsub.s32 0, %v1367
        %v1369 = vrot.slane %v1364, %v1368
        %v1387 = vunpack.c.l.b16 %v1348
        %v1388 = vunpack.c.l.b16 %v1349
        %v1389 = vunpack.c.l.b16 %v1350
        %v1390 = vunpack.c.l.b16 %v1351
        %v1391 = vunpack.c.l.b16 %v1352
        %v1392 = vunpack.c.l.b16 %v1353
        %v1393 = vunpack.c.l.b16 %v1354
        %v1394 = vunpack.c.l.b16 %v1355
        %v1395 = vunpack.c.l.b16 %v1356
        %v1396 = vunpack.c.l.b16 %v1357
        %v1397 = vunpack.c.l.b16 %v1358
        %v1398 = vunpack.c.l.b16 %v1359
        %v1399 = vunpack.c.l.b16 %v1360
        %v1400 = vunpack.c.l.b16 %v1361
        %v1401 = vunpack.c.l.b16 %v1362
        %v1402 = vunpack.c.l.b16 %v1363
        %v1403 = vpack.c.b16 %v1388, %v1387
        %v1404 = vpack.c.b16 %v1390, %v1389
        %v1405 = vpack.c.b16 %v1392, %v1391
        %v1406 = vpack.c.b16 %v1394, %v1393
        %v1407 = vpack.c.b16 %v1396, %v1395
        %v1408 = vpack.c.b16 %v1398, %v1397
        %v1409 = vpack.c.b16 %v1400, %v1399
        %v1410 = vpack.c.b16 %v1402, %v1401
        %1419 = vmatprep.subr.bf16.mxu0 0
        %1420 = vmatpush1.bf16.msra.mxu0 %v1403
        %1421 = vmatprep.subr.bf16.mxu0 0
        %1422 = vmatpush1.bf16.msra.mxu0 %v1404
        %1423 = vmatprep.subr.bf16.mxu0 0
        %1424 = vmatpush1.bf16.msra.mxu0 %v1405
        %1425 = vmatprep.subr.bf16.mxu0 0
        %1426 = vmatpush1.bf16.msra.mxu0 %v1406
        %1427 = vmatprep.subr.bf16.mxu0 0
        %1428 = vmatpush1.bf16.msra.mxu0 %v1407
        %1429 = vmatprep.subr.bf16.mxu0 0
        %1430 = vmatpush1.bf16.msra.mxu0 %v1408
        %1431 = vmatprep.subr.bf16.mxu0 0
        %1432 = vmatpush1.bf16.msra.mxu0 %v1409
        %1433 = vmatprep.subr.bf16.mxu0 0
        %1434 = vmatpush1.bf16.msra.mxu0 %v1410
        %1435 = vmatprep.subr.bf16.mxu0 0
        %1436 = vmatpush1.bf16.msra.mxu0 0
        %1437 = vmatprep.subr.bf16.mxu0 0
        %1438 = vmatpush1.bf16.msra.mxu0 0
        %1439 = vmatprep.subr.bf16.mxu0 0
        %1440 = vmatpush1.bf16.msra.mxu0 0
        %1441 = vmatprep.subr.bf16.mxu0 0
        %1442 = vmatpush1.bf16.msra.mxu0 0
        %1443 = vmatprep.subr.bf16.mxu0 0
        %1444 = vmatpush1.bf16.msra.mxu0 0
        %1445 = vmatprep.subr.bf16.mxu0 0
        %1446 = vmatpush1.bf16.msra.mxu0 0
        %1447 = vmatprep.subr.bf16.mxu0 0
        %1448 = vmatpush1.bf16.msra.mxu0 0
        %1449 = vmatprep.subr.bf16.mxu0 0
        %1450 = vmatpush1.bf16.msra.mxu0 0
        %1451 = vmatprep.mubr.bf16.mxu0 0
        %1452 = vmatmul.mubr.bf16.gmra.mrb[0].mxu0 %v1347
        %v1453 = vpop.f32.mrb[0].mxu0
        %v1454 = vadd.f32 %v1369, %v1453
        %v1455 = vpop.f32.mrb[0].mxu0
        %v1456 = vpop.f32.mrb[0].mxu0
        %v1457 = vadd.f32 %v1369, %v1456
        %v1458 = vpop.f32.mrb[0].mxu0
        %1459 = vdwg.mxu0
        %1460 = vst [vmem:[%s643] sm:$0xff] %v1454
        %1461 = vst [vmem:[%s643 + $0x8] sm:$0xff] %v1457
        %s1462 = sand.u32 %s354, 1
        %s1463 = scalar_lea.sflag [#allocation4], %s1462
        %s1464 = sand.u32 %s354, 1
        %s1465 = smul.addr %s1464, 16
        %s1466 = scalar_lea.vmem [#allocation16], %s1465
        %s1467 = sand.u32 %s380, 1
        %s1468 = scalar_lea.sflag [#allocation18], %s1467
        %s1469 = sand.u32 %s380, 1
        %s1470 = smul.addr %s1469, 32
        %s1471 = scalar_lea.vmem [#allocation17], %s1470
        // Predicated region
        $region109: #{tpu_custom_call.1} parent=75 // pred_check
          %p1472 = pneg %p364
        $region110: #{tpu_custom_call.1} parent=75 // pred_check_branch
          %1474 = sbr.rel (%p1472) target = $region112
        $region111: #{tpu_custom_call.1} parent=75 // pred_region
          %s1475 = smul.u32 2, %s42
          %s1477 = ssub.s32 256, 256
          %1478 = vsyncadd %s1463, %s1477
          %s1479 = smul.addr %s1475, 128
          %s1480 = scalar_lea.hbm %s14, %s1479
          %s1481 = sshll.u32 %s1466, 4
          %s1482 = int_to_ptr.vmem [resolvable:$true] %s1481
          %1487 = dma.vmem_to_hbm [thread:$0]  %s1482, 256, %s1480, %s1463, 128, 128, 8
        $region112: #{tpu_custom_call.1} parent=75 // pred_fallthru
          _
        // Predicated region
        $region113: #{tpu_custom_call.1} parent=75 // pred_check
          %p1488 = pneg %p390
        $region114: #{tpu_custom_call.1} parent=75 // pred_check_branch
          %1490 = sbr.rel (%p1488) target = $region116
        $region115: #{tpu_custom_call.1} parent=75 // pred_region
          %s1491 = smul.u32 2, %s42
          %s1493 = ssub.s32 512, 512
          %1494 = vsyncadd %s1468, %s1493
          %s1495 = smul.addr %s1491, 2
          %s1496 = smul.addr %s1495, 128
          %s1497 = scalar_lea.hbm %s15, %s1496
          %s1498 = sshll.u32 %s1471, 4
          %s1499 = int_to_ptr.vmem [resolvable:$true] %s1498
          %1504 = dma.vmem_to_hbm [thread:$0]  %s1499, 512, %s1497, %s1468, 256, 256, 16
        $region116: #{tpu_custom_call.1} parent=75 // pred_fallthru
          _
      $region76: #{tpu_custom_call.1} parent=5 // pred_fallthru
        _
      %p1505 = scmp.le.s32.totalorder 2, %s37
      // Predicated region
      $region117: #{tpu_custom_call.1} parent=5 // pred_check
        %p1506 = pneg %p1505
      $region118: #{tpu_custom_call.1} parent=5 // pred_check_branch
        %1508 = sbr.rel (%p1506) target = $region120
      $region119: #{tpu_custom_call.1} parent=5 // pred_region
        %s1509 = ssub.s32 %s37, 2
        // Predicated region
        $region121: #{tpu_custom_call.1} parent=119 // pred_check
          %p1510 = pneg %p370
        $region122: #{tpu_custom_call.1} parent=119 // pred_check_branch
          %1512 = sbr.rel (%p1510) target = $region124
        $region123: #{tpu_custom_call.1} parent=119 // pred_region
          %s1513 = sand.u32 %s355, 1
          %s1514 = scalar_lea.sflag [#allocation4], %s1513
          %s1515 = sand.u32 %s355, 1
          %s1516 = smul.addr %s1515, 16
          %s1517 = scalar_lea.vmem [#allocation16], %s1516
          %1518 = dma.done %s1514, 256
        $region124: #{tpu_custom_call.1} parent=119 // pred_fallthru
          _
        // Predicated region
        $region125: #{tpu_custom_call.1} parent=119 // pred_check
          %p1519 = pneg %p396
        $region126: #{tpu_custom_call.1} parent=119 // pred_check_branch
          %1521 = sbr.rel (%p1519) target = $region128
        $region127: #{tpu_custom_call.1} parent=119 // pred_region
          %s1522 = sand.u32 %s381, 1
          %s1523 = scalar_lea.sflag [#allocation18], %s1522
          %s1524 = sand.u32 %s381, 1
          %s1525 = smul.addr %s1524, 32
          %s1526 = scalar_lea.vmem [#allocation17], %s1525
          %1527 = dma.done %s1523, 512
        $region128: #{tpu_custom_call.1} parent=119 // pred_fallthru
          _
      $region120: #{tpu_custom_call.1} parent=5 // pred_fallthru
        _
    $region6: #{tpu_custom_call.1} parent=1 // loop_footer
      %s41 = sadd.s32 1, %s37
    $region7: #{tpu_custom_call.1} parent=1 // loop_footer_branch
      %36 = sbr.rel target = $region3
    $region8: #{tpu_custom_call.1} parent=1 // loop_exit
      _
    %1528 = vsyncpa [#allocation3], 1
    %s1529 = scalar_lea.sflag [#allocation3], 1
    %1530 = vsyncpa %s1529, 1
    %1531 = vsyncpa [#allocation6], 1
    %s1532 = scalar_lea.sflag [#allocation6], 1
    %1533 = vsyncpa %s1532, 1
    %1534 = vsyncpa [#allocation9], 1
    %1535 = vsyncpa [#allocation12], 1
    %1536 = vsyncpa [#allocation15], 1
    %1537 = vsyncpa [#allocation4], 1
    %s1538 = scalar_lea.sflag [#allocation4], 1
    %1539 = vsyncpa %s1538, 1
    %1540 = vsyncpa [#allocation18], 1
    %s1541 = scalar_lea.sflag [#allocation18], 1
    %1542 = vsyncpa %s1541, 1

// kernel: tpu_custom_call.1
$region0: #{tpu_custom_call.1}
  #allocation0 [shape = 'u32[]', space=smem, size = 0x4, offset = 0x4, fixed_abs, tag = 'smem constant byte address 0x4 - core index']
  #allocation1 [shape = 'u32[144,128]{1,0:T(1,128)}', space=vmem, size = 0x12000, scoped, tag = 'internal scratch']
  %s0 = inlined_call_operand.hbm [shape: bf16[32,128], index: 0, kind: input, shape index: {}]
  %s1 = inlined_call_operand.hbm [shape: f32[32,128], index: 1, kind: input, shape index: {}]
  %s2 = inlined_call_operand.hbm [shape: bf16[128,128], index: 2, kind: input, shape index: {}]
  %s3 = inlined_call_operand.vmem [shape: f32[1,128], index: 3, kind: input, shape index: {}]
  %s4 = inlined_call_operand.hbm [shape: bf16[128,128], index: 4, kind: input, shape index: {}]
  %s5 = inlined_call_operand.vmem [shape: f32[1,128], index: 5, kind: input, shape index: {}]
  %s6 = inlined_call_operand.hbm [shape: bf16[128,256], index: 6, kind: input, shape index: {}]
  %s7 = inlined_call_operand.vmem [shape: f32[1,256], index: 7, kind: input, shape index: {}]
  %s8 = inlined_call_operand.hbm [shape: bf16[128,128], index: 8, kind: input, shape index: {}]
  %s9 = inlined_call_operand.vmem [shape: f32[1,128], index: 9, kind: input, shape index: {}]
  %s10 = inlined_call_operand.hbm [shape: bf16[128,128], index: 10, kind: input, shape index: {}]
  %s11 = inlined_call_operand.vmem [shape: f32[1,128], index: 11, kind: input, shape index: {}]
  %s12 = inlined_call_operand.hbm [shape: bf16[128,128], index: 12, kind: input, shape index: {}]
  %s13 = inlined_call_operand.vmem [shape: f32[1,128], index: 13, kind: input, shape index: {}]
  %s14 = inlined_call_operand.hbm [shape: f32[32,128], index: 14, kind: output, shape index: {0}]
  %s15 = inlined_call_operand.hbm [shape: f32[32,256], index: 15, kind: output, shape index: {1}]
  %16 = xla_tuple %s14, %s15
  %s17 = sld [smem:[#allocation0]]
  $region129: #{tpu_custom_call.1} parent=0
    _
  %s19 = ssub.s32 1, %s17
  %s20 = scalar_select 0, %s19, %s17
  $region1: #{tpu_custom_call.1} parent=0
    #allocation2 [shape = 'u8[8192]{0}', space=vmem, size = 0x2000, scoped, tag = 'input window, operand 0']
    #allocation3 [shape = 's32[2]{0}', space=sflag, size = 0x8, scoped, tag = 'scoped memory for tpu_custom_call.1']
    #allocation4 [shape = 's32[2]{0}', space=sflag, size = 0x8, scoped, tag = 'scoped memory for tpu_custom_call.1']
    #allocation5 [shape = 'u8[16384]{0}', space=vmem, size = 0x4000, scoped, tag = 'input window, operand 1']
    #allocation6 [shape = 's32[2]{0}', space=sflag, size = 0x8, scoped, tag = 'scoped memory for tpu_custom_call.1']
    #allocation7 [shape = 'u8[32768]{0}', space=vmem, size = 0x8000, scoped, tag = 'input window, operand 2, single buffered']
    #allocation8 [shape = 'u8[32768]{0}', space=vmem, size = 0x8000, scoped, tag = 'input window, operand 4, single buffered']
    #allocation9 [shape = 's32[1]{0}', space=sflag, size = 0x4, scoped, tag = 'scoped memory for tpu_custom_call.1']
    #allocation10 [shape = 'u8[65536]{0}', space=vmem, size = 0x10000, scoped, tag = 'input window, operand 6, single buffered']
    #allocation11 [shape = 'u8[32768]{0}', space=vmem, size = 0x8000, scoped, tag = 'input window, operand 8, single buffered']
    #allocation12 [shape = 's32[1]{0}', space=sflag, size = 0x4, scoped, tag = 'scoped memory for tpu_custom_call.1']
    #allocation13 [shape = 'u8[32768]{0}', space=vmem, size = 0x8000, scoped, tag = 'input window, operand 10, single buffered']
    #allocation14 [shape = 'u8[32768]{0}', space=vmem, size = 0x8000, scoped, tag = 'input window, operand 12, single buffered']
    #allocation15 [shape = 's32[1]{0}', space=sflag, size = 0x4, scoped, tag = 'scoped memory for tpu_custom_call.1']
    #allocation16 [shape = 'u8[16384]{0}', space=vmem, size = 0x4000, scoped, tag = 'output window, operand 0']
    #allocation17 [shape = 'u8[32768]{0}', space=vmem, size = 0x8000, scoped, tag = 'output window, operand 1']
    #allocation18 [shape = 's32[2]{0}', space=sflag, size = 0x8, scoped, tag = 'scoped memory for tpu_custom_call.1']
    %21 = vsyncpa [#allocation3], 0
    %s22 = scalar_lea.sflag [#allocation3], 1
    %23 = vsyncpa %s22, 0
    %24 = vsyncpa [#allocation6], 0
    %s25 = scalar_lea.sflag [#allocation6], 1
    %26 = vsyncpa %s25, 0
    %27 = vsyncpa [#allocation9], 0
    %28 = vsyncpa [#allocation12], 0
    %29 = vsyncpa [#allocation15], 0
    %30 = vsyncpa [#allocation4], 0
    %s31 = scalar_lea.sflag [#allocation4], 1
    %32 = vsyncpa %s31, 0
    %33 = vsyncpa [#allocation18], 0
    %s34 = scalar_lea.sflag [#allocation18], 1
    %35 = vsyncpa %s34, 0
    loop: start=0, step=1, limit=4
    $region2: #{tpu_custom_call.1} parent=1 // loop_pre_header
      _
    $region3: #{tpu_custom_call.1} parent=1 // loop_header
      %s37 = sphi 0, %s41
      %p38 = scmp.ge.s32.totalorder %s37, 4
      %s47 = sphi 0, %s49
      %s50 = sphi 0, %s47
      %s51 = sphi 0, %s50
      %s67 = sphi 0, %s51
      %s73 = sphi 0, %s75
      %s76 = sphi 0, %s73
      %s77 = sphi 0, %s76
      %s93 = sphi 0, %s77
      %s97 = sphi 0, %s97
      %s99 = sphi 0, %s97
      %s100 = sphi 0, %s99
      %s114 = sphi 0, %s100
      %s118 = sphi 0, %s118
      %s120 = sphi 0, %s118
      %s121 = sphi 0, %s120
      %s135 = sphi 0, %s121
      %s139 = sphi 0, %s139
      %s141 = sphi 0, %s139
      %s142 = sphi 0, %s141
      %s156 = sphi 0, %s142
      %s160 = sphi 0, %s160
      %s162 = sphi 0, %s160
      %s163 = sphi 0, %s162
      %s177 = sphi 0, %s163
      %s181 = sphi 0, %s181
      %s183 = sphi 0, %s181
      %s184 = sphi 0, %s183
      %s198 = sphi 0, %s184
      %s202 = sphi 0, %s202
      %s204 = sphi 0, %s202
      %s205 = sphi 0, %s204
      %s219 = sphi 0, %s205
      %s223 = sphi 0, %s223
      %s225 = sphi 0, %s223
      %s226 = sphi 0, %s225
      %s240 = sphi 0, %s226
      %s244 = sphi 0, %s244
      %s246 = sphi 0, %s244
      %s247 = sphi 0, %s246
      %s261 = sphi 0, %s247
      %s265 = sphi 0, %s265
      %s267 = sphi 0, %s265
      %s268 = sphi 0, %s267
      %s282 = sphi 0, %s268
      %s286 = sphi 0, %s286
      %s288 = sphi 0, %s286
      %s289 = sphi 0, %s288
      %s303 = sphi 0, %s289
      %s307 = sphi 0, %s307
      %s309 = sphi 0, %s307
      %s310 = sphi 0, %s309
      %s324 = sphi 0, %s310
      %s328 = sphi 0, %s328
      %s330 = sphi 0, %s328
      %s331 = sphi 0, %s330
      %s345 = sphi 0, %s331
      %s351 = sphi 0, %s353
      %s354 = sphi 0, %s351
      %s355 = sphi 0, %s354
      %s371 = sphi 0, %s355
      %s377 = sphi 0, %s379
      %s380 = sphi 0, %s377
      %s381 = sphi 0, %s380
      %s397 = sphi 0, %s381
    $region4: #{tpu_custom_call.1} parent=1 // loop_header_branch
      %40 = sbr.rel (%p38) target = $region8
    $region5: #{tpu_custom_call.1} parent=1 // loop_body
      %s42 = ssub.s32 %s37, 1
      %s43 = ssub.s32 %s37, 2
      %s44 = sadd.s32 %s37, 1
      %s45 = ssub.s32 %s37, %s44
      %p46 = scmp.eq.s32.totalorder %s45, 0
      %s48 = sadd.s32 %s47, 1
      %s49 = scalar_select %p46, %s47, %s48
      %p52 = pneg %p46
      %p53 = scmp.eq.s32.totalorder %s37, 1
      %p54 = por %p52, %p53
      %p55 = scmp.ne.s32.totalorder %s47, %s50
      %p56 = scmp.eq.s32.totalorder %s37, 0
      %p57 = por %p55, %p56
      %p58 = scmp.ne.s32.totalorder %s47, %s50
      %p59 = scmp.eq.s32.totalorder %s42, 1
      %p60 = por %p58, %p59
      %p61 = scmp.ne.s32.totalorder %s50, %s51
      %p62 = scmp.eq.s32.totalorder %s42, 0
      %p63 = por %p61, %p62
      %p64 = scmp.ne.s32.totalorder %s50, %s51
      %p65 = scmp.eq.s32.totalorder %s43, 1
      %p66 = por %p64, %p65
      %p68 = scmp.ne.s32.totalorder %s51, %s67
      %p69 = scmp.eq.s32.totalorder %s43, 0
      %p70 = por %p68, %p69
      %s71 = ssub.s32 %s37, %s44
      %p72 = scmp.eq.s32.totalorder %s71, 0
      %s74 = sadd.s32 %s73, 1
      %s75 = scalar_select %p72, %s73, %s74
      %p78 = pneg %p72
      %p79 = scmp.eq.s32.totalorder %s37, 1
      %p80 = por %p78, %p79
      %p81 = scmp.ne.s32.totalorder %s73, %s76
      %p82 = scmp.eq.s32.totalorder %s37, 0
      %p83 = por %p81, %p82
      %p84 = scmp.ne.s32.totalorder %s73, %s76
      %p85 = scmp.eq.s32.totalorder %s42, 1
      %p86 = por %p84, %p85
      %p87 = scmp.ne.s32.totalorder %s76, %s77
      %p88 = scmp.eq.s32.totalorder %s42, 0
      %p89 = por %p87, %p88
      %p90 = scmp.ne.s32.totalorder %s76, %s77
      %p91 = scmp.eq.s32.totalorder %s43, 1
      %p92 = por %p90, %p91
      %p94 = scmp.ne.s32.totalorder %s77, %s93
      %p95 = scmp.eq.s32.totalorder %s43, 0
      %p96 = por %p94, %p95
      %s98 = sadd.s32 %s97, 1
      %p101 = scmp.eq.s32.totalorder %s37, 1
      %p102 = scmp.ne.s32.totalorder %s97, %s99
      %p103 = scmp.eq.s32.totalorder %s37, 0
      %p104 = por %p102, %p103
      %p105 = scmp.ne.s32.totalorder %s97, %s99
      %p106 = scmp.eq.s32.totalorder %s42, 1
      %p107 = por %p105, %p106
      %p108 = scmp.ne.s32.totalorder %s99, %s100
      %p109 = scmp.eq.s32.totalorder %s42, 0
      %p110 = por %p108, %p109
      %p111 = scmp.ne.s32.totalorder %s99, %s100
      %p112 = scmp.eq.s32.totalorder %s43, 1
      %p113 = por %p111, %p112
      %p115 = scmp.ne.s32.totalorder %s100, %s114
      %p116 = scmp.eq.s32.totalorder %s43, 0
      %p117 = por %p115, %p116
      %s119 = sadd.s32 %s118, 1
      %p122 = scmp.eq.s32.totalorder %s37, 1
      %p123 = scmp.ne.s32.totalorder %s118, %s120
      %p124 = scmp.eq.s32.totalorder %s37, 0
      %p125 = por %p123, %p124
      %p126 = scmp.ne.s32.totalorder %s118, %s120
      %p127 = scmp.eq.s32.totalorder %s42, 1
      %p128 = por %p126, %p127
      %p129 = scmp.ne.s32.totalorder %s120, %s121
      %p130 = scmp.eq.s32.totalorder %s42, 0
      %p131 = por %p129, %p130
      %p132 = scmp.ne.s32.totalorder %s120, %s121
      %p133 = scmp.eq.s32.totalorder %s43, 1
      %p134 = por %p132, %p133
      %p136 = scmp.ne.s32.totalorder %s121, %s135
      %p137 = scmp.eq.s32.totalorder %s43, 0
      %p138 = por %p136, %p137
      %s140 = sadd.s32 %s139, 1
      %p143 = scmp.eq.s32.totalorder %s37, 1
      %p144 = scmp.ne.s32.totalorder %s139, %s141
      %p145 = scmp.eq.s32.totalorder %s37, 0
      %p146 = por %p144, %p145
      %p147 = scmp.ne.s32.totalorder %s139, %s141
      %p148 = scmp.eq.s32.totalorder %s42, 1
      %p149 = por %p147, %p148
      %p150 = scmp.ne.s32.totalorder %s141, %s142
      %p151 = scmp.eq.s32.totalorder %s42, 0
      %p152 = por %p150, %p151
      %p153 = scmp.ne.s32.totalorder %s141, %s142
      %p154 = scmp.eq.s32.totalorder %s43, 1
      %p155 = por %p153, %p154
      %p157 = scmp.ne.s32.totalorder %s142, %s156
      %p158 = scmp.eq.s32.totalorder %s43, 0
      %p159 = por %p157, %p158
      %s161 = sadd.s32 %s160, 1
      %p164 = scmp.eq.s32.totalorder %s37, 1
      %p165 = scmp.ne.s32.totalorder %s160, %s162
      %p166 = scmp.eq.s32.totalorder %s37, 0
      %p167 = por %p165, %p166
      %p168 = scmp.ne.s32.totalorder %s160, %s162
      %p169 = scmp.eq.s32.totalorder %s42, 1
      %p170 = por %p168, %p169
      %p171 = scmp.ne.s32.totalorder %s162, %s163
      %p172 = scmp.eq.s32.totalorder %s42, 0
      %p173 = por %p171, %p172
      %p174 = scmp.ne.s32.totalorder %s162, %s163
      %p175 = scmp.eq.s32.totalorder %s43, 1
      %p176 = por %p174, %p175
      %p178 = scmp.ne.s32.totalorder %s163, %s177
      %p179 = scmp.eq.s32.totalorder %s43, 0
      %p180 = por %p178, %p179
      %s182 = sadd.s32 %s181, 1
      %p185 = scmp.eq.s32.totalorder %s37, 1
      %p186 = scmp.ne.s32.totalorder %s181, %s183
      %p187 = scmp.eq.s32.totalorder %s37, 0
      %p188 = por %p186, %p187
      %p189 = scmp.ne.s32.totalorder %s181, %s183
      %p190 = scmp.eq.s32.totalorder %s42, 1
      %p191 = por %p189, %p190
      %p192 = scmp.ne.s32.totalorder %s183, %s184
      %p193 = scmp.eq.s32.totalorder %s42, 0
      %p194 = por %p192, %p193
      %p195 = scmp.ne.s32.totalorder %s183, %s184
      %p196 = scmp.eq.s32.totalorder %s43, 1
      %p197 = por %p195, %p196
      %p199 = scmp.ne.s32.totalorder %s184, %s198
      %p200 = scmp.eq.s32.totalorder %s43, 0
      %p201 = por %p199, %p200
      %s203 = sadd.s32 %s202, 1
      %p206 = scmp.eq.s32.totalorder %s37, 1
      %p207 = scmp.ne.s32.totalorder %s202, %s204
      %p208 = scmp.eq.s32.totalorder %s37, 0
      %p209 = por %p207, %p208
      %p210 = scmp.ne.s32.totalorder %s202, %s204
      %p211 = scmp.eq.s32.totalorder %s42, 1
      %p212 = por %p210, %p211
      %p213 = scmp.ne.s32.totalorder %s204, %s205
      %p214 = scmp.eq.s32.totalorder %s42, 0
      %p215 = por %p213, %p214
      %p216 = scmp.ne.s32.totalorder %s204, %s205
      %p217 = scmp.eq.s32.totalorder %s43, 1
      %p218 = por %p216, %p217
      %p220 = scmp.ne.s32.totalorder %s205, %s219
      %p221 = scmp.eq.s32.totalorder %s43, 0
      %p222 = por %p220, %p221
      %s224 = sadd.s32 %s223, 1
      %p227 = scmp.eq.s32.totalorder %s37, 1
      %p228 = scmp.ne.s32.totalorder %s223, %s225
      %p229 = scmp.eq.s32.totalorder %s37, 0
      %p230 = por %p228, %p229
      %p231 = scmp.ne.s32.totalorder %s223, %s225
      %p232 = scmp.eq.s32.totalorder %s42, 1
      %p233 = por %p231, %p232
      %p234 = scmp.ne.s32.totalorder %s225, %s226
      %p235 = scmp.eq.s32.totalorder %s42, 0
      %p236 = por %p234, %p235
      %p237 = scmp.ne.s32.totalorder %s225, %s226
      %p238 = scmp.eq.s32.totalorder %s43, 1
      %p239 = por %p237, %p238
      %p241 = scmp.ne.s32.totalorder %s226, %s240
      %p242 = scmp.eq.s32.totalorder %s43, 0
      %p243 = por %p241, %p242
      %s245 = sadd.s32 %s244, 1
      %p248 = scmp.eq.s32.totalorder %s37, 1
      %p249 = scmp.ne.s32.totalorder %s244, %s246
      %p250 = scmp.eq.s32.totalorder %s37, 0
      %p251 = por %p249, %p250
      %p252 = scmp.ne.s32.totalorder %s244, %s246
      %p253 = scmp.eq.s32.totalorder %s42, 1
      %p254 = por %p252, %p253
      %p255 = scmp.ne.s32.totalorder %s246, %s247
      %p256 = scmp.eq.s32.totalorder %s42, 0
      %p257 = por %p255, %p256
      %p258 = scmp.ne.s32.totalorder %s246, %s247
      %p259 = scmp.eq.s32.totalorder %s43, 1
      %p260 = por %p258, %p259
      %p262 = scmp.ne.s32.totalorder %s247, %s261
      %p263 = scmp.eq.s32.totalorder %s43, 0
      %p264 = por %p262, %p263
      %s266 = sadd.s32 %s265, 1
      %p269 = scmp.eq.s32.totalorder %s37, 1
      %p270 = scmp.ne.s32.totalorder %s265, %s267
      %p271 = scmp.eq.s32.totalorder %s37, 0
      %p272 = por %p270, %p271
      %p273 = scmp.ne.s32.totalorder %s265, %s267
      %p274 = scmp.eq.s32.totalorder %s42, 1
      %p275 = por %p273, %p274
      %p276 = scmp.ne.s32.totalorder %s267, %s268
      %p277 = scmp.eq.s32.totalorder %s42, 0
      %p278 = por %p276, %p277
      %p279 = scmp.ne.s32.totalorder %s267, %s268
      %p280 = scmp.eq.s32.totalorder %s43, 1
      %p281 = por %p279, %p280
      %p283 = scmp.ne.s32.totalorder %s268, %s282
      %p284 = scmp.eq.s32.totalorder %s43, 0
      %p285 = por %p283, %p284
      %s287 = sadd.s32 %s286, 1
      %p290 = scmp.eq.s32.totalorder %s37, 1
      %p291 = scmp.ne.s32.totalorder %s286, %s288
      %p292 = scmp.eq.s32.totalorder %s37, 0
      %p293 = por %p291, %p292
      %p294 = scmp.ne.s32.totalorder %s286, %s288
      %p295 = scmp.eq.s32.totalorder %s42, 1
      %p296 = por %p294, %p295
      %p297 = scmp.ne.s32.totalorder %s288, %s289
      %p298 = scmp.eq.s32.totalorder %s42, 0
      %p299 = por %p297, %p298
      %p300 = scmp.ne.s32.totalorder %s288, %s289
      %p301 = scmp.eq.s32.totalorder %s43, 1
      %p302 = por %p300, %p301
      %p304 = scmp.ne.s32.totalorder %s289, %s303
      %p305 = scmp.eq.s32.totalorder %s43, 0
      %p306 = por %p304, %p305
      %s308 = sadd.s32 %s307, 1
      %p311 = scmp.eq.s32.totalorder %s37, 1
      %p312 = scmp.ne.s32.totalorder %s307, %s309
      %p313 = scmp.eq.s32.totalorder %s37, 0
      %p314 = por %p312, %p313
      %p315 = scmp.ne.s32.totalorder %s307, %s309
      %p316 = scmp.eq.s32.totalorder %s42, 1
      %p317 = por %p315, %p316
      %p318 = scmp.ne.s32.totalorder %s309, %s310
      %p319 = scmp.eq.s32.totalorder %s42, 0
      %p320 = por %p318, %p319
      %p321 = scmp.ne.s32.totalorder %s309, %s310
      %p322 = scmp.eq.s32.totalorder %s43, 1
      %p323 = por %p321, %p322
      %p325 = scmp.ne.s32.totalorder %s310, %s324
      %p326 = scmp.eq.s32.totalorder %s43, 0
      %p327 = por %p325, %p326
      %s329 = sadd.s32 %s328, 1
      %p332 = scmp.eq.s32.totalorder %s37, 1
      %p333 = scmp.ne.s32.totalorder %s328, %s330
      %p334 = scmp.eq.s32.totalorder %s37, 0
      %p335 = por %p333, %p334
      %p336 = scmp.ne.s32.totalorder %s328, %s330
      %p337 = scmp.eq.s32.totalorder %s42, 1
      %p338 = por %p336, %p337
      %p339 = scmp.ne.s32.totalorder %s330, %s331
      %p340 = scmp.eq.s32.totalorder %s42, 0
      %p341 = por %p339, %p340
      %p342 = scmp.ne.s32.totalorder %s330, %s331
      %p343 = scmp.eq.s32.totalorder %s43, 1
      %p344 = por %p342, %p343
      %p346 = scmp.ne.s32.totalorder %s331, %s345
      %p347 = scmp.eq.s32.totalorder %s43, 0
      %p348 = por %p346, %p347
      %s349 = ssub.s32 %s37, %s44
      %p350 = scmp.eq.s32.totalorder %s349, 0
      %s352 = sadd.s32 %s351, 1
      %s353 = scalar_select %p350, %s351, %s352
      %p356 = pneg %p350
      %p357 = scmp.eq.s32.totalorder %s37, 1
      %p358 = por %p356, %p357
      %p359 = scmp.ne.s32.totalorder %s351, %s354
      %p360 = scmp.eq.s32.totalorder %s37, 0
      %p361 = por %p359, %p360
      %p362 = scmp.ne.s32.totalorder %s351, %s354
      %p363 = scmp.eq.s32.totalorder %s42, 1
      %p364 = por %p362, %p363
      %p365 = scmp.ne.s32.totalorder %s354, %s355
      %p366 = scmp.eq.s32.totalorder %s42, 0
      %p367 = por %p365, %p366
      %p368 = scmp.ne.s32.totalorder %s354, %s355
      %p369 = scmp.eq.s32.totalorder %s43, 1
      %p370 = por %p368, %p369
      %p372 = scmp.ne.s32.totalorder %s355, %s371
      %p373 = scmp.eq.s32.totalorder %s43, 0
      %p374 = por %p372, %p373
      %s375 = ssub.s32 %s37, %s44
      %p376 = scmp.eq.s32.totalorder %s375, 0
      %s378 = sadd.s32 %s377, 1
      %s379 = scalar_select %p376, %s377, %s378
      %p382 = pneg %p376
      %p383 = scmp.eq.s32.totalorder %s37, 1
      %p384 = por %p382, %p383
      %p385 = scmp.ne.s32.totalorder %s377, %s380
      %p386 = scmp.eq.s32.totalorder %s37, 0
      %p387 = por %p385, %p386
      %p388 = scmp.ne.s32.totalorder %s377, %s380
      %p389 = scmp.eq.s32.totalorder %s42, 1
      %p390 = por %p388, %p389
      %p391 = scmp.ne.s32.totalorder %s380, %s381
      %p392 = scmp.eq.s32.totalorder %s42, 0
      %p393 = por %p391, %p392
      %p394 = scmp.ne.s32.totalorder %s380, %s381
      %p395 = scmp.eq.s32.totalorder %s43, 1
      %p396 = por %p394, %p395
      %p398 = scmp.ne.s32.totalorder %s381, %s397
      %p399 = scmp.eq.s32.totalorder %s43, 0
      %p400 = por %p398, %p399
      %p401 = scmp.le.s32.totalorder 1, %s37
      %p402 = scmp.lt.s32.totalorder %s37, 3
      %p403 = pnand %p401, %p402
      %p404 = pneg %p403
      // Predicated region
      $region9: #{tpu_custom_call.1} parent=5 // pred_check
        _
      $region10: #{tpu_custom_call.1} parent=5 // pred_check_branch
        %406 = sbr.rel (%p403) target = $region12
      $region11: #{tpu_custom_call.1} parent=5 // pred_region
        %s407 = ssub.s32 %s37, 1
        // Predicated region
        $region13: #{tpu_custom_call.1} parent=11 // pred_check
          %p408 = pneg %p110
        $region14: #{tpu_custom_call.1} parent=11 // pred_check_branch
          %410 = sbr.rel (%p408) target = $region16
        $region15: #{tpu_custom_call.1} parent=11 // pred_region
          %s412 = ssub.s32 1024, 1024
          %413 = vsyncadd [#allocation6], %s412
          %s414 = sshll.u32 [#allocation7], 4
          %s415 = int_to_ptr.vmem [resolvable:$true] %s414
          %420 = dma.hbm_to_vmem [thread:$0]  %s2, 1024, %s415, [#allocation6], 64, 64, 4
        $region16: #{tpu_custom_call.1} parent=11 // pred_fallthru
          _
        // Predicated region
        $region17: #{tpu_custom_call.1} parent=11 // pred_check
          %p421 = pneg %p131
        $region18: #{tpu_custom_call.1} parent=11 // pred_check_branch
          %423 = sbr.rel (%p421) target = $region20
        $region19: #{tpu_custom_call.1} parent=11 // pred_region
          _
        $region20: #{tpu_custom_call.1} parent=11 // pred_fallthru
          _
        // Predicated region
        $region21: #{tpu_custom_call.1} parent=11 // pred_check
          %p424 = pneg %p152
        $region22: #{tpu_custom_call.1} parent=11 // pred_check_branch
          %426 = sbr.rel (%p424) target = $region24
        $region23: #{tpu_custom_call.1} parent=11 // pred_region
          %s428 = ssub.s32 1024, 1024
          %429 = vsyncadd [#allocation9], %s428
          %s430 = sshll.u32 [#allocation8], 4
          %s431 = int_to_ptr.vmem [resolvable:$true] %s430
          %436 = dma.hbm_to_vmem [thread:$0]  %s4, 1024, %s431, [#allocation9], 64, 64, 4
        $region24: #{tpu_custom_call.1} parent=11 // pred_fallthru
          _
        // Predicated region
        $region25: #{tpu_custom_call.1} parent=11 // pred_check
          %p437 = pneg %p173
        $region26: #{tpu_custom_call.1} parent=11 // pred_check_branch
          %439 = sbr.rel (%p437) target = $region28
        $region27: #{tpu_custom_call.1} parent=11 // pred_region
          _
        $region28: #{tpu_custom_call.1} parent=11 // pred_fallthru
          _
        // Predicated region
        $region29: #{tpu_custom_call.1} parent=11 // pred_check
          %p440 = pneg %p194
        $region30: #{tpu_custom_call.1} parent=11 // pred_check_branch
          %442 = sbr.rel (%p440) target = $region32
        $region31: #{tpu_custom_call.1} parent=11 // pred_region
          %s444 = ssub.s32 2048, 2048
          %445 = vsyncadd [#allocation9], %s444
          %s446 = sshll.u32 [#allocation10], 4
          %s447 = int_to_ptr.vmem [resolvable:$true] %s446
          %452 = dma.hbm_to_vmem [thread:$0]  %s6, 2048, %s447, [#allocation9], 128, 128, 8
        $region32: #{tpu_custom_call.1} parent=11 // pred_fallthru
          _
        // Predicated region
        $region33: #{tpu_custom_call.1} parent=11 // pred_check
          %p453 = pneg %p215
        $region34: #{tpu_custom_call.1} parent=11 // pred_check_branch
          %455 = sbr.rel (%p453) target = $region36
        $region35: #{tpu_custom_call.1} parent=11 // pred_region
          _
        $region36: #{tpu_custom_call.1} parent=11 // pred_fallthru
          _
        // Predicated region
        $region37: #{tpu_custom_call.1} parent=11 // pred_check
          %p456 = pneg %p236
        $region38: #{tpu_custom_call.1} parent=11 // pred_check_branch
          %458 = sbr.rel (%p456) target = $region40
        $region39: #{tpu_custom_call.1} parent=11 // pred_region
          %s460 = ssub.s32 1024, 1024
          %461 = vsyncadd [#allocation12], %s460
          %s462 = sshll.u32 [#allocation11], 4
          %s463 = int_to_ptr.vmem [resolvable:$true] %s462
          %468 = dma.hbm_to_vmem [thread:$0]  %s8, 1024, %s463, [#allocation12], 64, 64, 4
        $region40: #{tpu_custom_call.1} parent=11 // pred_fallthru
          _
        // Predicated region
        $region41: #{tpu_custom_call.1} parent=11 // pred_check
          %p469 = pneg %p257
        $region42: #{tpu_custom_call.1} parent=11 // pred_check_branch
          %471 = sbr.rel (%p469) target = $region44
        $region43: #{tpu_custom_call.1} parent=11 // pred_region
          _
        $region44: #{tpu_custom_call.1} parent=11 // pred_fallthru
          _
        // Predicated region
        $region45: #{tpu_custom_call.1} parent=11 // pred_check
          %p472 = pneg %p278
        $region46: #{tpu_custom_call.1} parent=11 // pred_check_branch
          %474 = sbr.rel (%p472) target = $region48
        $region47: #{tpu_custom_call.1} parent=11 // pred_region
          %s476 = ssub.s32 1024, 1024
          %477 = vsyncadd [#allocation12], %s476
          %s478 = sshll.u32 [#allocation13], 4
          %s479 = int_to_ptr.vmem [resolvable:$true] %s478
          %484 = dma.hbm_to_vmem [thread:$0]  %s10, 1024, %s479, [#allocation12], 64, 64, 4
        $region48: #{tpu_custom_call.1} parent=11 // pred_fallthru
          _
        // Predicated region
        $region49: #{tpu_custom_call.1} parent=11 // pred_check
          %p485 = pneg %p299
        $region50: #{tpu_custom_call.1} parent=11 // pred_check_branch
          %487 = sbr.rel (%p485) target = $region52
        $region51: #{tpu_custom_call.1} parent=11 // pred_region
          _
        $region52: #{tpu_custom_call.1} parent=11 // pred_fallthru
          _
        // Predicated region
        $region53: #{tpu_custom_call.1} parent=11 // pred_check
          %p488 = pneg %p320
        $region54: #{tpu_custom_call.1} parent=11 // pred_check_branch
          %490 = sbr.rel (%p488) target = $region56
        $region55: #{tpu_custom_call.1} parent=11 // pred_region
          %s492 = ssub.s32 1024, 1024
          %493 = vsyncadd [#allocation15], %s492
          %s494 = sshll.u32 [#allocation14], 4
          %s495 = int_to_ptr.vmem [resolvable:$true] %s494
          %500 = dma.hbm_to_vmem [thread:$0]  %s12, 1024, %s495, [#allocation15], 64, 64, 4
        $region56: #{tpu_custom_call.1} parent=11 // pred_fallthru
          _
        // Predicated region
        $region57: #{tpu_custom_call.1} parent=11 // pred_check
          %p501 = pneg %p341
        $region58: #{tpu_custom_call.1} parent=11 // pred_check_branch
          %503 = sbr.rel (%p501) target = $region60
        $region59: #{tpu_custom_call.1} parent=11 // pred_region
          _
        $region60: #{tpu_custom_call.1} parent=11 // pred_fallthru
          _
      $region12: #{tpu_custom_call.1} parent=5 // pred_fallthru
        _
      %p504 = scmp.lt.s32.totalorder %s37, 2
      // Predicated region
      $region61: #{tpu_custom_call.1} parent=5 // pred_check
        %p505 = pneg %p504
      $region62: #{tpu_custom_call.1} parent=5 // pred_check_branch
        %507 = sbr.rel (%p505) target = $region64
      $region63: #{tpu_custom_call.1} parent=5 // pred_region
        // Predicated region
        $region65: #{tpu_custom_call.1} parent=63 // pred_check
          %p508 = pneg %p57
        $region66: #{tpu_custom_call.1} parent=63 // pred_check_branch
          %510 = sbr.rel (%p508) target = $region68
        $region67: #{tpu_custom_call.1} parent=63 // pred_region
          %s511 = sand.u32 %s47, 1
          %s512 = scalar_lea.sflag [#allocation3], %s511
          %s513 = sand.u32 %s47, 1
          %s514 = smul.addr %s513, 8
          %s515 = scalar_lea.vmem [#allocation2], %s514
          %s516 = smul.u32 2, %s37
          %s518 = ssub.s32 128, 128
          %519 = vsyncadd %s512, %s518
          %s520 = smul.addr %s516, 64
          %s521 = scalar_lea.hbm %s0, %s520
          %s522 = sshll.u32 %s515, 4
          %s523 = int_to_ptr.vmem [resolvable:$true] %s522
          %528 = dma.hbm_to_vmem [thread:$0]  %s521, 128, %s523, %s512, 64, 64, 4
        $region68: #{tpu_custom_call.1} parent=63 // pred_fallthru
          _
        // Predicated region
        $region69: #{tpu_custom_call.1} parent=63 // pred_check
          %p529 = pneg %p83
        $region70: #{tpu_custom_call.1} parent=63 // pred_check_branch
          %531 = sbr.rel (%p529) target = $region72
        $region71: #{tpu_custom_call.1} parent=63 // pred_region
          %s532 = sand.u32 %s37, 1
          %s533 = scalar_lea.sflag [#allocation6], %s532
          %s534 = sand.u32 %s73, 1
          %s535 = smul.addr %s534, 16
          %s536 = scalar_lea.vmem [#allocation5], %s535
          %s537 = smul.u32 2, %s37
          %s539 = ssub.s32 256, 256
          %540 = vsyncadd %s533, %s539
          %s541 = smul.addr %s537, 128
          %s542 = scalar_lea.hbm %s1, %s541
          %s543 = sshll.u32 %s536, 4
          %s544 = int_to_ptr.vmem [resolvable:$true] %s543
          %549 = dma.hbm_to_vmem [thread:$0]  %s542, 256, %s544, %s533, 128, 128, 8
        $region72: #{tpu_custom_call.1} parent=63 // pred_fallthru
          _
      $region64: #{tpu_custom_call.1} parent=5 // pred_fallthru
        _
      %p550 = scmp.le.s32.totalorder 1, %s37
      %p551 = scmp.lt.s32.totalorder %s37, 3
      %p552 = pnand %p550, %p551
      %p553 = pneg %p552
      // Predicated region
      $region73: #{tpu_custom_call.1} parent=5 // pred_check
        _
      $region74: #{tpu_custom_call.1} parent=5 // pred_check_branch
        %555 = sbr.rel (%p552) target = $region76
      $region75: #{tpu_custom_call.1} parent=5 // pred_region
        %s556 = ssub.s32 %s37, 1
        %s557 = sand.u32 %s50, 1
        %s558 = scalar_lea.sflag [#allocation3], %s557
        %s559 = sand.u32 %s50, 1
        %s560 = smul.addr %s559, 8
        %s561 = scalar_lea.vmem [#allocation2], %s560
        // Predicated region
        $region77: #{tpu_custom_call.1} parent=75 // pred_check
          %p562 = pneg %p63
        $region78: #{tpu_custom_call.1} parent=75 // pred_check_branch
          %564 = sbr.rel (%p562) target = $region80
        $region79: #{tpu_custom_call.1} parent=75 // pred_region
          %565 = dma.done %s558, 128
        $region80: #{tpu_custom_call.1} parent=75 // pred_fallthru
          _
        %s566 = sand.u32 %s42, 1
        %s567 = scalar_lea.sflag [#allocation6], %s566
        %s568 = sand.u32 %s76, 1
        %s569 = smul.addr %s568, 16
        %s570 = scalar_lea.vmem [#allocation5], %s569
        // Predicated region
        $region81: #{tpu_custom_call.1} parent=75 // pred_check
          %p571 = pneg %p89
        $region82: #{tpu_custom_call.1} parent=75 // pred_check_branch
          %573 = sbr.rel (%p571) target = $region84
        $region83: #{tpu_custom_call.1} parent=75 // pred_region
          %574 = dma.done %s567, 256
        $region84: #{tpu_custom_call.1} parent=75 // pred_fallthru
          _
        // Predicated region
        $region85: #{tpu_custom_call.1} parent=75 // pred_check
          %p575 = pneg %p110
        $region86: #{tpu_custom_call.1} parent=75 // pred_check_branch
          %577 = sbr.rel (%p575) target = $region88
        $region87: #{tpu_custom_call.1} parent=75 // pred_region
          %578 = dma.done [#allocation6], 1024
        $region88: #{tpu_custom_call.1} parent=75 // pred_fallthru
          _
        // Predicated region
        $region89: #{tpu_custom_call.1} parent=75 // pred_check
          %p579 = pneg %p152
        $region90: #{tpu_custom_call.1} parent=75 // pred_check_branch
          %581 = sbr.rel (%p579) target = $region92
        $region91: #{tpu_custom_call.1} parent=75 // pred_region
          %582 = dma.done [#allocation9], 1024
        $region92: #{tpu_custom_call.1} parent=75 // pred_fallthru
          _
        // Predicated region
        $region93: #{tpu_custom_call.1} parent=75 // pred_check
          %p583 = pneg %p194
        $region94: #{tpu_custom_call.1} parent=75 // pred_check_branch
          %585 = sbr.rel (%p583) target = $region96
        $region95: #{tpu_custom_call.1} parent=75 // pred_region
          %586 = dma.done [#allocation9], 2048
        $region96: #{tpu_custom_call.1} parent=75 // pred_fallthru
          _
        // Predicated region
        $region97: #{tpu_custom_call.1} parent=75 // pred_check
          %p587 = pneg %p236
        $region98: #{tpu_custom_call.1} parent=75 // pred_check_branch
          %589 = sbr.rel (%p587) target = $region100
        $region99: #{tpu_custom_call.1} parent=75 // pred_region
          %590 = dma.done [#allocation12], 1024
        $region100: #{tpu_custom_call.1} parent=75 // pred_fallthru
          _
        // Predicated region
        $region101: #{tpu_custom_call.1} parent=75 // pred_check
          %p591 = pneg %p278
        $region102: #{tpu_custom_call.1} parent=75 // pred_check_branch
          %593 = sbr.rel (%p591) target = $region104
        $region103: #{tpu_custom_call.1} parent=75 // pred_region
          %594 = dma.done [#allocation12], 1024
        $region104: #{tpu_custom_call.1} parent=75 // pred_fallthru
          _
        // Predicated region
        $region105: #{tpu_custom_call.1} parent=75 // pred_check
          %p595 = pneg %p320
        $region106: #{tpu_custom_call.1} parent=75 // pred_check_branch
          %597 = sbr.rel (%p595) target = $region108
        $region107: #{tpu_custom_call.1} parent=75 // pred_region
          %598 = dma.done [#allocation15], 1024
        $region108: #{tpu_custom_call.1} parent=75 // pred_fallthru
          _
        %s599 = sand.u32 %s50, 1
        %s600 = scalar_lea.sflag [#allocation3], %s599
        %s601 = sand.u32 %s50, 1
        %s602 = smul.addr %s601, 8
        %s603 = scalar_lea.vmem [#allocation2], %s602
        %p604 = pneg %p63
        %p605 = pneg %p60
        %s606 = sand.u32 %s42, 1
        %s607 = scalar_lea.sflag [#allocation6], %s606
        %s608 = sand.u32 %s76, 1
        %s609 = smul.addr %s608, 16
        %s610 = scalar_lea.vmem [#allocation5], %s609
        %p611 = pneg %p89
        %p612 = pneg %p86
        %p613 = pneg %p110
        %p614 = pneg %p107
        %p615 = pneg %p131
        %p616 = pneg %p128
        %p617 = pneg %p152
        %p618 = pneg %p149
        %p619 = pneg %p173
        %p620 = pneg %p170
        %p621 = pneg %p194
        %p622 = pneg %p191
        %p623 = pneg %p215
        %p624 = pneg %p212
        %p625 = pneg %p236
        %p626 = pneg %p233
        %p627 = pneg %p257
        %p628 = pneg %p254
        %p629 = pneg %p278
        %p630 = pneg %p275
        %p631 = pneg %p299
        %p632 = pneg %p296
        %p633 = pneg %p320
        %p634 = pneg %p317
        %p635 = pneg %p341
        %p636 = pneg %p338
        %p637 = pneg %p367
        %p638 = pneg %p364
        %s639 = sand.u32 %s354, 1
        %s640 = scalar_lea.sflag [#allocation4], %s639
        %s641 = sand.u32 %s354, 1
        %s642 = smul.addr %s641, 16
        %s643 = scalar_lea.vmem [#allocation16], %s642
        %p644 = pneg %p393
        %p645 = pneg %p390
        %s646 = sand.u32 %s380, 1
        %s647 = scalar_lea.sflag [#allocation18], %s646
        %s648 = sand.u32 %s380, 1
        %s649 = smul.addr %s648, 32
        %s650 = scalar_lea.vmem [#allocation17], %s649
        %s651 = smul.u32 2, %s42
        %s652 = smul.u32 2, %s42
        %s653 = smul.u32 2, %s42
        %s654 = smul.u32 2, %s42
        %v656 = vld [vmem:[%s561] sm:$0xf]
        %v657 = vld [vmem:[%s561 + $0x4] sm:$0xf]
        %v658 = vld [vmem:[#allocation7] sm:$0xf]
        %v659 = vld [vmem:[#allocation7 + $0x4] sm:$0xf]
        %v660 = vld [vmem:[#allocation7 + $0x8] sm:$0xf]
        %v661 = vld [vmem:[#allocation7 + $0xc] sm:$0xf]
        %v662 = vld [vmem:[#allocation7 + $0x10] sm:$0xf]
        %v663 = vld [vmem:[#allocation7 + $0x14] sm:$0xf]
        %v664 = vld [vmem:[#allocation7 + $0x18] sm:$0xf]
        %v665 = vld [vmem:[#allocation7 + $0x1c] sm:$0xf]
        %v666 = vld [vmem:[#allocation7 + $0x20] sm:$0xf]
        %v667 = vld [vmem:[#allocation7 + $0x24] sm:$0xf]
        %v668 = vld [vmem:[#allocation7 + $0x28] sm:$0xf]
        %v669 = vld [vmem:[#allocation7 + $0x2c] sm:$0xf]
        %v670 = vld [vmem:[#allocation7 + $0x30] sm:$0xf]
        %v671 = vld [vmem:[#allocation7 + $0x34] sm:$0xf]
        %v672 = vld [vmem:[#allocation7 + $0x38] sm:$0xf]
        %v673 = vld [vmem:[#allocation7 + $0x3c] sm:$0xf]
        %v674 = vld [vmem:[%s3] sm:$0x1]
        %v676 = vlaneseq
        %v677 = vshrl.u32 %v676, 7
        %v678 = vsub.s32 0, %v677
        %v679 = vrot.slane %v674, %v678
        %v683 = vunpack.c.l.b16 %v656
        %v684 = vunpack.c.l.b16 %v657
        %v685 = vpack.c.b16 %v684, %v683
        %v703 = vunpack.c.l.b16 %v658
        %v704 = vunpack.c.l.b16 %v659
        %v705 = vunpack.c.l.b16 %v660
        %v706 = vunpack.c.l.b16 %v661
        %v707 = vunpack.c.l.b16 %v662
        %v708 = vunpack.c.l.b16 %v663
        %v709 = vunpack.c.l.b16 %v664
        %v710 = vunpack.c.l.b16 %v665
        %v711 = vunpack.c.l.b16 %v666
        %v712 = vunpack.c.l.b16 %v667
        %v713 = vunpack.c.l.b16 %v668
        %v714 = vunpack.c.l.b16 %v669
        %v715 = vunpack.c.l.b16 %v670
        %v716 = vunpack.c.l.b16 %v671
        %v717 = vunpack.c.l.b16 %v672
        %v718 = vunpack.c.l.b16 %v673
        %v719 = vpack.c.b16 %v704, %v703
        %v720 = vpack.c.b16 %v706, %v705
        %v721 = vpack.c.b16 %v708, %v707
        %v722 = vpack.c.b16 %v710, %v709
        %v723 = vpack.c.b16 %v712, %v711
        %v724 = vpack.c.b16 %v714, %v713
        %v725 = vpack.c.b16 %v716, %v715
        %v726 = vpack.c.b16 %v718, %v717
        %735 = vmatprep.subr.bf16.mxu0 0
        %736 = vmatpush1.bf16.msra.mxu0 %v719
        %737 = vmatprep.subr.bf16.mxu0 0
        %738 = vmatpush1.bf16.msra.mxu0 %v720
        %739 = vmatprep.subr.bf16.mxu0 0
        %740 = vmatpush1.bf16.msra.mxu0 %v721
        %741 = vmatprep.subr.bf16.mxu0 0
        %742 = vmatpush1.bf16.msra.mxu0 %v722
        %743 = vmatprep.subr.bf16.mxu0 0
        %744 = vmatpush1.bf16.msra.mxu0 %v723
        %745 = vmatprep.subr.bf16.mxu0 0
        %746 = vmatpush1.bf16.msra.mxu0 %v724
        %747 = vmatprep.subr.bf16.mxu0 0
        %748 = vmatpush1.bf16.msra.mxu0 %v725
        %749 = vmatprep.subr.bf16.mxu0 0
        %750 = vmatpush1.bf16.msra.mxu0 %v726
        %751 = vmatprep.subr.bf16.mxu0 0
        %752 = vmatpush1.bf16.msra.mxu0 0
        %753 = vmatprep.subr.bf16.mxu0 0
        %754 = vmatpush1.bf16.msra.mxu0 0
        %755 = vmatprep.subr.bf16.mxu0 0
        %756 = vmatpush1.bf16.msra.mxu0 0
        %757 = vmatprep.subr.bf16.mxu0 0
        %758 = vmatpush1.bf16.msra.mxu0 0
        %759 = vmatprep.subr.bf16.mxu0 0
        %760 = vmatpush1.bf16.msra.mxu0 0
        %761 = vmatprep.subr.bf16.mxu0 0
        %762 = vmatpush1.bf16.msra.mxu0 0
        %763 = vmatprep.subr.bf16.mxu0 0
        %764 = vmatpush1.bf16.msra.mxu0 0
        %765 = vmatprep.subr.bf16.mxu0 0
        %766 = vmatpush1.bf16.msra.mxu0 0
        %767 = vmatprep.mubr.bf16.mxu0 0
        %768 = vmatmul.mubr.bf16.gmra.mrb[0].mxu0 %v685
        %v769 = vpop.f32.mrb[0].mxu0
        %v770 = vadd.f32 %v679, %v769
        %v771 = vpop.f32.mrb[0].mxu0
        %v772 = vpop.f32.mrb[0].mxu0
        %v773 = vadd.f32 %v679, %v772
        %v774 = vpop.f32.mrb[0].mxu0
        %775 = vdwg.mxu0
        %v776 = vmax.f32 %v770, 0.0
        %v777 = vmax.f32 %v773, 0.0
        %v778 = vpack.c.bf16 %v777, %v776
        %v779 = vld [vmem:[#allocation8] sm:$0xf]
        %v780 = vld [vmem:[#allocation8 + $0x4] sm:$0xf]
        %v781 = vld [vmem:[#allocation8 + $0x8] sm:$0xf]
        %v782 = vld [vmem:[#allocation8 + $0xc] sm:$0xf]
        %v783 = vld [vmem:[#allocation8 + $0x10] sm:$0xf]
        %v784 = vld [vmem:[#allocation8 + $0x14] sm:$0xf]
        %v785 = vld [vmem:[#allocation8 + $0x18] sm:$0xf]
        %v786 = vld [vmem:[#allocation8 + $0x1c] sm:$0xf]
        %v787 = vld [vmem:[#allocation8 + $0x20] sm:$0xf]
        %v788 = vld [vmem:[#allocation8 + $0x24] sm:$0xf]
        %v789 = vld [vmem:[#allocation8 + $0x28] sm:$0xf]
        %v790 = vld [vmem:[#allocation8 + $0x2c] sm:$0xf]
        %v791 = vld [vmem:[#allocation8 + $0x30] sm:$0xf]
        %v792 = vld [vmem:[#allocation8 + $0x34] sm:$0xf]
        %v793 = vld [vmem:[#allocation8 + $0x38] sm:$0xf]
        %v794 = vld [vmem:[#allocation8 + $0x3c] sm:$0xf]
        %v795 = vld [vmem:[%s5] sm:$0x1]
        %v797 = vlaneseq
        %v798 = vshrl.u32 %v797, 7
        %v799 = vsub.s32 0, %v798
        %v800 = vrot.slane %v795, %v799
        %v818 = vunpack.c.l.b16 %v779
        %v819 = vunpack.c.l.b16 %v780
        %v820 = vunpack.c.l.b16 %v781
        %v821 = vunpack.c.l.b16 %v782
        %v822 = vunpack.c.l.b16 %v783
        %v823 = vunpack.c.l.b16 %v784
        %v824 = vunpack.c.l.b16 %v785
        %v825 = vunpack.c.l.b16 %v786
        %v826 = vunpack.c.l.b16 %v787
        %v827 = vunpack.c.l.b16 %v788
        %v828 = vunpack.c.l.b16 %v789
        %v829 = vunpack.c.l.b16 %v790
        %v830 = vunpack.c.l.b16 %v791
        %v831 = vunpack.c.l.b16 %v792
        %v832 = vunpack.c.l.b16 %v793
        %v833 = vunpack.c.l.b16 %v794
        %v834 = vpack.c.b16 %v819, %v818
        %v835 = vpack.c.b16 %v821, %v820
        %v836 = vpack.c.b16 %v823, %v822
        %v837 = vpack.c.b16 %v825, %v824
        %v838 = vpack.c.b16 %v827, %v826
        %v839 = vpack.c.b16 %v829, %v828
        %v840 = vpack.c.b16 %v831, %v830
        %v841 = vpack.c.b16 %v833, %v832
        %850 = vmatprep.subr.bf16.mxu0 0
        %851 = vmatpush1.bf16.msra.mxu0 %v834
        %852 = vmatprep.subr.bf16.mxu0 0
        %853 = vmatpush1.bf16.msra.mxu0 %v835
        %854 = vmatprep.subr.bf16.mxu0 0
        %855 = vmatpush1.bf16.msra.mxu0 %v836
        %856 = vmatprep.subr.bf16.mxu0 0
        %857 = vmatpush1.bf16.msra.mxu0 %v837
        %858 = vmatprep.subr.bf16.mxu0 0
        %859 = vmatpush1.bf16.msra.mxu0 %v838
        %860 = vmatprep.subr.bf16.mxu0 0
        %861 = vmatpush1.bf16.msra.mxu0 %v839
        %862 = vmatprep.subr.bf16.mxu0 0
        %863 = vmatpush1.bf16.msra.mxu0 %v840
        %864 = vmatprep.subr.bf16.mxu0 0
        %865 = vmatpush1.bf16.msra.mxu0 %v841
        %866 = vmatprep.subr.bf16.mxu0 0
        %867 = vmatpush1.bf16.msra.mxu0 0
        %868 = vmatprep.subr.bf16.mxu0 0
        %869 = vmatpush1.bf16.msra.mxu0 0
        %870 = vmatprep.subr.bf16.mxu0 0
        %871 = vmatpush1.bf16.msra.mxu0 0
        %872 = vmatprep.subr.bf16.mxu0 0
        %873 = vmatpush1.bf16.msra.mxu0 0
        %874 = vmatprep.subr.bf16.mxu0 0
        %875 = vmatpush1.bf16.msra.mxu0 0
        %876 = vmatprep.subr.bf16.mxu0 0
        %877 = vmatpush1.bf16.msra.mxu0 0
        %878 = vmatprep.subr.bf16.mxu0 0
        %879 = vmatpush1.bf16.msra.mxu0 0
        %880 = vmatprep.subr.bf16.mxu0 0
        %881 = vmatpush1.bf16.msra.mxu0 0
        %882 = vmatprep.mubr.bf16.mxu0 0
        %883 = vmatmul.mubr.bf16.gmra.mrb[0].mxu0 %v778
        %v884 = vpop.f32.mrb[0].mxu0
        %v885 = vadd.f32 %v800, %v884
        %v886 = vpop.f32.mrb[0].mxu0
        %v887 = vpop.f32.mrb[0].mxu0
        %v888 = vadd.f32 %v800, %v887
        %v889 = vpop.f32.mrb[0].mxu0
        %890 = vdwg.mxu0
        %v891 = vmax.f32 %v885, 0.0
        %v892 = vmax.f32 %v888, 0.0
        %v893 = vpack.c.bf16 %v892, %v891
        %v894 = vld [vmem:[#allocation10] sm:$0xff]
        %v895 = vld [vmem:[#allocation10 + $0x8] sm:$0xff]
        %v896 = vld [vmem:[#allocation10 + $0x10] sm:$0xff]
        %v897 = vld [vmem:[#allocation10 + $0x18] sm:$0xff]
        %v898 = vld [vmem:[#allocation10 + $0x20] sm:$0xff]
        %v899 = vld [vmem:[#allocation10 + $0x28] sm:$0xff]
        %v900 = vld [vmem:[#allocation10 + $0x30] sm:$0xff]
        %v901 = vld [vmem:[#allocation10 + $0x38] sm:$0xff]
        %v902 = vld [vmem:[#allocation10 + $0x40] sm:$0xff]
        %v903 = vld [vmem:[#allocation10 + $0x48] sm:$0xff]
        %v904 = vld [vmem:[#allocation10 + $0x50] sm:$0xff]
        %v905 = vld [vmem:[#allocation10 + $0x58] sm:$0xff]
        %v906 = vld [vmem:[#allocation10 + $0x60] sm:$0xff]
        %v907 = vld [vmem:[#allocation10 + $0x68] sm:$0xff]
        %v908 = vld [vmem:[#allocation10 + $0x70] sm:$0xff]
        %v909 = vld [vmem:[#allocation10 + $0x78] sm:$0xff]
        %v910 = vld [vmem:[%s7] sm:$0x3]
        %v912 = vlaneseq
        %v913 = vshrl.u32 %v912, 7
        %v914 = vsub.s32 0, %v913
        %v915 = vrot.slane %v910, %v914
        %v916 = vlaneseq
        %v917 = vshrl.u32 %v916, 7
        %v918 = vsub.s32 1, %v917
        %v919 = vrot.slane %v910, %v918
        %v938 = vunpack.c.l.b16 %v894
        %v939 = vunpack.c.h.b16 %v894
        %v940 = vunpack.c.l.b16 %v895
        %v941 = vunpack.c.h.b16 %v895
        %v942 = vunpack.c.l.b16 %v896
        %v943 = vunpack.c.h.b16 %v896
        %v944 = vunpack.c.l.b16 %v897
        %v945 = vunpack.c.h.b16 %v897
        %v946 = vunpack.c.l.b16 %v898
        %v947 = vunpack.c.h.b16 %v898
        %v948 = vunpack.c.l.b16 %v899
        %v949 = vunpack.c.h.b16 %v899
        %v950 = vunpack.c.l.b16 %v900
        %v951 = vunpack.c.h.b16 %v900
        %v952 = vunpack.c.l.b16 %v901
        %v953 = vunpack.c.h.b16 %v901
        %v954 = vunpack.c.l.b16 %v902
        %v955 = vunpack.c.h.b16 %v902
        %v956 = vunpack.c.l.b16 %v903
        %v957 = vunpack.c.h.b16 %v903
        %v958 = vunpack.c.l.b16 %v904
        %v959 = vunpack.c.h.b16 %v904
        %v960 = vunpack.c.l.b16 %v905
        %v961 = vunpack.c.h.b16 %v905
        %v962 = vunpack.c.l.b16 %v906
        %v963 = vunpack.c.h.b16 %v906
        %v964 = vunpack.c.l.b16 %v907
        %v965 = vunpack.c.h.b16 %v907
        %v966 = vunpack.c.l.b16 %v908
        %v967 = vunpack.c.h.b16 %v908
        %v968 = vunpack.c.l.b16 %v909
        %v969 = vunpack.c.h.b16 %v909
        %v970 = vpack.c.b16 %v940, %v938
        %v971 = vpack.c.b16 %v941, %v939
        %v972 = vpack.c.b16 %v944, %v942
        %v973 = vpack.c.b16 %v945, %v943
        %v974 = vpack.c.b16 %v948, %v946
        %v975 = vpack.c.b16 %v949, %v947
        %v976 = vpack.c.b16 %v952, %v950
        %v977 = vpack.c.b16 %v953, %v951
        %v978 = vpack.c.b16 %v956, %v954
        %v979 = vpack.c.b16 %v957, %v955
        %v980 = vpack.c.b16 %v960, %v958
        %v981 = vpack.c.b16 %v961, %v959
        %v982 = vpack.c.b16 %v964, %v962
        %v983 = vpack.c.b16 %v965, %v963
        %v984 = vpack.c.b16 %v968, %v966
        %v985 = vpack.c.b16 %v969, %v967
        %1002 = vmatprep.subr.bf16.mxu0 %v971
        %1003 = vmatpush1.bf16.msra.mxu0 %v970
        %1004 = vmatprep.subr.bf16.mxu0 %v973
        %1005 = vmatpush1.bf16.msra.mxu0 %v972
        %1006 = vmatprep.subr.bf16.mxu0 %v975
        %1007 = vmatpush1.bf16.msra.mxu0 %v974
        %1008 = vmatprep.subr.bf16.mxu0 %v977
        %1009 = vmatpush1.bf16.msra.mxu0 %v976
        %1010 = vmatprep.subr.bf16.mxu0 %v979
        %1011 = vmatpush1.bf16.msra.mxu0 %v978
        %1012 = vmatprep.subr.bf16.mxu0 %v981
        %1013 = vmatpush1.bf16.msra.mxu0 %v980
        %1014 = vmatprep.subr.bf16.mxu0 %v983
        %1015 = vmatpush1.bf16.msra.mxu0 %v982
        %1016 = vmatprep.subr.bf16.mxu0 %v985
        %1017 = vmatpush1.bf16.msra.mxu0 %v984
        %1018 = vmatprep.subr.bf16.mxu0 0
        %1019 = vmatpush1.bf16.msra.mxu0 0
        %1020 = vmatprep.subr.bf16.mxu0 0
        %1021 = vmatpush1.bf16.msra.mxu0 0
        %1022 = vmatprep.subr.bf16.mxu0 0
        %1023 = vmatpush1.bf16.msra.mxu0 0
        %1024 = vmatprep.subr.bf16.mxu0 0
        %1025 = vmatpush1.bf16.msra.mxu0 0
        %1026 = vmatprep.subr.bf16.mxu0 0
        %1027 = vmatpush1.bf16.msra.mxu0 0
        %1028 = vmatprep.subr.bf16.mxu0 0
        %1029 = vmatpush1.bf16.msra.mxu0 0
        %1030 = vmatprep.subr.bf16.mxu0 0
        %1031 = vmatpush1.bf16.msra.mxu0 0
        %1032 = vmatprep.subr.bf16.mxu0 0
        %1033 = vmatpush1.bf16.msra.mxu0 0
        %1034 = vmatprep.mubr.bf16.mxu0 0
        %1035 = vmatmul.mubr.bf16.gmra.mrb[0].mxu0 %v893
        %v1036 = vpop.f32.mrb[0].mxu0
        %v1037 = vadd.f32 %v915, %v1036
        %v1038 = vpop.f32.mrb[0].mxu0
        %v1039 = vadd.f32 %v919, %v1038
        %v1040 = vpop.f32.mrb[0].mxu0
        %v1041 = vadd.f32 %v915, %v1040
        %v1042 = vpop.f32.mrb[0].mxu0
        %v1043 = vadd.f32 %v919, %v1042
        %1044 = vdwg.mxu0
        %1045 = vst [vmem:[%s650] sm:$0xff] %v1037
        %1046 = vst [vmem:[%s650 + $0x8] sm:$0xff] %v1039
        %1047 = vst [vmem:[%s650 + $0x10] sm:$0xff] %v1041
        %1048 = vst [vmem:[%s650 + $0x18] sm:$0xff] %v1043
        %v1049 = vld [vmem:[%s570] sm:$0xff]
        %v1050 = vld [vmem:[%s570 + $0x8] sm:$0xff]
        %v1051 = vmul.f32 %v1039, 0.5
        %v1052 = vmul.f32 %v1043, 0.5
        %v1053 = vmul.f32 %v1051, 1.442695
        %v1054 = vpow.pop %v1053
        %v1055 = vmul.f32 %v1052, 1.442695
        %v1056 = vpow.pop %v1055
        %v1057 = vmul.f32 %v1049, %v1054
        %v1058 = vmul.f32 %v1050, %v1056
        %v1059 = vadd.f32 %v1037, %v1057
        %v1060 = vadd.f32 %v1041, %v1058
        %v1061 = vpack.c.bf16 %v1060, %v1059
        %v1062 = vld [vmem:[#allocation11] sm:$0xf]
        %v1063 = vld [vmem:[#allocation11 + $0x4] sm:$0xf]
        %v1064 = vld [vmem:[#allocation11 + $0x8] sm:$0xf]
        %v1065 = vld [vmem:[#allocation11 + $0xc] sm:$0xf]
        %v1066 = vld [vmem:[#allocation11 + $0x10] sm:$0xf]
        %v1067 = vld [vmem:[#allocation11 + $0x14] sm:$0xf]
        %v1068 = vld [vmem:[#allocation11 + $0x18] sm:$0xf]
        %v1069 = vld [vmem:[#allocation11 + $0x1c] sm:$0xf]
        %v1070 = vld [vmem:[#allocation11 + $0x20] sm:$0xf]
        %v1071 = vld [vmem:[#allocation11 + $0x24] sm:$0xf]
        %v1072 = vld [vmem:[#allocation11 + $0x28] sm:$0xf]
        %v1073 = vld [vmem:[#allocation11 + $0x2c] sm:$0xf]
        %v1074 = vld [vmem:[#allocation11 + $0x30] sm:$0xf]
        %v1075 = vld [vmem:[#allocation11 + $0x34] sm:$0xf]
        %v1076 = vld [vmem:[#allocation11 + $0x38] sm:$0xf]
        %v1077 = vld [vmem:[#allocation11 + $0x3c] sm:$0xf]
        %v1078 = vld [vmem:[%s9] sm:$0x1]
        %v1080 = vlaneseq
        %v1081 = vshrl.u32 %v1080, 7
        %v1082 = vsub.s32 0, %v1081
        %v1083 = vrot.slane %v1078, %v1082
        %v1101 = vunpack.c.l.b16 %v1062
        %v1102 = vunpack.c.l.b16 %v1063
        %v1103 = vunpack.c.l.b16 %v1064
        %v1104 = vunpack.c.l.b16 %v1065
        %v1105 = vunpack.c.l.b16 %v1066
        %v1106 = vunpack.c.l.b16 %v1067
        %v1107 = vunpack.c.l.b16 %v1068
        %v1108 = vunpack.c.l.b16 %v1069
        %v1109 = vunpack.c.l.b16 %v1070
        %v1110 = vunpack.c.l.b16 %v1071
        %v1111 = vunpack.c.l.b16 %v1072
        %v1112 = vunpack.c.l.b16 %v1073
        %v1113 = vunpack.c.l.b16 %v1074
        %v1114 = vunpack.c.l.b16 %v1075
        %v1115 = vunpack.c.l.b16 %v1076
        %v1116 = vunpack.c.l.b16 %v1077
        %v1117 = vpack.c.b16 %v1102, %v1101
        %v1118 = vpack.c.b16 %v1104, %v1103
        %v1119 = vpack.c.b16 %v1106, %v1105
        %v1120 = vpack.c.b16 %v1108, %v1107
        %v1121 = vpack.c.b16 %v1110, %v1109
        %v1122 = vpack.c.b16 %v1112, %v1111
        %v1123 = vpack.c.b16 %v1114, %v1113
        %v1124 = vpack.c.b16 %v1116, %v1115
        %1133 = vmatprep.subr.bf16.mxu0 0
        %1134 = vmatpush1.bf16.msra.mxu0 %v1117
        %1135 = vmatprep.subr.bf16.mxu0 0
        %1136 = vmatpush1.bf16.msra.mxu0 %v1118
        %1137 = vmatprep.subr.bf16.mxu0 0
        %1138 = vmatpush1.bf16.msra.mxu0 %v1119
        %1139 = vmatprep.subr.bf16.mxu0 0
        %1140 = vmatpush1.bf16.msra.mxu0 %v1120
        %1141 = vmatprep.subr.bf16.mxu0 0
        %1142 = vmatpush1.bf16.msra.mxu0 %v1121
        %1143 = vmatprep.subr.bf16.mxu0 0
        %1144 = vmatpush1.bf16.msra.mxu0 %v1122
        %1145 = vmatprep.subr.bf16.mxu0 0
        %1146 = vmatpush1.bf16.msra.mxu0 %v1123
        %1147 = vmatprep.subr.bf16.mxu0 0
        %1148 = vmatpush1.bf16.msra.mxu0 %v1124
        %1149 = vmatprep.subr.bf16.mxu0 0
        %1150 = vmatpush1.bf16.msra.mxu0 0
        %1151 = vmatprep.subr.bf16.mxu0 0
        %1152 = vmatpush1.bf16.msra.mxu0 0
        %1153 = vmatprep.subr.bf16.mxu0 0
        %1154 = vmatpush1.bf16.msra.mxu0 0
        %1155 = vmatprep.subr.bf16.mxu0 0
        %1156 = vmatpush1.bf16.msra.mxu0 0
        %1157 = vmatprep.subr.bf16.mxu0 0
        %1158 = vmatpush1.bf16.msra.mxu0 0
        %1159 = vmatprep.subr.bf16.mxu0 0
        %1160 = vmatpush1.bf16.msra.mxu0 0
        %1161 = vmatprep.subr.bf16.mxu0 0
        %1162 = vmatpush1.bf16.msra.mxu0 0
        %1163 = vmatprep.subr.bf16.mxu0 0
        %1164 = vmatpush1.bf16.msra.mxu0 0
        %1165 = vmatprep.mubr.bf16.mxu0 0
        %1166 = vmatmul.mubr.bf16.gmra.mrb[0].mxu0 %v1061
        %v1167 = vpop.f32.mrb[0].mxu0
        %v1168 = vadd.f32 %v1083, %v1167
        %v1169 = vpop.f32.mrb[0].mxu0
        %v1170 = vpop.f32.mrb[0].mxu0
        %v1171 = vadd.f32 %v1083, %v1170
        %v1172 = vpop.f32.mrb[0].mxu0
        %1173 = vdwg.mxu0
        %v1174 = vmax.f32 %v1168, 0.0
        %v1175 = vmax.f32 %v1171, 0.0
        %v1176 = vand.u32 2147483647, %v1168
        %v1177 = vand.u32 2147483647, %v1171
        %v1178 = vsub.f32 0.0, %v1176
        %v1179 = vsub.f32 0.0, %v1177
        %v1180 = vmul.f32 %v1178, 1.442695
        %v1181 = vpow.pop %v1180
        %v1182 = vmul.f32 %v1179, 1.442695
        %v1183 = vpow.pop %v1182
        %v1184 = vadd.f32 %v1181, 1.0
        %v1185 = vlog2.pop %v1184
        %v1186 = vmul.f32 %v1185, 0.6931472
        %v1187 = vmul.f32 -0.5, %v1181
        %v1188 = vadd.f32 %v1187, 1.0
        %v1189 = vmul.f32 %v1188, %v1181
        %v1190 = vand.u32 2147483647, %v1181
        %vm1191 = vcmp.lt.f32.partialorder %v1190, 0.0004427343
        %v1192 = vsel %vm1191, %v1189, %v1186
        %v1193 = vadd.f32 %v1183, 1.0
        %v1194 = vlog2.pop %v1193
        %v1195 = vmul.f32 %v1194, 0.6931472
        %v1196 = vmul.f32 -0.5, %v1183
        %v1197 = vadd.f32 %v1196, 1.0
        %v1198 = vmul.f32 %v1197, %v1183
        %v1199 = vand.u32 2147483647, %v1183
        %vm1200 = vcmp.lt.f32.partialorder %v1199, 0.0004427343
        %v1201 = vsel %vm1200, %v1198, %v1195
        %v1202 = vadd.f32 %v1174, %v1192
        %v1203 = vadd.f32 %v1175, %v1201
        %v1204 = vpack.c.bf16 %v1203, %v1202
        %v1205 = vld [vmem:[#allocation13] sm:$0xf]
        %v1206 = vld [vmem:[#allocation13 + $0x4] sm:$0xf]
        %v1207 = vld [vmem:[#allocation13 + $0x8] sm:$0xf]
        %v1208 = vld [vmem:[#allocation13 + $0xc] sm:$0xf]
        %v1209 = vld [vmem:[#allocation13 + $0x10] sm:$0xf]
        %v1210 = vld [vmem:[#allocation13 + $0x14] sm:$0xf]
        %v1211 = vld [vmem:[#allocation13 + $0x18] sm:$0xf]
        %v1212 = vld [vmem:[#allocation13 + $0x1c] sm:$0xf]
        %v1213 = vld [vmem:[#allocation13 + $0x20] sm:$0xf]
        %v1214 = vld [vmem:[#allocation13 + $0x24] sm:$0xf]
        %v1215 = vld [vmem:[#allocation13 + $0x28] sm:$0xf]
        %v1216 = vld [vmem:[#allocation13 + $0x2c] sm:$0xf]
        %v1217 = vld [vmem:[#allocation13 + $0x30] sm:$0xf]
        %v1218 = vld [vmem:[#allocation13 + $0x34] sm:$0xf]
        %v1219 = vld [vmem:[#allocation13 + $0x38] sm:$0xf]
        %v1220 = vld [vmem:[#allocation13 + $0x3c] sm:$0xf]
        %v1221 = vld [vmem:[%s11] sm:$0x1]
        %v1223 = vlaneseq
        %v1224 = vshrl.u32 %v1223, 7
        %v1225 = vsub.s32 0, %v1224
        %v1226 = vrot.slane %v1221, %v1225
        %v1244 = vunpack.c.l.b16 %v1205
        %v1245 = vunpack.c.l.b16 %v1206
        %v1246 = vunpack.c.l.b16 %v1207
        %v1247 = vunpack.c.l.b16 %v1208
        %v1248 = vunpack.c.l.b16 %v1209
        %v1249 = vunpack.c.l.b16 %v1210
        %v1250 = vunpack.c.l.b16 %v1211
        %v1251 = vunpack.c.l.b16 %v1212
        %v1252 = vunpack.c.l.b16 %v1213
        %v1253 = vunpack.c.l.b16 %v1214
        %v1254 = vunpack.c.l.b16 %v1215
        %v1255 = vunpack.c.l.b16 %v1216
        %v1256 = vunpack.c.l.b16 %v1217
        %v1257 = vunpack.c.l.b16 %v1218
        %v1258 = vunpack.c.l.b16 %v1219
        %v1259 = vunpack.c.l.b16 %v1220
        %v1260 = vpack.c.b16 %v1245, %v1244
        %v1261 = vpack.c.b16 %v1247, %v1246
        %v1262 = vpack.c.b16 %v1249, %v1248
        %v1263 = vpack.c.b16 %v1251, %v1250
        %v1264 = vpack.c.b16 %v1253, %v1252
        %v1265 = vpack.c.b16 %v1255, %v1254
        %v1266 = vpack.c.b16 %v1257, %v1256
        %v1267 = vpack.c.b16 %v1259, %v1258
        %1276 = vmatprep.subr.bf16.mxu0 0
        %1277 = vmatpush1.bf16.msra.mxu0 %v1260
        %1278 = vmatprep.subr.bf16.mxu0 0
        %1279 = vmatpush1.bf16.msra.mxu0 %v1261
        %1280 = vmatprep.subr.bf16.mxu0 0
        %1281 = vmatpush1.bf16.msra.mxu0 %v1262
        %1282 = vmatprep.subr.bf16.mxu0 0
        %1283 = vmatpush1.bf16.msra.mxu0 %v1263
        %1284 = vmatprep.subr.bf16.mxu0 0
        %1285 = vmatpush1.bf16.msra.mxu0 %v1264
        %1286 = vmatprep.subr.bf16.mxu0 0
        %1287 = vmatpush1.bf16.msra.mxu0 %v1265
        %1288 = vmatprep.subr.bf16.mxu0 0
        %1289 = vmatpush1.bf16.msra.mxu0 %v1266
        %1290 = vmatprep.subr.bf16.mxu0 0
        %1291 = vmatpush1.bf16.msra.mxu0 %v1267
        %1292 = vmatprep.subr.bf16.mxu0 0
        %1293 = vmatpush1.bf16.msra.mxu0 0
        %1294 = vmatprep.subr.bf16.mxu0 0
        %1295 = vmatpush1.bf16.msra.mxu0 0
        %1296 = vmatprep.subr.bf16.mxu0 0
        %1297 = vmatpush1.bf16.msra.mxu0 0
        %1298 = vmatprep.subr.bf16.mxu0 0
        %1299 = vmatpush1.bf16.msra.mxu0 0
        %1300 = vmatprep.subr.bf16.mxu0 0
        %1301 = vmatpush1.bf16.msra.mxu0 0
        %1302 = vmatprep.subr.bf16.mxu0 0
        %1303 = vmatpush1.bf16.msra.mxu0 0
        %1304 = vmatprep.subr.bf16.mxu0 0
        %1305 = vmatpush1.bf16.msra.mxu0 0
        %1306 = vmatprep.subr.bf16.mxu0 0
        %1307 = vmatpush1.bf16.msra.mxu0 0
        %1308 = vmatprep.mubr.bf16.mxu0 0
        %1309 = vmatmul.mubr.bf16.gmra.mrb[0].mxu0 %v1204
        %v1310 = vpop.f32.mrb[0].mxu0
        %v1311 = vadd.f32 %v1226, %v1310
        %v1312 = vpop.f32.mrb[0].mxu0
        %v1313 = vpop.f32.mrb[0].mxu0
        %v1314 = vadd.f32 %v1226, %v1313
        %v1315 = vpop.f32.mrb[0].mxu0
        %1316 = vdwg.mxu0
        %v1317 = vmax.f32 %v1311, 0.0
        %v1318 = vmax.f32 %v1314, 0.0
        %v1319 = vand.u32 2147483647, %v1311
        %v1320 = vand.u32 2147483647, %v1314
        %v1321 = vsub.f32 0.0, %v1319
        %v1322 = vsub.f32 0.0, %v1320
        %v1323 = vmul.f32 %v1321, 1.442695
        %v1324 = vpow.pop %v1323
        %v1325 = vmul.f32 %v1322, 1.442695
        %v1326 = vpow.pop %v1325
        %v1327 = vadd.f32 %v1324, 1.0
        %v1328 = vlog2.pop %v1327
        %v1329 = vmul.f32 %v1328, 0.6931472
        %v1330 = vmul.f32 -0.5, %v1324
        %v1331 = vadd.f32 %v1330, 1.0
        %v1332 = vmul.f32 %v1331, %v1324
        %v1333 = vand.u32 2147483647, %v1324
        %vm1334 = vcmp.lt.f32.partialorder %v1333, 0.0004427343
        %v1335 = vsel %vm1334, %v1332, %v1329
        %v1336 = vadd.f32 %v1326, 1.0
        %v1337 = vlog2.pop %v1336
        %v1338 = vmul.f32 %v1337, 0.6931472
        %v1339 = vmul.f32 -0.5, %v1326
        %v1340 = vadd.f32 %v1339, 1.0
        %v1341 = vmul.f32 %v1340, %v1326
        %v1342 = vand.u32 2147483647, %v1326
        %vm1343 = vcmp.lt.f32.partialorder %v1342, 0.0004427343
        %v1344 = vsel %vm1343, %v1341, %v1338
        %v1345 = vadd.f32 %v1317, %v1335
        %v1346 = vadd.f32 %v1318, %v1344
        %v1347 = vpack.c.bf16 %v1346, %v1345
        %v1348 = vld [vmem:[#allocation14] sm:$0xf]
        %v1349 = vld [vmem:[#allocation14 + $0x4] sm:$0xf]
        %v1350 = vld [vmem:[#allocation14 + $0x8] sm:$0xf]
        %v1351 = vld [vmem:[#allocation14 + $0xc] sm:$0xf]
        %v1352 = vld [vmem:[#allocation14 + $0x10] sm:$0xf]
        %v1353 = vld [vmem:[#allocation14 + $0x14] sm:$0xf]
        %v1354 = vld [vmem:[#allocation14 + $0x18] sm:$0xf]
        %v1355 = vld [vmem:[#allocation14 + $0x1c] sm:$0xf]
        %v1356 = vld [vmem:[#allocation14 + $0x20] sm:$0xf]
        %v1357 = vld [vmem:[#allocation14 + $0x24] sm:$0xf]
        %v1358 = vld [vmem:[#allocation14 + $0x28] sm:$0xf]
        %v1359 = vld [vmem:[#allocation14 + $0x2c] sm:$0xf]
        %v1360 = vld [vmem:[#allocation14 + $0x30] sm:$0xf]
        %v1361 = vld [vmem:[#allocation14 + $0x34] sm:$0xf]
        %v1362 = vld [vmem:[#allocation14 + $0x38] sm:$0xf]
        %v1363 = vld [vmem:[#allocation14 + $0x3c] sm:$0xf]
        %v1364 = vld [vmem:[%s13] sm:$0x1]
        %v1366 = vlaneseq
        %v1367 = vshrl.u32 %v1366, 7
        %v1368 = vsub.s32 0, %v1367
        %v1369 = vrot.slane %v1364, %v1368
        %v1387 = vunpack.c.l.b16 %v1348
        %v1388 = vunpack.c.l.b16 %v1349
        %v1389 = vunpack.c.l.b16 %v1350
        %v1390 = vunpack.c.l.b16 %v1351
        %v1391 = vunpack.c.l.b16 %v1352
        %v1392 = vunpack.c.l.b16 %v1353
        %v1393 = vunpack.c.l.b16 %v1354
        %v1394 = vunpack.c.l.b16 %v1355
        %v1395 = vunpack.c.l.b16 %v1356
        %v1396 = vunpack.c.l.b16 %v1357
        %v1397 = vunpack.c.l.b16 %v1358
        %v1398 = vunpack.c.l.b16 %v1359
        %v1399 = vunpack.c.l.b16 %v1360
        %v1400 = vunpack.c.l.b16 %v1361
        %v1401 = vunpack.c.l.b16 %v1362
        %v1402 = vunpack.c.l.b16 %v1363
        %v1403 = vpack.c.b16 %v1388, %v1387
        %v1404 = vpack.c.b16 %v1390, %v1389
        %v1405 = vpack.c.b16 %v1392, %v1391
        %v1406 = vpack.c.b16 %v1394, %v1393
        %v1407 = vpack.c.b16 %v1396, %v1395
        %v1408 = vpack.c.b16 %v1398, %v1397
        %v1409 = vpack.c.b16 %v1400, %v1399
        %v1410 = vpack.c.b16 %v1402, %v1401
        %1419 = vmatprep.subr.bf16.mxu0 0
        %1420 = vmatpush1.bf16.msra.mxu0 %v1403
        %1421 = vmatprep.subr.bf16.mxu0 0
        %1422 = vmatpush1.bf16.msra.mxu0 %v1404
        %1423 = vmatprep.subr.bf16.mxu0 0
        %1424 = vmatpush1.bf16.msra.mxu0 %v1405
        %1425 = vmatprep.subr.bf16.mxu0 0
        %1426 = vmatpush1.bf16.msra.mxu0 %v1406
        %1427 = vmatprep.subr.bf16.mxu0 0
        %1428 = vmatpush1.bf16.msra.mxu0 %v1407
        %1429 = vmatprep.subr.bf16.mxu0 0
        %1430 = vmatpush1.bf16.msra.mxu0 %v1408
        %1431 = vmatprep.subr.bf16.mxu0 0
        %1432 = vmatpush1.bf16.msra.mxu0 %v1409
        %1433 = vmatprep.subr.bf16.mxu0 0
        %1434 = vmatpush1.bf16.msra.mxu0 %v1410
        %1435 = vmatprep.subr.bf16.mxu0 0
        %1436 = vmatpush1.bf16.msra.mxu0 0
        %1437 = vmatprep.subr.bf16.mxu0 0
        %1438 = vmatpush1.bf16.msra.mxu0 0
        %1439 = vmatprep.subr.bf16.mxu0 0
        %1440 = vmatpush1.bf16.msra.mxu0 0
        %1441 = vmatprep.subr.bf16.mxu0 0
        %1442 = vmatpush1.bf16.msra.mxu0 0
        %1443 = vmatprep.subr.bf16.mxu0 0
        %1444 = vmatpush1.bf16.msra.mxu0 0
        %1445 = vmatprep.subr.bf16.mxu0 0
        %1446 = vmatpush1.bf16.msra.mxu0 0
        %1447 = vmatprep.subr.bf16.mxu0 0
        %1448 = vmatpush1.bf16.msra.mxu0 0
        %1449 = vmatprep.subr.bf16.mxu0 0
        %1450 = vmatpush1.bf16.msra.mxu0 0
        %1451 = vmatprep.mubr.bf16.mxu0 0
        %1452 = vmatmul.mubr.bf16.gmra.mrb[0].mxu0 %v1347
        %v1453 = vpop.f32.mrb[0].mxu0
        %v1454 = vadd.f32 %v1369, %v1453
        %v1455 = vpop.f32.mrb[0].mxu0
        %v1456 = vpop.f32.mrb[0].mxu0
        %v1457 = vadd.f32 %v1369, %v1456
        %v1458 = vpop.f32.mrb[0].mxu0
        %1459 = vdwg.mxu0
        %1460 = vst [vmem:[%s643] sm:$0xff] %v1454
        %1461 = vst [vmem:[%s643 + $0x8] sm:$0xff] %v1457
        %s1462 = sand.u32 %s354, 1
        %s1463 = scalar_lea.sflag [#allocation4], %s1462
        %s1464 = sand.u32 %s354, 1
        %s1465 = smul.addr %s1464, 16
        %s1466 = scalar_lea.vmem [#allocation16], %s1465
        %s1467 = sand.u32 %s380, 1
        %s1468 = scalar_lea.sflag [#allocation18], %s1467
        %s1469 = sand.u32 %s380, 1
        %s1470 = smul.addr %s1469, 32
        %s1471 = scalar_lea.vmem [#allocation17], %s1470
        // Predicated region
        $region109: #{tpu_custom_call.1} parent=75 // pred_check
          %p1472 = pneg %p364
        $region110: #{tpu_custom_call.1} parent=75 // pred_check_branch
          %1474 = sbr.rel (%p1472) target = $region112
        $region111: #{tpu_custom_call.1} parent=75 // pred_region
          %s1475 = smul.u32 2, %s42
          %s1477 = ssub.s32 256, 256
          %1478 = vsyncadd %s1463, %s1477
          %s1479 = smul.addr %s1475, 128
          %s1480 = scalar_lea.hbm %s14, %s1479
          %s1481 = sshll.u32 %s1466, 4
          %s1482 = int_to_ptr.vmem [resolvable:$true] %s1481
          %1487 = dma.vmem_to_hbm [thread:$0]  %s1482, 256, %s1480, %s1463, 128, 128, 8
        $region112: #{tpu_custom_call.1} parent=75 // pred_fallthru
          _
        // Predicated region
        $region113: #{tpu_custom_call.1} parent=75 // pred_check
          %p1488 = pneg %p390
        $region114: #{tpu_custom_call.1} parent=75 // pred_check_branch
          %1490 = sbr.rel (%p1488) target = $region116
        $region115: #{tpu_custom_call.1} parent=75 // pred_region
          %s1491 = smul.u32 2, %s42
          %s1493 = ssub.s32 512, 512
          %1494 = vsyncadd %s1468, %s1493
          %s1495 = smul.addr %s1491, 2
          %s1496 = smul.addr %s1495, 128
          %s1497 = scalar_lea.hbm %s15, %s1496
          %s1498 = sshll.u32 %s1471, 4
          %s1499 = int_to_ptr.vmem [resolvable:$true] %s1498
          %1504 = dma.vmem_to_hbm [thread:$0]  %s1499, 512, %s1497, %s1468, 256, 256, 16
        $region116: #{tpu_custom_call.1} parent=75 // pred_fallthru
          _
      $region76: #{tpu_custom_call.1} parent=5 // pred_fallthru
        _
      %p1505 = scmp.le.s32.totalorder 2, %s37
      // Predicated region
      $region117: #{tpu_custom_call.1} parent=5 // pred_check
        %p1506 = pneg %p1505
      $region118: #{tpu_custom_call.1} parent=5 // pred_check_branch
        %1508 = sbr.rel (%p1506) target = $region120
      $region119: #{tpu_custom_call.1} parent=5 // pred_region
        %s1509 = ssub.s32 %s37, 2
        // Predicated region
        $region121: #{tpu_custom_call.1} parent=119 // pred_check
          %p1510 = pneg %p370
        $region122: #{tpu_custom_call.1} parent=119 // pred_check_branch
          %1512 = sbr.rel (%p1510) target = $region124
        $region123: #{tpu_custom_call.1} parent=119 // pred_region
          %s1513 = sand.u32 %s355, 1
          %s1514 = scalar_lea.sflag [#allocation4], %s1513
          %s1515 = sand.u32 %s355, 1
          %s1516 = smul.addr %s1515, 16
          %s1517 = scalar_lea.vmem [#allocation16], %s1516
          %1518 = dma.done %s1514, 256
        $region124: #{tpu_custom_call.1} parent=119 // pred_fallthru
          _
        // Predicated region
        $region125: #{tpu_custom_call.1} parent=119 // pred_check
          %p1519 = pneg %p396
        $region126: #{tpu_custom_call.1} parent=119 // pred_check_branch
          %1521 = sbr.rel (%p1519) target = $region128
        $region127: #{tpu_custom_call.1} parent=119 // pred_region
          %s1522 = sand.u32 %s381, 1
          %s1523 = scalar_lea.sflag [#allocation18], %s1522
          %s1524 = sand.u32 %s381, 1
          %s1525 = smul.addr %s1524, 32
          %s1526 = scalar_lea.vmem [#allocation17], %s1525
          %1527 = dma.done %s1523, 512
        $region128: #{tpu_custom_call.1} parent=119 // pred_fallthru
          _
      $region120: #{tpu_custom_call.1} parent=5 // pred_fallthru
        _
    $region6: #{tpu_custom_call.1} parent=1 // loop_footer
      %s41 = sadd.s32 1, %s37
    $region7: #{tpu_custom_call.1} parent=1 // loop_footer_branch
      %36 = sbr.rel target = $region3
    $region8: #{tpu_custom_call.1} parent=1 // loop_exit
      _
    %1528 = vsyncpa [#allocation3], 1
    %s1529 = scalar_lea.sflag [#allocation3], 1
    %1530 = vsyncpa %s1529, 1
    %1531 = vsyncpa [#allocation6], 1
    %s1532 = scalar_lea.sflag [#allocation6], 1
    %1533 = vsyncpa %s1532, 1
    %1534 = vsyncpa [#allocation9], 1
    %1535 = vsyncpa [#allocation12], 1
    %1536 = vsyncpa [#allocation15], 1
    %1537 = vsyncpa [#allocation4], 1
    %s1538 = scalar_lea.sflag [#allocation4], 1
    %1539 = vsyncpa %s1538, 1
    %1540 = vsyncpa [#allocation18], 1
    %s1541 = scalar_lea.sflag [#allocation18], 1
    %1542 = vsyncpa %s1541, 1

</llo_original>
